<compile_context>
chip_gen: v5e
topology: v5e:2x2
jax: 0.10.0
libtpu: 0.0.40
codegen_flags: <defaults>
</compile_context>

<pallas_src>
import jax
import jax.numpy as jnp
import numpy as np
from jax.experimental import pallas as pl
from jax.experimental.pallas import tpu as pltpu

_BN_EPS = 1e-5


def _vmem_limit_bytes():
    cap = 64 * 1024 * 1024          # conservative fallback (v7x has 64 MiB / TC)
    try:
        info = pltpu.get_tpu_info()
        cap = int(getattr(info, "vmem_capacity_bytes", cap))
    except Exception:
        pass
    return min(int(cap * 3 // 4), 100 * 1024 * 1024)


_VMEM_LIMIT = _vmem_limit_bytes()

_TAPS = tuple((ky, kx) for ky in range(3) for kx in range(3))


# ----------------------- fused 3x3 conv + BN-stats kernel --------------------

def _conv3x3_bn_stats_kernel(xp_ref, w_ref, b_ref, y_ref, sum_ref, sq_ref):
    """One (batch, row-tile) step of a 3x3 / pad=1 / stride=1 convolution.

    xp_ref : (1, H+2, W+2, Cin)  bf16  padded image of this batch item
    w_ref  : (9, Cin, Cout)      bf16  taps in (ky, kx) row-major order
    b_ref  : (1, Cout)           f32
    y_ref  : (1, th*W, Cout)     bf16  conv output rows of this tile
    sum_ref: (1, 1, Cout)        f32   per-channel sum   (accumulated over t)
    sq_ref : (1, 1, Cout)        f32   per-channel sum of squares
    """
    t = pl.program_id(1)
    W = xp_ref.shape[2] - 2
    cout = w_ref.shape[2]
    th = y_ref.shape[1] // W

    @pl.when(t == 0)
    def _init():
        sum_ref[...] = jnp.zeros_like(sum_ref)
        sq_ref[...] = jnp.zeros_like(sq_ref)

    row0 = pl.multiple_of(t * th, th)
    xp = xp_ref[0, pl.ds(row0, th + 2), :, :]            # (th+2, W+2, Cin)

    acc = jnp.zeros((th * W, cout), jnp.float32)
    for i, (ky, kx) in enumerate(_TAPS):                 # fused im2col: 9 shifted
        win = xp[ky:ky + th, kx:kx + W, :].reshape(th * W, -1)   # windows in VMEM
        acc = acc + jnp.dot(win, w_ref[i], preferred_element_type=jnp.float32)
    acc = acc + b_ref[...]

    y_ref[0] = acc.astype(y_ref.dtype)
    # BN batch statistics from the f32 accumulator (no extra HBM pass).
    sum_ref[0] = sum_ref[0] + jnp.sum(acc, axis=0, keepdims=True)
    sq_ref[0] = sq_ref[0] + jnp.sum(acc * acc, axis=0, keepdims=True)


def _pick_row_tile(H, W):
    """Output rows per conv grid step: H split into tiles of th rows so a step
    writes a (th*W, Cout) slab.  Keep slabs big (<= ~4096 rows) but expose >= 2
    steps along this axis when possible (pipelining / megacore)."""
    max_rows = 4096
    cands = [th for th in range(1, H + 1)
             if H % th == 0 and (th * W) % 8 == 0 and th * W <= max_rows]
    if not cands:
        return H
    multi = [th for th in cands if H // th >= 2]
    return max(multi) if multi else max(cands)


# ------------------- lane-dense scale*x + shift -> ReLU kernel ----------------

def _scale_shift_relu_kernel(x_ref, s_ref, t_ref, o_ref):
    y = x_ref[...].astype(jnp.float32) * s_ref[...] + t_ref[...]
    o_ref[...] = jnp.maximum(y, 0.0).astype(o_ref.dtype)


def _scale_shift_relu(x, scale, shift, out_dtype=jnp.bfloat16):
    """x: (M, C).  Applies per-channel scale/shift then ReLU with full-lane stores."""
    M, C = x.shape
    fold = 1
    if C < 128 and 128 % C == 0 and M % (128 // C) == 0:
        fold = 128 // C                       # (M, C) -> (M/fold, 128): free flat reshape
    rows, cols = M // fold, C * fold
    xv = x.reshape(rows, cols)
    sv = jnp.tile(scale.astype(jnp.float32), fold).reshape(1, cols)
    tv = jnp.tile(shift.astype(jnp.float32), fold).reshape(1, cols)

    tm = min(1024, int(pl.next_power_of_2(max(rows, 8))))
    if tm >= 16 and rows <= tm:               # expose >= 2 grid steps when cheap
        tm //= 2
    tm = max(tm, 8)
    rows_p = ((rows + tm - 1) // tm) * tm
    if rows_p != rows:
        xv = jnp.pad(xv, ((0, rows_p - rows), (0, 0)))

    out = pl.pallas_call(
        _scale_shift_relu_kernel,
        out_shape=jax.ShapeDtypeStruct((rows_p, cols), out_dtype),
        grid=(rows_p // tm,),
        in_specs=[
            pl.BlockSpec((tm, cols), lambda i: (i, 0)),
            pl.BlockSpec((1, cols), lambda i: (0, 0)),
            pl.BlockSpec((1, cols), lambda i: (0, 0)),
        ],
        out_specs=pl.BlockSpec((tm, cols), lambda i: (i, 0)),
        compiler_params=pltpu.CompilerParams(
            dimension_semantics=("parallel",),
            vmem_limit_bytes=_VMEM_LIMIT),
    )(xv, sv, tv)
    if rows_p != rows:
        out = out[:rows]
    return out.reshape(M, C)


# ------------------------------- layer wrappers -------------------------------

def conv3x3_bn_relu(x, w, b, gamma, beta):
    """ReLU(BatchNorm(conv3x3(x) + b)) with training-mode (batch) statistics.

    x: NHWC float, w: (3, 3, Cin, Cout) HWIO, b/gamma/beta: (Cout,).
    Returns NHWC bf16.
    """
    N, H, W, Cin = x.shape
    Cout = w.shape[-1]
    th = _pick_row_tile(H, W)
    HT = H // th

    xp = jnp.pad(x.astype(jnp.bfloat16), ((0, 0), (1, 1), (1, 1), (0, 0)))
    wt = w.reshape(9, Cin, Cout).astype(jnp.bfloat16)
    bias = b.reshape(1, Cout).astype(jnp.float32)

    y, csum, csq = pl.pallas_call(
        _conv3x3_bn_stats_kernel,
        out_shape=(
            jax.ShapeDtypeStruct((N, H * W, Cout), jnp.bfloat16),
            jax.ShapeDtypeStruct((N, 1, Cout), jnp.float32),
            jax.ShapeDtypeStruct((N, 1, Cout), jnp.float32),
        ),
        grid=(N, HT),
        in_specs=[
            pl.BlockSpec((1, H + 2, W + 2, Cin), lambda n, t: (n, 0, 0, 0)),
            pl.BlockSpec((9, Cin, Cout), lambda n, t: (0, 0, 0)),
            pl.BlockSpec((1, Cout), lambda n, t: (0, 0)),
        ],
        out_specs=(
            pl.BlockSpec((1, th * W, Cout), lambda n, t: (n, t, 0)),
            pl.BlockSpec((1, 1, Cout), lambda n, t: (n, 0, 0)),
            pl.BlockSpec((1, 1, Cout), lambda n, t: (n, 0, 0)),
        ),
        compiler_params=pltpu.CompilerParams(
            dimension_semantics=("parallel", "arbitrary"),
            vmem_limit_bytes=_VMEM_LIMIT),
    )(xp, wt, bias)

    # Finalize BatchNorm batch statistics (training mode, biased variance).
    m = float(N * H * W)
    mean = jnp.sum(csum, axis=(0, 1)) / m
    var = jnp.maximum(jnp.sum(csq, axis=(0, 1)) / m - mean * mean, 0.0)
    scale = gamma.astype(jnp.float32) / jnp.sqrt(var + _BN_EPS)
    shift = beta.astype(jnp.float32) - mean * scale

    out = _scale_shift_relu(y.reshape(N * H * W, Cout), scale, shift)
    return out.reshape(N, H, W, Cout)


def double_conv_fwd(x, p):
    x = conv3x3_bn_relu(x, p['w1'], p['b1'], p['g1'], p['bt1'])
    x = conv3x3_bn_relu(x, p['w2'], p['b2'], p['g2'], p['bt2'])
    return x


def inconv_forward(params, x_nchw):
    x = jnp.transpose(x_nchw, (0, 2, 3, 1))                 # NCHW -> NHWC
    y = double_conv_fwd(x, params)
    return jnp.transpose(y, (0, 3, 1, 2)).astype(jnp.float32)   # back to NCHW


# ------------------------------ parameters ------------------------------------

def make_inconv_params(in_ch, out_ch, key):
    def randn(k, shape, scale):
        return scale * jax.random.normal(k, shape, dtype=jnp.float32)

    k = jax.random.split(key, 4)
    s1 = 1.0 / float(np.sqrt(9 * in_ch))
    s2 = 1.0 / float(np.sqrt(9 * out_ch))
    return {
        'w1': randn(k[0], (3, 3, in_ch, out_ch), s1),
        'b1': randn(k[1], (out_ch,), 0.01),
        'g1': jnp.ones((out_ch,), jnp.float32),
        'bt1': jnp.zeros((out_ch,), jnp.float32),
        'w2': randn(k[2], (3, 3, out_ch, out_ch), s2),
        'b2': randn(k[3], (out_ch,), 0.01),
        'g2': jnp.ones((out_ch,), jnp.float32),
        'bt2': jnp.zeros((out_ch,), jnp.float32),
    }
    # TODO(synk): BatchNorm running_mean/var buffer updates are not modeled; the
    # forward output (training-mode batch-stat normalization) does not need them.


# ---------------------------------- main ---------------------------------------

if __name__ == "__main__":
    in_ch, out_ch = 4, 64
    key = jax.random.PRNGKey(0)
    pkey, xkey = jax.random.split(key)
    params = make_inconv_params(in_ch, out_ch, pkey)
    x = jax.random.normal(xkey, (2, in_ch, 16, 16), dtype=jnp.float32)

    fwd = jax.jit(inconv_forward)
    out = jax.block_until_ready(fwd(params, x))

    assert out.shape == (2, out_ch, 16, 16), out.shape
    assert bool(jnp.all(jnp.isfinite(out)))
    print("KERNEL_OK")
</pallas_src>

<mosaic_0001>
module attributes {stable_mosaic.version = 11 : i64} {
  func.func @_conv3x3_bn_stats_kernel(%arg0: i32, %arg1: i32, %arg2: memref<1x18x18x4xbf16, #tpu.memory_space<vmem>>, %arg3: memref<9x4x64xbf16, #tpu.memory_space<vmem>>, %arg4: memref<1x64xf32, #tpu.memory_space<vmem>>, %arg5: memref<1x128x64xbf16, #tpu.memory_space<vmem>>, %arg6: memref<1x1x64xf32, #tpu.memory_space<vmem>>, %arg7: memref<1x1x64xf32, #tpu.memory_space<vmem>>) attributes {dimension_semantics = [#tpu.dimension_semantics<parallel>, #tpu.dimension_semantics<arbitrary>], iteration_bounds = array<i64: 2, 2>, scalar_prefetch = 0 : i64, scratch_operands = 0 : i64, tpu.core_type = #tpu.core_type<tc>, window_params = [{transform_indices = @transform_0, window_bounds = array<i64: 1, 18, 18, 4>}, {pipeline_mode = #tpu.pipeline_mode<synchronous>, transform_indices = @transform_1, window_bounds = array<i64: 9, 4, 64>}, {pipeline_mode = #tpu.pipeline_mode<synchronous>, transform_indices = @transform_2, window_bounds = array<i64: 1, 64>}, {transform_indices = @transform_3, window_bounds = array<i64: 1, 128, 64>}, {transform_indices = @transform_4, window_bounds = array<i64: 1, 1, 64>}, {transform_indices = @transform_5, window_bounds = array<i64: 1, 1, 64>}]} {
    %c0_i32 = arith.constant 0 : i32
    %0 = arith.cmpi eq, %arg1, %c0_i32 : i32
    %1 = arith.extui %0 : i1 to i32
    %c0_i32_0 = arith.constant 0 : i32
    %2 = arith.cmpi ne, %1, %c0_i32_0 : i32
    scf.if %2 {
      %cst_50 = arith.constant 0.000000e+00 : f32
      %87 = vector.broadcast %cst_50 : f32 to vector<1x1x64xf32>
      %c0_51 = arith.constant 0 : index
      %c0_52 = arith.constant 0 : index
      %c0_53 = arith.constant 0 : index
      %88 = vector.load %arg6[%c0_51, %c0_52, %c0_53] : memref<1x1x64xf32, #tpu.memory_space<vmem>>, vector<1x1x64xf32>
      tpu.vector_store %arg6[%c0_51, %c0_52, %c0_53], %87 {strides = array<i32>} : memref<1x1x64xf32, #tpu.memory_space<vmem>>, vector<1x1x64xf32>,
      %cst_54 = arith.constant 0.000000e+00 : f32
      %89 = vector.broadcast %cst_54 : f32 to vector<1x1x64xf32>
      %c0_55 = arith.constant 0 : index
      %c0_56 = arith.constant 0 : index
      %c0_57 = arith.constant 0 : index
      %90 = vector.load %arg7[%c0_55, %c0_56, %c0_57] : memref<1x1x64xf32, #tpu.memory_space<vmem>>, vector<1x1x64xf32>
      tpu.vector_store %arg7[%c0_55, %c0_56, %c0_57], %89 {strides = array<i32>} : memref<1x1x64xf32, #tpu.memory_space<vmem>>, vector<1x1x64xf32>,
    } else {
    }
    %c8_i32 = arith.constant 8 : i32
    %3 = arith.muli %arg1, %c8_i32 : i32
    %4 = tpu.assume_multiple %3, 8 : i32
    %c0 = arith.constant 0 : index
    %5 = arith.index_cast %4 : i32 to index
    %c0_1 = arith.constant 0 : index
    %c0_2 = arith.constant 0 : index
    %6 = vector.load %arg2[%c0, %5, %c0_1, %c0_2] : memref<1x18x18x4xbf16, #tpu.memory_space<vmem>>, vector<1x10x18x4xbf16>
    %7 = vector.shape_cast %6 : vector<1x10x18x4xbf16> to vector<10x18x4xbf16>
    %cst = arith.constant 0.000000e+00 : f32
    %8 = vector.broadcast %cst : f32 to vector<128x64xf32>
    %9 = vector.extract_strided_slice %7 {offsets = [0, 0, 0], sizes = [8, 16, 4], strides = [1, 1, 1]} : vector<10x18x4xbf16> to vector<8x16x4xbf16>
    %10 = vector.shape_cast %9 : vector<8x16x4xbf16> to vector<128x4xbf16>
    %c0_3 = arith.constant 0 : index
    %c0_4 = arith.constant 0 : index
    %c0_5 = arith.constant 0 : index
    %11 = vector.load %arg3[%c0_3, %c0_4, %c0_5] : memref<9x4x64xbf16, #tpu.memory_space<vmem>>, vector<1x4x64xbf16>
    %12 = vector.shape_cast %11 : vector<1x4x64xbf16> to vector<4x64xbf16>
    %cst_6 = arith.constant dense<0.000000e+00> : vector<128x64xf32>
    %13 = tpu.matmul %10, %12, %cst_6 {dimension_numbers = #tpu.dot_dimension_numbers<[1], [0], [0], [1], [0, 0, 1, 1], [], []>} : vector<128x4xbf16>, vector<4x64xbf16>, vector<128x64xf32> -> vector<128x64xf32>
    %14 = arith.addf %8, %13 : vector<128x64xf32>
    %15 = vector.extract_strided_slice %7 {offsets = [0, 1, 0], sizes = [8, 16, 4], strides = [1, 1, 1]} : vector<10x18x4xbf16> to vector<8x16x4xbf16>
    %16 = vector.shape_cast %15 : vector<8x16x4xbf16> to vector<128x4xbf16>
    %c1 = arith.constant 1 : index
    %c0_7 = arith.constant 0 : index
    %c0_8 = arith.constant 0 : index
    %17 = vector.load %arg3[%c1, %c0_7, %c0_8] : memref<9x4x64xbf16, #tpu.memory_space<vmem>>, vector<1x4x64xbf16>
    %18 = vector.shape_cast %17 : vector<1x4x64xbf16> to vector<4x64xbf16>
    %cst_9 = arith.constant dense<0.000000e+00> : vector<128x64xf32>
    %19 = tpu.matmul %16, %18, %cst_9 {dimension_numbers = #tpu.dot_dimension_numbers<[1], [0], [0], [1], [0, 0, 1, 1], [], []>} : vector<128x4xbf16>, vector<4x64xbf16>, vector<128x64xf32> -> vector<128x64xf32>
    %20 = arith.addf %14, %19 : vector<128x64xf32>
    %21 = vector.extract_strided_slice %7 {offsets = [0, 2, 0], sizes = [8, 16, 4], strides = [1, 1, 1]} : vector<10x18x4xbf16> to vector<8x16x4xbf16>
    %22 = vector.shape_cast %21 : vector<8x16x4xbf16> to vector<128x4xbf16>
    %c2 = arith.constant 2 : index
    %c0_10 = arith.constant 0 : index
    %c0_11 = arith.constant 0 : index
    %23 = vector.load %arg3[%c2, %c0_10, %c0_11] : memref<9x4x64xbf16, #tpu.memory_space<vmem>>, vector<1x4x64xbf16>
    %24 = vector.shape_cast %23 : vector<1x4x64xbf16> to vector<4x64xbf16>
    %cst_12 = arith.constant dense<0.000000e+00> : vector<128x64xf32>
    %25 = tpu.matmul %22, %24, %cst_12 {dimension_numbers = #tpu.dot_dimension_numbers<[1], [0], [0], [1], [0, 0, 1, 1], [], []>} : vector<128x4xbf16>, vector<4x64xbf16>, vector<128x64xf32> -> vector<128x64xf32>
    %26 = arith.addf %20, %25 : vector<128x64xf32>
    %27 = vector.extract_strided_slice %7 {offsets = [1, 0, 0], sizes = [8, 16, 4], strides = [1, 1, 1]} : vector<10x18x4xbf16> to vector<8x16x4xbf16>
    %28 = vector.shape_cast %27 : vector<8x16x4xbf16> to vector<128x4xbf16>
    %c3 = arith.constant 3 : index
    %c0_13 = arith.constant 0 : index
    %c0_14 = arith.constant 0 : index
    %29 = vector.load %arg3[%c3, %c0_13, %c0_14] : memref<9x4x64xbf16, #tpu.memory_space<vmem>>, vector<1x4x64xbf16>
    %30 = vector.shape_cast %29 : vector<1x4x64xbf16> to vector<4x64xbf16>
    %cst_15 = arith.constant dense<0.000000e+00> : vector<128x64xf32>
    %31 = tpu.matmul %28, %30, %cst_15 {dimension_numbers = #tpu.dot_dimension_numbers<[1], [0], [0], [1], [0, 0, 1, 1], [], []>} : vector<128x4xbf16>, vector<4x64xbf16>, vector<128x64xf32> -> vector<128x64xf32>
    %32 = arith.addf %26, %31 : vector<128x64xf32>
    %33 = vector.extract_strided_slice %7 {offsets = [1, 1, 0], sizes = [8, 16, 4], strides = [1, 1, 1]} : vector<10x18x4xbf16> to vector<8x16x4xbf16>
    %34 = vector.shape_cast %33 : vector<8x16x4xbf16> to vector<128x4xbf16>
    %c4 = arith.constant 4 : index
    %c0_16 = arith.constant 0 : index
    %c0_17 = arith.constant 0 : index
    %35 = vector.load %arg3[%c4, %c0_16, %c0_17] : memref<9x4x64xbf16, #tpu.memory_space<vmem>>, vector<1x4x64xbf16>
    %36 = vector.shape_cast %35 : vector<1x4x64xbf16> to vector<4x64xbf16>
    %cst_18 = arith.constant dense<0.000000e+00> : vector<128x64xf32>
    %37 = tpu.matmul %34, %36, %cst_18 {dimension_numbers = #tpu.dot_dimension_numbers<[1], [0], [0], [1], [0, 0, 1, 1], [], []>} : vector<128x4xbf16>, vector<4x64xbf16>, vector<128x64xf32> -> vector<128x64xf32>
    %38 = arith.addf %32, %37 : vector<128x64xf32>
    %39 = vector.extract_strided_slice %7 {offsets = [1, 2, 0], sizes = [8, 16, 4], strides = [1, 1, 1]} : vector<10x18x4xbf16> to vector<8x16x4xbf16>
    %40 = vector.shape_cast %39 : vector<8x16x4xbf16> to vector<128x4xbf16>
    %c5 = arith.constant 5 : index
    %c0_19 = arith.constant 0 : index
    %c0_20 = arith.constant 0 : index
    %41 = vector.load %arg3[%c5, %c0_19, %c0_20] : memref<9x4x64xbf16, #tpu.memory_space<vmem>>, vector<1x4x64xbf16>
    %42 = vector.shape_cast %41 : vector<1x4x64xbf16> to vector<4x64xbf16>
    %cst_21 = arith.constant dense<0.000000e+00> : vector<128x64xf32>
    %43 = tpu.matmul %40, %42, %cst_21 {dimension_numbers = #tpu.dot_dimension_numbers<[1], [0], [0], [1], [0, 0, 1, 1], [], []>} : vector<128x4xbf16>, vector<4x64xbf16>, vector<128x64xf32> -> vector<128x64xf32>
    %44 = arith.addf %38, %43 : vector<128x64xf32>
    %45 = vector.extract_strided_slice %7 {offsets = [2, 0, 0], sizes = [8, 16, 4], strides = [1, 1, 1]} : vector<10x18x4xbf16> to vector<8x16x4xbf16>
    %46 = vector.shape_cast %45 : vector<8x16x4xbf16> to vector<128x4xbf16>
    %c6 = arith.constant 6 : index
    %c0_22 = arith.constant 0 : index
    %c0_23 = arith.constant 0 : index
    %47 = vector.load %arg3[%c6, %c0_22, %c0_23] : memref<9x4x64xbf16, #tpu.memory_space<vmem>>, vector<1x4x64xbf16>
    %48 = vector.shape_cast %47 : vector<1x4x64xbf16> to vector<4x64xbf16>
    %cst_24 = arith.constant dense<0.000000e+00> : vector<128x64xf32>
    %49 = tpu.matmul %46, %48, %cst_24 {dimension_numbers = #tpu.dot_dimension_numbers<[1], [0], [0], [1], [0, 0, 1, 1], [], []>} : vector<128x4xbf16>, vector<4x64xbf16>, vector<128x64xf32> -> vector<128x64xf32>
    %50 = arith.addf %44, %49 : vector<128x64xf32>
    %51 = vector.extract_strided_slice %7 {offsets = [2, 1, 0], sizes = [8, 16, 4], strides = [1, 1, 1]} : vector<10x18x4xbf16> to vector<8x16x4xbf16>
    %52 = vector.shape_cast %51 : vector<8x16x4xbf16> to vector<128x4xbf16>
    %c7 = arith.constant 7 : index
    %c0_25 = arith.constant 0 : index
    %c0_26 = arith.constant 0 : index
    %53 = vector.load %arg3[%c7, %c0_25, %c0_26] : memref<9x4x64xbf16, #tpu.memory_space<vmem>>, vector<1x4x64xbf16>
    %54 = vector.shape_cast %53 : vector<1x4x64xbf16> to vector<4x64xbf16>
    %cst_27 = arith.constant dense<0.000000e+00> : vector<128x64xf32>
    %55 = tpu.matmul %52, %54, %cst_27 {dimension_numbers = #tpu.dot_dimension_numbers<[1], [0], [0], [1], [0, 0, 1, 1], [], []>} : vector<128x4xbf16>, vector<4x64xbf16>, vector<128x64xf32> -> vector<128x64xf32>
    %56 = arith.addf %50, %55 : vector<128x64xf32>
    %57 = vector.extract_strided_slice %7 {offsets = [2, 2, 0], sizes = [8, 16, 4], strides = [1, 1, 1]} : vector<10x18x4xbf16> to vector<8x16x4xbf16>
    %58 = vector.shape_cast %57 : vector<8x16x4xbf16> to vector<128x4xbf16>
    %c8 = arith.constant 8 : index
    %c0_28 = arith.constant 0 : index
    %c0_29 = arith.constant 0 : index
    %59 = vector.load %arg3[%c8, %c0_28, %c0_29] : memref<9x4x64xbf16, #tpu.memory_space<vmem>>, vector<1x4x64xbf16>
    %60 = vector.shape_cast %59 : vector<1x4x64xbf16> to vector<4x64xbf16>
    %cst_30 = arith.constant dense<0.000000e+00> : vector<128x64xf32>
    %61 = tpu.matmul %58, %60, %cst_30 {dimension_numbers = #tpu.dot_dimension_numbers<[1], [0], [0], [1], [0, 0, 1, 1], [], []>} : vector<128x4xbf16>, vector<4x64xbf16>, vector<128x64xf32> -> vector<128x64xf32>
    %62 = arith.addf %56, %61 : vector<128x64xf32>
    %c0_31 = arith.constant 0 : index
    %c0_32 = arith.constant 0 : index
    %63 = vector.load %arg4[%c0_31, %c0_32] : memref<1x64xf32, #tpu.memory_space<vmem>>, vector<1x64xf32>
    %64 = vector.broadcast %63 : vector<1x64xf32> to vector<128x64xf32>
    %65 = arith.addf %62, %64 : vector<128x64xf32>
    %66 = arith.truncf %65 : vector<128x64xf32> to vector<128x64xbf16>
    %c0_33 = arith.constant 0 : index
    %c0_34 = arith.constant 0 : index
    %c0_35 = arith.constant 0 : index
    %67 = vector.load %arg5[%c0_33, %c0_34, %c0_35] : memref<1x128x64xbf16, #tpu.memory_space<vmem>>, vector<1x128x64xbf16>
    %68 = vector.shape_cast %67 : vector<1x128x64xbf16> to vector<128x64xbf16>
    %69 = vector.shape_cast %66 : vector<128x64xbf16> to vector<1x128x64xbf16>
    tpu.vector_store %arg5[%c0_33, %c0_34, %c0_35], %69 {strides = array<i32>} : memref<1x128x64xbf16, #tpu.memory_space<vmem>>, vector<1x128x64xbf16>,
    %c0_36 = arith.constant 0 : index
    %c0_37 = arith.constant 0 : index
    %c0_38 = arith.constant 0 : index
    %70 = vector.load %arg6[%c0_36, %c0_37, %c0_38] : memref<1x1x64xf32, #tpu.memory_space<vmem>>, vector<1x1x64xf32>
    %71 = vector.shape_cast %70 : vector<1x1x64xf32> to vector<1x64xf32>
    %cst_39 = arith.constant dense<0.000000e+00> : vector<64xf32>
    %72 = vector.multi_reduction <add>, %65, %cst_39 [0] : vector<128x64xf32> to vector<64xf32>
    %73 = vector.shape_cast %72 : vector<64xf32> to vector<1x64xf32>
    %74 = arith.addf %71, %73 : vector<1x64xf32>
    %c0_40 = arith.constant 0 : index
    %c0_41 = arith.constant 0 : index
    %c0_42 = arith.constant 0 : index
    %75 = vector.load %arg6[%c0_40, %c0_41, %c0_42] : memref<1x1x64xf32, #tpu.memory_space<vmem>>, vector<1x1x64xf32>
    %76 = vector.shape_cast %75 : vector<1x1x64xf32> to vector<1x64xf32>
    %77 = vector.shape_cast %74 : vector<1x64xf32> to vector<1x1x64xf32>
    tpu.vector_store %arg6[%c0_40, %c0_41, %c0_42], %77 {strides = array<i32>} : memref<1x1x64xf32, #tpu.memory_space<vmem>>, vector<1x1x64xf32>,
    %c0_43 = arith.constant 0 : index
    %c0_44 = arith.constant 0 : index
    %c0_45 = arith.constant 0 : index
    %78 = vector.load %arg7[%c0_43, %c0_44, %c0_45] : memref<1x1x64xf32, #tpu.memory_space<vmem>>, vector<1x1x64xf32>
    %79 = vector.shape_cast %78 : vector<1x1x64xf32> to vector<1x64xf32>
    %80 = arith.mulf %65, %65 : vector<128x64xf32>
    %cst_46 = arith.constant dense<0.000000e+00> : vector<64xf32>
    %81 = vector.multi_reduction <add>, %80, %cst_46 [0] : vector<128x64xf32> to vector<64xf32>
    %82 = vector.shape_cast %81 : vector<64xf32> to vector<1x64xf32>
    %83 = arith.addf %79, %82 : vector<1x64xf32>
    %c0_47 = arith.constant 0 : index
    %c0_48 = arith.constant 0 : index
    %c0_49 = arith.constant 0 : index
    %84 = vector.load %arg7[%c0_47, %c0_48, %c0_49] : memref<1x1x64xf32, #tpu.memory_space<vmem>>, vector<1x1x64xf32>
    %85 = vector.shape_cast %84 : vector<1x1x64xf32> to vector<1x64xf32>
    %86 = vector.shape_cast %83 : vector<1x64xf32> to vector<1x1x64xf32>
    tpu.vector_store %arg7[%c0_47, %c0_48, %c0_49], %86 {strides = array<i32>} : memref<1x1x64xf32, #tpu.memory_space<vmem>>, vector<1x1x64xf32>,
    return
  }
  func.func @transform_0(%arg0: i32, %arg1: i32) -> (i32, i32, i32, i32) {
    %c0_i32 = arith.constant 0 : i32
    %c0_i32_0 = arith.constant 0 : i32
    %c0_i32_1 = arith.constant 0 : i32
    %c0_i32_2 = arith.constant 0 : i32
    return %arg0, %c0_i32, %c0_i32_0, %c0_i32_1 : i32, i32, i32, i32
  }
  func.func @transform_1(%arg0: i32, %arg1: i32) -> (i32, i32, i32) {
    %c0_i32 = arith.constant 0 : i32
    %c0_i32_0 = arith.constant 0 : i32
    %c0_i32_1 = arith.constant 0 : i32
    %c0_i32_2 = arith.constant 0 : i32
    return %c0_i32, %c0_i32_0, %c0_i32_1 : i32, i32, i32
  }
  func.func @transform_2(%arg0: i32, %arg1: i32) -> (i32, i32) {
    %c0_i32 = arith.constant 0 : i32
    %c0_i32_0 = arith.constant 0 : i32
    %c0_i32_1 = arith.constant 0 : i32
    return %c0_i32, %c0_i32_0 : i32, i32
  }
  func.func @transform_3(%arg0: i32, %arg1: i32) -> (i32, i32, i32) {
    %c0_i32 = arith.constant 0 : i32
    %c0_i32_0 = arith.constant 0 : i32
    return %arg0, %arg1, %c0_i32 : i32, i32, i32
  }
  func.func @transform_4(%arg0: i32, %arg1: i32) -> (i32, i32, i32) {
    %c0_i32 = arith.constant 0 : i32
    %c0_i32_0 = arith.constant 0 : i32
    %c0_i32_1 = arith.constant 0 : i32
    return %arg0, %c0_i32, %c0_i32_0 : i32, i32, i32
  }
  func.func @transform_5(%arg0: i32, %arg1: i32) -> (i32, i32, i32) {
    %c0_i32 = arith.constant 0 : i32
    %c0_i32_0 = arith.constant 0 : i32
    %c0_i32_1 = arith.constant 0 : i32
    return %arg0, %c0_i32, %c0_i32_0 : i32, i32, i32
  }
}

module attributes {stable_mosaic.version = 11 : i64} {
  func.func @_scale_shift_relu_kernel(%arg0: i32, %arg1: memref<128x128xbf16, #tpu.memory_space<vmem>>, %arg2: memref<1x128xf32, #tpu.memory_space<vmem>>, %arg3: memref<1x128xf32, #tpu.memory_space<vmem>>, %arg4: memref<128x128xbf16, #tpu.memory_space<vmem>>) attributes {dimension_semantics = [#tpu.dimension_semantics<parallel>], iteration_bounds = array<i64: 2>, scalar_prefetch = 0 : i64, scratch_operands = 0 : i64, tpu.core_type = #tpu.core_type<tc>, window_params = [{transform_indices = @transform_0, window_bounds = array<i64: 128, 128>}, {pipeline_mode = #tpu.pipeline_mode<synchronous>, transform_indices = @transform_1, window_bounds = array<i64: 1, 128>}, {pipeline_mode = #tpu.pipeline_mode<synchronous>, transform_indices = @transform_2, window_bounds = array<i64: 1, 128>}, {transform_indices = @transform_3, window_bounds = array<i64: 128, 128>}]} {
    %c0 = arith.constant 0 : index
    %c0_0 = arith.constant 0 : index
    %0 = vector.load %arg1[%c0, %c0_0] : memref<128x128xbf16, #tpu.memory_space<vmem>>, vector<128x128xbf16>
    %1 = arith.extf %0 : vector<128x128xbf16> to vector<128x128xf32>
    %c0_1 = arith.constant 0 : index
    %c0_2 = arith.constant 0 : index
    %2 = vector.load %arg2[%c0_1, %c0_2] : memref<1x128xf32, #tpu.memory_space<vmem>>, vector<1x128xf32>
    %3 = vector.broadcast %2 : vector<1x128xf32> to vector<128x128xf32>
    %4 = arith.mulf %1, %3 : vector<128x128xf32>
    %c0_3 = arith.constant 0 : index
    %c0_4 = arith.constant 0 : index
    %5 = vector.load %arg3[%c0_3, %c0_4] : memref<1x128xf32, #tpu.memory_space<vmem>>, vector<1x128xf32>
    %6 = vector.broadcast %5 : vector<1x128xf32> to vector<128x128xf32>
    %7 = arith.addf %4, %6 : vector<128x128xf32>
    %cst = arith.constant 0.000000e+00 : f32
    %8 = vector.broadcast %cst : f32 to vector<128x128xf32>
    %9 = arith.maximumf %7, %8 : vector<128x128xf32>
    %10 = arith.truncf %9 : vector<128x128xf32> to vector<128x128xbf16>
    %c0_5 = arith.constant 0 : index
    %c0_6 = arith.constant 0 : index
    %11 = vector.load %arg4[%c0_5, %c0_6] : memref<128x128xbf16, #tpu.memory_space<vmem>>, vector<128x128xbf16>
    tpu.vector_store %arg4[%c0_5, %c0_6], %10 {strides = array<i32>} : memref<128x128xbf16, #tpu.memory_space<vmem>>, vector<128x128xbf16>,
    return
  }
  func.func @transform_0(%arg0: i32) -> (i32, i32) {
    %c0_i32 = arith.constant 0 : i32
    %c0_i32_0 = arith.constant 0 : i32
    return %arg0, %c0_i32 : i32, i32
  }
  func.func @transform_1(%arg0: i32) -> (i32, i32) {
    %c0_i32 = arith.constant 0 : i32
    %c0_i32_0 = arith.constant 0 : i32
    %c0_i32_1 = arith.constant 0 : i32
    return %c0_i32, %c0_i32_0 : i32, i32
  }
  func.func @transform_2(%arg0: i32) -> (i32, i32) {
    %c0_i32 = arith.constant 0 : i32
    %c0_i32_0 = arith.constant 0 : i32
    %c0_i32_1 = arith.constant 0 : i32
    return %c0_i32, %c0_i32_0 : i32, i32
  }
  func.func @transform_3(%arg0: i32) -> (i32, i32) {
    %c0_i32 = arith.constant 0 : i32
    %c0_i32_0 = arith.constant 0 : i32
    return %arg0, %c0_i32 : i32, i32
  }
}

module attributes {stable_mosaic.version = 11 : i64} {
  func.func @_conv3x3_bn_stats_kernel(%arg0: i32, %arg1: i32, %arg2: memref<1x18x18x64xbf16, #tpu.memory_space<vmem>>, %arg3: memref<9x64x64xbf16, #tpu.memory_space<vmem>>, %arg4: memref<1x64xf32, #tpu.memory_space<vmem>>, %arg5: memref<1x128x64xbf16, #tpu.memory_space<vmem>>, %arg6: memref<1x1x64xf32, #tpu.memory_space<vmem>>, %arg7: memref<1x1x64xf32, #tpu.memory_space<vmem>>) attributes {dimension_semantics = [#tpu.dimension_semantics<parallel>, #tpu.dimension_semantics<arbitrary>], iteration_bounds = array<i64: 2, 2>, scalar_prefetch = 0 : i64, scratch_operands = 0 : i64, tpu.core_type = #tpu.core_type<tc>, window_params = [{transform_indices = @transform_0, window_bounds = array<i64: 1, 18, 18, 64>}, {pipeline_mode = #tpu.pipeline_mode<synchronous>, transform_indices = @transform_1, window_bounds = array<i64: 9, 64, 64>}, {pipeline_mode = #tpu.pipeline_mode<synchronous>, transform_indices = @transform_2, window_bounds = array<i64: 1, 64>}, {transform_indices = @transform_3, window_bounds = array<i64: 1, 128, 64>}, {transform_indices = @transform_4, window_bounds = array<i64: 1, 1, 64>}, {transform_indices = @transform_5, window_bounds = array<i64: 1, 1, 64>}]} {
    %c0_i32 = arith.constant 0 : i32
    %0 = arith.cmpi eq, %arg1, %c0_i32 : i32
    %1 = arith.extui %0 : i1 to i32
    %c0_i32_0 = arith.constant 0 : i32
    %2 = arith.cmpi ne, %1, %c0_i32_0 : i32
    scf.if %2 {
      %cst_50 = arith.constant 0.000000e+00 : f32
      %87 = vector.broadcast %cst_50 : f32 to vector<1x1x64xf32>
      %c0_51 = arith.constant 0 : index
      %c0_52 = arith.constant 0 : index
      %c0_53 = arith.constant 0 : index
      %88 = vector.load %arg6[%c0_51, %c0_52, %c0_53] : memref<1x1x64xf32, #tpu.memory_space<vmem>>, vector<1x1x64xf32>
      tpu.vector_store %arg6[%c0_51, %c0_52, %c0_53], %87 {strides = array<i32>} : memref<1x1x64xf32, #tpu.memory_space<vmem>>, vector<1x1x64xf32>,
      %cst_54 = arith.constant 0.000000e+00 : f32
      %89 = vector.broadcast %cst_54 : f32 to vector<1x1x64xf32>
      %c0_55 = arith.constant 0 : index
      %c0_56 = arith.constant 0 : index
      %c0_57 = arith.constant 0 : index
      %90 = vector.load %arg7[%c0_55, %c0_56, %c0_57] : memref<1x1x64xf32, #tpu.memory_space<vmem>>, vector<1x1x64xf32>
      tpu.vector_store %arg7[%c0_55, %c0_56, %c0_57], %89 {strides = array<i32>} : memref<1x1x64xf32, #tpu.memory_space<vmem>>, vector<1x1x64xf32>,
    } else {
    }
    %c8_i32 = arith.constant 8 : i32
    %3 = arith.muli %arg1, %c8_i32 : i32
    %4 = tpu.assume_multiple %3, 8 : i32
    %c0 = arith.constant 0 : index
    %5 = arith.index_cast %4 : i32 to index
    %c0_1 = arith.constant 0 : index
    %c0_2 = arith.constant 0 : index
    %6 = vector.load %arg2[%c0, %5, %c0_1, %c0_2] : memref<1x18x18x64xbf16, #tpu.memory_space<vmem>>, vector<1x10x18x64xbf16>
    %7 = vector.shape_cast %6 : vector<1x10x18x64xbf16> to vector<10x18x64xbf16>
    %cst = arith.constant 0.000000e+00 : f32
    %8 = vector.broadcast %cst : f32 to vector<128x64xf32>
    %9 = vector.extract_strided_slice %7 {offsets = [0, 0, 0], sizes = [8, 16, 64], strides = [1, 1, 1]} : vector<10x18x64xbf16> to vector<8x16x64xbf16>
    %10 = vector.shape_cast %9 : vector<8x16x64xbf16> to vector<128x64xbf16>
    %c0_3 = arith.constant 0 : index
    %c0_4 = arith.constant 0 : index
    %c0_5 = arith.constant 0 : index
    %11 = vector.load %arg3[%c0_3, %c0_4, %c0_5] : memref<9x64x64xbf16, #tpu.memory_space<vmem>>, vector<1x64x64xbf16>
    %12 = vector.shape_cast %11 : vector<1x64x64xbf16> to vector<64x64xbf16>
    %cst_6 = arith.constant dense<0.000000e+00> : vector<128x64xf32>
    %13 = tpu.matmul %10, %12, %cst_6 {dimension_numbers = #tpu.dot_dimension_numbers<[1], [0], [0], [1], [0, 0, 1, 1], [], []>} : vector<128x64xbf16>, vector<64x64xbf16>, vector<128x64xf32> -> vector<128x64xf32>
    %14 = arith.addf %8, %13 : vector<128x64xf32>
    %15 = vector.extract_strided_slice %7 {offsets = [0, 1, 0], sizes = [8, 16, 64], strides = [1, 1, 1]} : vector<10x18x64xbf16> to vector<8x16x64xbf16>
    %16 = vector.shape_cast %15 : vector<8x16x64xbf16> to vector<128x64xbf16>
    %c1 = arith.constant 1 : index
    %c0_7 = arith.constant 0 : index
    %c0_8 = arith.constant 0 : index
    %17 = vector.load %arg3[%c1, %c0_7, %c0_8] : memref<9x64x64xbf16, #tpu.memory_space<vmem>>, vector<1x64x64xbf16>
    %18 = vector.shape_cast %17 : vector<1x64x64xbf16> to vector<64x64xbf16>
    %cst_9 = arith.constant dense<0.000000e+00> : vector<128x64xf32>
    %19 = tpu.matmul %16, %18, %cst_9 {dimension_numbers = #tpu.dot_dimension_numbers<[1], [0], [0], [1], [0, 0, 1, 1], [], []>} : vector<128x64xbf16>, vector<64x64xbf16>, vector<128x64xf32> -> vector<128x64xf32>
    %20 = arith.addf %14, %19 : vector<128x64xf32>
    %21 = vector.extract_strided_slice %7 {offsets = [0, 2, 0], sizes = [8, 16, 64], strides = [1, 1, 1]} : vector<10x18x64xbf16> to vector<8x16x64xbf16>
    %22 = vector.shape_cast %21 : vector<8x16x64xbf16> to vector<128x64xbf16>
    %c2 = arith.constant 2 : index
    %c0_10 = arith.constant 0 : index
    %c0_11 = arith.constant 0 : index
    %23 = vector.load %arg3[%c2, %c0_10, %c0_11] : memref<9x64x64xbf16, #tpu.memory_space<vmem>>, vector<1x64x64xbf16>
    %24 = vector.shape_cast %23 : vector<1x64x64xbf16> to vector<64x64xbf16>
    %cst_12 = arith.constant dense<0.000000e+00> : vector<128x64xf32>
    %25 = tpu.matmul %22, %24, %cst_12 {dimension_numbers = #tpu.dot_dimension_numbers<[1], [0], [0], [1], [0, 0, 1, 1], [], []>} : vector<128x64xbf16>, vector<64x64xbf16>, vector<128x64xf32> -> vector<128x64xf32>
    %26 = arith.addf %20, %25 : vector<128x64xf32>
    %27 = vector.extract_strided_slice %7 {offsets = [1, 0, 0], sizes = [8, 16, 64], strides = [1, 1, 1]} : vector<10x18x64xbf16> to vector<8x16x64xbf16>
    %28 = vector.shape_cast %27 : vector<8x16x64xbf16> to vector<128x64xbf16>
    %c3 = arith.constant 3 : index
    %c0_13 = arith.constant 0 : index
    %c0_14 = arith.constant 0 : index
    %29 = vector.load %arg3[%c3, %c0_13, %c0_14] : memref<9x64x64xbf16, #tpu.memory_space<vmem>>, vector<1x64x64xbf16>
    %30 = vector.shape_cast %29 : vector<1x64x64xbf16> to vector<64x64xbf16>
    %cst_15 = arith.constant dense<0.000000e+00> : vector<128x64xf32>
    %31 = tpu.matmul %28, %30, %cst_15 {dimension_numbers = #tpu.dot_dimension_numbers<[1], [0], [0], [1], [0, 0, 1, 1], [], []>} : vector<128x64xbf16>, vector<64x64xbf16>, vector<128x64xf32> -> vector<128x64xf32>
    %32 = arith.addf %26, %31 : vector<128x64xf32>
    %33 = vector.extract_strided_slice %7 {offsets = [1, 1, 0], sizes = [8, 16, 64], strides = [1, 1, 1]} : vector<10x18x64xbf16> to vector<8x16x64xbf16>
    %34 = vector.shape_cast %33 : vector<8x16x64xbf16> to vector<128x64xbf16>
    %c4 = arith.constant 4 : index
    %c0_16 = arith.constant 0 : index
    %c0_17 = arith.constant 0 : index
    %35 = vector.load %arg3[%c4, %c0_16, %c0_17] : memref<9x64x64xbf16, #tpu.memory_space<vmem>>, vector<1x64x64xbf16>
    %36 = vector.shape_cast %35 : vector<1x64x64xbf16> to vector<64x64xbf16>
    %cst_18 = arith.constant dense<0.000000e+00> : vector<128x64xf32>
    %37 = tpu.matmul %34, %36, %cst_18 {dimension_numbers = #tpu.dot_dimension_numbers<[1], [0], [0], [1], [0, 0, 1, 1], [], []>} : vector<128x64xbf16>, vector<64x64xbf16>, vector<128x64xf32> -> vector<128x64xf32>
    %38 = arith.addf %32, %37 : vector<128x64xf32>
    %39 = vector.extract_strided_slice %7 {offsets = [1, 2, 0], sizes = [8, 16, 64], strides = [1, 1, 1]} : vector<10x18x64xbf16> to vector<8x16x64xbf16>
    %40 = vector.shape_cast %39 : vector<8x16x64xbf16> to vector<128x64xbf16>
    %c5 = arith.constant 5 : index
    %c0_19 = arith.constant 0 : index
    %c0_20 = arith.constant 0 : index
    %41 = vector.load %arg3[%c5, %c0_19, %c0_20] : memref<9x64x64xbf16, #tpu.memory_space<vmem>>, vector<1x64x64xbf16>
    %42 = vector.shape_cast %41 : vector<1x64x64xbf16> to vector<64x64xbf16>
    %cst_21 = arith.constant dense<0.000000e+00> : vector<128x64xf32>
    %43 = tpu.matmul %40, %42, %cst_21 {dimension_numbers = #tpu.dot_dimension_numbers<[1], [0], [0], [1], [0, 0, 1, 1], [], []>} : vector<128x64xbf16>, vector<64x64xbf16>, vector<128x64xf32> -> vector<128x64xf32>
    %44 = arith.addf %38, %43 : vector<128x64xf32>
    %45 = vector.extract_strided_slice %7 {offsets = [2, 0, 0], sizes = [8, 16, 64], strides = [1, 1, 1]} : vector<10x18x64xbf16> to vector<8x16x64xbf16>
    %46 = vector.shape_cast %45 : vector<8x16x64xbf16> to vector<128x64xbf16>
    %c6 = arith.constant 6 : index
    %c0_22 = arith.constant 0 : index
    %c0_23 = arith.constant 0 : index
    %47 = vector.load %arg3[%c6, %c0_22, %c0_23] : memref<9x64x64xbf16, #tpu.memory_space<vmem>>, vector<1x64x64xbf16>
    %48 = vector.shape_cast %47 : vector<1x64x64xbf16> to vector<64x64xbf16>
    %cst_24 = arith.constant dense<0.000000e+00> : vector<128x64xf32>
    %49 = tpu.matmul %46, %48, %cst_24 {dimension_numbers = #tpu.dot_dimension_numbers<[1], [0], [0], [1], [0, 0, 1, 1], [], []>} : vector<128x64xbf16>, vector<64x64xbf16>, vector<128x64xf32> -> vector<128x64xf32>
    %50 = arith.addf %44, %49 : vector<128x64xf32>
    %51 = vector.extract_strided_slice %7 {offsets = [2, 1, 0], sizes = [8, 16, 64], strides = [1, 1, 1]} : vector<10x18x64xbf16> to vector<8x16x64xbf16>
    %52 = vector.shape_cast %51 : vector<8x16x64xbf16> to vector<128x64xbf16>
    %c7 = arith.constant 7 : index
    %c0_25 = arith.constant 0 : index
    %c0_26 = arith.constant 0 : index
    %53 = vector.load %arg3[%c7, %c0_25, %c0_26] : memref<9x64x64xbf16, #tpu.memory_space<vmem>>, vector<1x64x64xbf16>
    %54 = vector.shape_cast %53 : vector<1x64x64xbf16> to vector<64x64xbf16>
    %cst_27 = arith.constant dense<0.000000e+00> : vector<128x64xf32>
    %55 = tpu.matmul %52, %54, %cst_27 {dimension_numbers = #tpu.dot_dimension_numbers<[1], [0], [0], [1], [0, 0, 1, 1], [], []>} : vector<128x64xbf16>, vector<64x64xbf16>, vector<128x64xf32> -> vector<128x64xf32>
    %56 = arith.addf %50, %55 : vector<128x64xf32>
    %57 = vector.extract_strided_slice %7 {offsets = [2, 2, 0], sizes = [8, 16, 64], strides = [1, 1, 1]} : vector<10x18x64xbf16> to vector<8x16x64xbf16>
    %58 = vector.shape_cast %57 : vector<8x16x64xbf16> to vector<128x64xbf16>
    %c8 = arith.constant 8 : index
    %c0_28 = arith.constant 0 : index
    %c0_29 = arith.constant 0 : index
    %59 = vector.load %arg3[%c8, %c0_28, %c0_29] : memref<9x64x64xbf16, #tpu.memory_space<vmem>>, vector<1x64x64xbf16>
    %60 = vector.shape_cast %59 : vector<1x64x64xbf16> to vector<64x64xbf16>
    %cst_30 = arith.constant dense<0.000000e+00> : vector<128x64xf32>
    %61 = tpu.matmul %58, %60, %cst_30 {dimension_numbers = #tpu.dot_dimension_numbers<[1], [0], [0], [1], [0, 0, 1, 1], [], []>} : vector<128x64xbf16>, vector<64x64xbf16>, vector<128x64xf32> -> vector<128x64xf32>
    %62 = arith.addf %56, %61 : vector<128x64xf32>
    %c0_31 = arith.constant 0 : index
    %c0_32 = arith.constant 0 : index
    %63 = vector.load %arg4[%c0_31, %c0_32] : memref<1x64xf32, #tpu.memory_space<vmem>>, vector<1x64xf32>
    %64 = vector.broadcast %63 : vector<1x64xf32> to vector<128x64xf32>
    %65 = arith.addf %62, %64 : vector<128x64xf32>
    %66 = arith.truncf %65 : vector<128x64xf32> to vector<128x64xbf16>
    %c0_33 = arith.constant 0 : index
    %c0_34 = arith.constant 0 : index
    %c0_35 = arith.constant 0 : index
    %67 = vector.load %arg5[%c0_33, %c0_34, %c0_35] : memref<1x128x64xbf16, #tpu.memory_space<vmem>>, vector<1x128x64xbf16>
    %68 = vector.shape_cast %67 : vector<1x128x64xbf16> to vector<128x64xbf16>
    %69 = vector.shape_cast %66 : vector<128x64xbf16> to vector<1x128x64xbf16>
    tpu.vector_store %arg5[%c0_33, %c0_34, %c0_35], %69 {strides = array<i32>} : memref<1x128x64xbf16, #tpu.memory_space<vmem>>, vector<1x128x64xbf16>,
    %c0_36 = arith.constant 0 : index
    %c0_37 = arith.constant 0 : index
    %c0_38 = arith.constant 0 : index
    %70 = vector.load %arg6[%c0_36, %c0_37, %c0_38] : memref<1x1x64xf32, #tpu.memory_space<vmem>>, vector<1x1x64xf32>
    %71 = vector.shape_cast %70 : vector<1x1x64xf32> to vector<1x64xf32>
    %cst_39 = arith.constant dense<0.000000e+00> : vector<64xf32>
    %72 = vector.multi_reduction <add>, %65, %cst_39 [0] : vector<128x64xf32> to vector<64xf32>
    %73 = vector.shape_cast %72 : vector<64xf32> to vector<1x64xf32>
    %74 = arith.addf %71, %73 : vector<1x64xf32>
    %c0_40 = arith.constant 0 : index
    %c0_41 = arith.constant 0 : index
    %c0_42 = arith.constant 0 : index
    %75 = vector.load %arg6[%c0_40, %c0_41, %c0_42] : memref<1x1x64xf32, #tpu.memory_space<vmem>>, vector<1x1x64xf32>
    %76 = vector.shape_cast %75 : vector<1x1x64xf32> to vector<1x64xf32>
    %77 = vector.shape_cast %74 : vector<1x64xf32> to vector<1x1x64xf32>
    tpu.vector_store %arg6[%c0_40, %c0_41, %c0_42], %77 {strides = array<i32>} : memref<1x1x64xf32, #tpu.memory_space<vmem>>, vector<1x1x64xf32>,
    %c0_43 = arith.constant 0 : index
    %c0_44 = arith.constant 0 : index
    %c0_45 = arith.constant 0 : index
    %78 = vector.load %arg7[%c0_43, %c0_44, %c0_45] : memref<1x1x64xf32, #tpu.memory_space<vmem>>, vector<1x1x64xf32>
    %79 = vector.shape_cast %78 : vector<1x1x64xf32> to vector<1x64xf32>
    %80 = arith.mulf %65, %65 : vector<128x64xf32>
    %cst_46 = arith.constant dense<0.000000e+00> : vector<64xf32>
    %81 = vector.multi_reduction <add>, %80, %cst_46 [0] : vector<128x64xf32> to vector<64xf32>
    %82 = vector.shape_cast %81 : vector<64xf32> to vector<1x64xf32>
    %83 = arith.addf %79, %82 : vector<1x64xf32>
    %c0_47 = arith.constant 0 : index
    %c0_48 = arith.constant 0 : index
    %c0_49 = arith.constant 0 : index
    %84 = vector.load %arg7[%c0_47, %c0_48, %c0_49] : memref<1x1x64xf32, #tpu.memory_space<vmem>>, vector<1x1x64xf32>
    %85 = vector.shape_cast %84 : vector<1x1x64xf32> to vector<1x64xf32>
    %86 = vector.shape_cast %83 : vector<1x64xf32> to vector<1x1x64xf32>
    tpu.vector_store %arg7[%c0_47, %c0_48, %c0_49], %86 {strides = array<i32>} : memref<1x1x64xf32, #tpu.memory_space<vmem>>, vector<1x1x64xf32>,
    return
  }
  func.func @transform_0(%arg0: i32, %arg1: i32) -> (i32, i32, i32, i32) {
    %c0_i32 = arith.constant 0 : i32
    %c0_i32_0 = arith.constant 0 : i32
    %c0_i32_1 = arith.constant 0 : i32
    %c0_i32_2 = arith.constant 0 : i32
    return %arg0, %c0_i32, %c0_i32_0, %c0_i32_1 : i32, i32, i32, i32
  }
  func.func @transform_1(%arg0: i32, %arg1: i32) -> (i32, i32, i32) {
    %c0_i32 = arith.constant 0 : i32
    %c0_i32_0 = arith.constant 0 : i32
    %c0_i32_1 = arith.constant 0 : i32
    %c0_i32_2 = arith.constant 0 : i32
    return %c0_i32, %c0_i32_0, %c0_i32_1 : i32, i32, i32
  }
  func.func @transform_2(%arg0: i32, %arg1: i32) -> (i32, i32) {
    %c0_i32 = arith.constant 0 : i32
    %c0_i32_0 = arith.constant 0 : i32
    %c0_i32_1 = arith.constant 0 : i32
    return %c0_i32, %c0_i32_0 : i32, i32
  }
  func.func @transform_3(%arg0: i32, %arg1: i32) -> (i32, i32, i32) {
    %c0_i32 = arith.constant 0 : i32
    %c0_i32_0 = arith.constant 0 : i32
    return %arg0, %arg1, %c0_i32 : i32, i32, i32
  }
  func.func @transform_4(%arg0: i32, %arg1: i32) -> (i32, i32, i32) {
    %c0_i32 = arith.constant 0 : i32
    %c0_i32_0 = arith.constant 0 : i32
    %c0_i32_1 = arith.constant 0 : i32
    return %arg0, %c0_i32, %c0_i32_0 : i32, i32, i32
  }
  func.func @transform_5(%arg0: i32, %arg1: i32) -> (i32, i32, i32) {
    %c0_i32 = arith.constant 0 : i32
    %c0_i32_0 = arith.constant 0 : i32
    %c0_i32_1 = arith.constant 0 : i32
    return %arg0, %c0_i32, %c0_i32_0 : i32, i32, i32
  }
}

</mosaic_0001>

<llo_original>
// kernel: tile.28
$region0: #{tile.28}
  #allocation0 [shape = 's32[1]{0}', space=sflag, size = 0x4, scoped, tag = 'scoped memory for tile.28']
  %s0 = inlined_call_operand.vmem [shape: f32[64], index: 0, kind: input, shape index: {}]
  %s1 = inlined_call_operand.vmem [shape: f32[2,64], index: 1, kind: output, shape index: {}]
  // Predicated region
  $region2: #{tile.28} parent=0 // pred_check
    _
  $region3: #{tile.28} parent=0 // pred_check_branch
    %3 = sbr.rel (0) target = $region5
  $region4: #{tile.28} parent=0 // pred_region
    _
  $region5: #{tile.28} parent=0 // pred_fallthru
    _
  %v4 = vld [vmem:[%s0] ss:$0 sm:$0xff]
  %5 = vst [vmem:[%s1] sm:$0x3] %v4

// kernel: tile.29
$region0: #{tile.29}
  %s0 = inlined_call_operand.vmem [shape: f32[2,64], index: 0, kind: input, shape index: {}]
  %s1 = inlined_call_operand.vmem [shape: f32[1,128], index: 1, kind: output, shape index: {}]
  $region1: #{tile.29} parent=0
    #allocation0 [shape = 'u8[4096]{0}', space=vmem, size = 0x1000, scoped, tag = 'scoped mem for output reshape']
    #allocation1 [shape = 'u8[4096]{0}', space=vmem, size = 0x1000, scoped, tag = 'scoped mem for input reshape']
    %s3 = ssub.s32 4, 1
    %v4 = vld [vmem:[%s0] sm:%s3]
    %5 = vst [vmem:[#allocation1] sm:%s3] %v4
    %v6 = vld [vmem:[#allocation1] sm:$0x1]
    %vm7 = vcmask 523264
    %8 = vst.msk [vmem:[#allocation0] sm:$0x1] %vm7, %v6
    %s9 = scalar_lea.vmem [#allocation1], 1
    %v10 = vld [vmem:[%s9] sm:$0x1]
    %11 = vrot.lane.b32.xlu0 %v10, 64
    %v12 = vpop.permute.xlu0 %11
    %vm13 = vcmask 1048064
    %14 = vst.msk [vmem:[#allocation0] sm:$0x1] %vm13, %v12
    %s16 = ssub.s32 2, 1
    %v17 = vld [vmem:[#allocation0] sm:%s16]
    %s19 = ssub.s32 2, 1
    %20 = vst [vmem:[%s1] sm:%s19] %v17

// kernel: inconv_forward.5
$region0: #{inconv_forward.5}
  #allocation0 [shape = 'u32[]', space=smem, size = 0x4, offset = 0x4, fixed_abs, tag = 'smem constant byte address 0x4 - core index']
  #allocation1 [shape = 'u32[72,128]{1,0:T(1,128)}', space=vmem, size = 0x9000, scoped, tag = 'internal scratch']
  %s0 = inlined_call_operand.vmem [shape: bf16[256,128], index: 0, kind: input, shape index: {}]
  %s1 = inlined_call_operand.vmem [shape: f32[1,128], index: 1, kind: input, shape index: {}]
  %s2 = inlined_call_operand.vmem [shape: f32[1,128], index: 2, kind: input, shape index: {}]
  %s3 = inlined_call_operand.vmem [shape: bf16[256,128], index: 3, kind: output, shape index: {}]
  %s4 = sld [smem:[#allocation0]]
  $region45: #{inconv_forward.5} parent=0
    _
  %s6 = ssub.s32 1, %s4
  %s7 = scalar_select 0, %s6, %s4
  loop: start=0, step=1, limit=4
  $region2: #{inconv_forward.5} parent=0 // loop_pre_header
    _
  $region3: #{inconv_forward.5} parent=0 // loop_header
    %s9 = sphi 0, %s13
    %p10 = scmp.ge.s32.totalorder %s9, 4
    %s19 = sphi 0, %s21
    %s22 = sphi 0, %s19
    %s23 = sphi 0, %s22
    %s39 = sphi 0, %s23
    %s43 = sphi 0, %s43
    %s45 = sphi 0, %s43
    %s46 = sphi 0, %s45
    %s60 = sphi 0, %s46
    %s64 = sphi 0, %s64
    %s66 = sphi 0, %s64
    %s67 = sphi 0, %s66
    %s81 = sphi 0, %s67
    %s87 = sphi 0, %s89
    %s90 = sphi 0, %s87
    %s91 = sphi 0, %s90
    %s107 = sphi 0, %s91
  $region4: #{inconv_forward.5} parent=0 // loop_header_branch
    %12 = sbr.rel (%p10) target = $region8
  $region5: #{inconv_forward.5} parent=0 // loop_body
    %s14 = ssub.s32 %s9, 1
    %s15 = ssub.s32 %s9, 2
    %s16 = sadd.s32 %s9, 1
    %s17 = ssub.s32 %s9, %s16
    %p18 = scmp.eq.s32.totalorder %s17, 0
    %s20 = sadd.s32 %s19, 1
    %s21 = scalar_select %p18, %s19, %s20
    %p24 = pneg %p18
    %p25 = scmp.eq.s32.totalorder %s9, 1
    %p26 = por %p24, %p25
    %p27 = scmp.ne.s32.totalorder %s19, %s22
    %p28 = scmp.eq.s32.totalorder %s9, 0
    %p29 = por %p27, %p28
    %p30 = scmp.ne.s32.totalorder %s19, %s22
    %p31 = scmp.eq.s32.totalorder %s14, 1
    %p32 = por %p30, %p31
    %p33 = scmp.ne.s32.totalorder %s22, %s23
    %p34 = scmp.eq.s32.totalorder %s14, 0
    %p35 = por %p33, %p34
    %p36 = scmp.ne.s32.totalorder %s22, %s23
    %p37 = scmp.eq.s32.totalorder %s15, 1
    %p38 = por %p36, %p37
    %p40 = scmp.ne.s32.totalorder %s23, %s39
    %p41 = scmp.eq.s32.totalorder %s15, 0
    %p42 = por %p40, %p41
    %s44 = sadd.s32 %s43, 1
    %p47 = scmp.eq.s32.totalorder %s9, 1
    %p48 = scmp.ne.s32.totalorder %s43, %s45
    %p49 = scmp.eq.s32.totalorder %s9, 0
    %p50 = por %p48, %p49
    %p51 = scmp.ne.s32.totalorder %s43, %s45
    %p52 = scmp.eq.s32.totalorder %s14, 1
    %p53 = por %p51, %p52
    %p54 = scmp.ne.s32.totalorder %s45, %s46
    %p55 = scmp.eq.s32.totalorder %s14, 0
    %p56 = por %p54, %p55
    %p57 = scmp.ne.s32.totalorder %s45, %s46
    %p58 = scmp.eq.s32.totalorder %s15, 1
    %p59 = por %p57, %p58
    %p61 = scmp.ne.s32.totalorder %s46, %s60
    %p62 = scmp.eq.s32.totalorder %s15, 0
    %p63 = por %p61, %p62
    %s65 = sadd.s32 %s64, 1
    %p68 = scmp.eq.s32.totalorder %s9, 1
    %p69 = scmp.ne.s32.totalorder %s64, %s66
    %p70 = scmp.eq.s32.totalorder %s9, 0
    %p71 = por %p69, %p70
    %p72 = scmp.ne.s32.totalorder %s64, %s66
    %p73 = scmp.eq.s32.totalorder %s14, 1
    %p74 = por %p72, %p73
    %p75 = scmp.ne.s32.totalorder %s66, %s67
    %p76 = scmp.eq.s32.totalorder %s14, 0
    %p77 = por %p75, %p76
    %p78 = scmp.ne.s32.totalorder %s66, %s67
    %p79 = scmp.eq.s32.totalorder %s15, 1
    %p80 = por %p78, %p79
    %p82 = scmp.ne.s32.totalorder %s67, %s81
    %p83 = scmp.eq.s32.totalorder %s15, 0
    %p84 = por %p82, %p83
    %s85 = ssub.s32 %s9, %s16
    %p86 = scmp.eq.s32.totalorder %s85, 0
    %s88 = sadd.s32 %s87, 1
    %s89 = scalar_select %p86, %s87, %s88
    %p92 = pneg %p86
    %p93 = scmp.eq.s32.totalorder %s9, 1
    %p94 = por %p92, %p93
    %p95 = scmp.ne.s32.totalorder %s87, %s90
    %p96 = scmp.eq.s32.totalorder %s9, 0
    %p97 = por %p95, %p96
    %p98 = scmp.ne.s32.totalorder %s87, %s90
    %p99 = scmp.eq.s32.totalorder %s14, 1
    %p100 = por %p98, %p99
    %p101 = scmp.ne.s32.totalorder %s90, %s91
    %p102 = scmp.eq.s32.totalorder %s14, 0
    %p103 = por %p101, %p102
    %p104 = scmp.ne.s32.totalorder %s90, %s91
    %p105 = scmp.eq.s32.totalorder %s15, 1
    %p106 = por %p104, %p105
    %p108 = scmp.ne.s32.totalorder %s91, %s107
    %p109 = scmp.eq.s32.totalorder %s15, 0
    %p110 = por %p108, %p109
    %p111 = scmp.le.s32.totalorder 1, %s9
    %p112 = scmp.lt.s32.totalorder %s9, 3
    %p113 = pnand %p111, %p112
    %p114 = pneg %p113
    // Predicated region
    $region9: #{inconv_forward.5} parent=5 // pred_check
      _
    $region10: #{inconv_forward.5} parent=5 // pred_check_branch
      %116 = sbr.rel (%p113) target = $region12
    $region11: #{inconv_forward.5} parent=5 // pred_region
      %s117 = ssub.s32 %s9, 1
      // Predicated region
      $region13: #{inconv_forward.5} parent=11 // pred_check
        %p118 = pneg %p56
      $region14: #{inconv_forward.5} parent=11 // pred_check_branch
        %120 = sbr.rel (%p118) target = $region16
      $region15: #{inconv_forward.5} parent=11 // pred_region
        _
      $region16: #{inconv_forward.5} parent=11 // pred_fallthru
        _
      // Predicated region
      $region17: #{inconv_forward.5} parent=11 // pred_check
        %p121 = pneg %p77
      $region18: #{inconv_forward.5} parent=11 // pred_check_branch
        %123 = sbr.rel (%p121) target = $region20
      $region19: #{inconv_forward.5} parent=11 // pred_region
        _
      $region20: #{inconv_forward.5} parent=11 // pred_fallthru
        _
    $region12: #{inconv_forward.5} parent=5 // pred_fallthru
      _
    %p124 = scmp.lt.s32.totalorder %s9, 2
    // Predicated region
    $region21: #{inconv_forward.5} parent=5 // pred_check
      %p125 = pneg %p124
    $region22: #{inconv_forward.5} parent=5 // pred_check_branch
      %127 = sbr.rel (%p125) target = $region24
    $region23: #{inconv_forward.5} parent=5 // pred_region
      // Predicated region
      $region25: #{inconv_forward.5} parent=23 // pred_check
        %p128 = pneg %p29
      $region26: #{inconv_forward.5} parent=23 // pred_check_branch
        %130 = sbr.rel (%p128) target = $region28
      $region27: #{inconv_forward.5} parent=23 // pred_region
        %s131 = smul.u32 16, %s9
        %p132 = scmp.lt.s32.totalorder %s131, 31
        %s133 = scalar_select %p132, %s131, 31
        %s134 = smul.addr %s133, 4
        %s135 = scalar_lea.vmem %s0, %s134
        %s136 = smul.u32 16, %s9
      $region28: #{inconv_forward.5} parent=23 // pred_fallthru
        _
    $region24: #{inconv_forward.5} parent=5 // pred_fallthru
      _
    %p137 = scmp.le.s32.totalorder 1, %s9
    %p138 = scmp.lt.s32.totalorder %s9, 3
    %p139 = pnand %p137, %p138
    %p140 = pneg %p139
    // Predicated region
    $region29: #{inconv_forward.5} parent=5 // pred_check
      _
    $region30: #{inconv_forward.5} parent=5 // pred_check_branch
      %142 = sbr.rel (%p139) target = $region32
    $region31: #{inconv_forward.5} parent=5 // pred_region
      %s143 = ssub.s32 %s9, 1
      %s144 = smul.u32 16, %s14
      %p145 = scmp.lt.s32.totalorder %s144, 31
      %s146 = scalar_select %p145, %s144, 31
      %s147 = smul.addr %s146, 4
      %s148 = scalar_lea.vmem %s0, %s147
      %p149 = pneg %p35
      %p150 = pneg %p32
      %p151 = pneg %p56
      %p152 = pneg %p53
      %p153 = pneg %p77
      %p154 = pneg %p74
      %p155 = pneg %p103
      %p156 = pneg %p100
      %s157 = smul.u32 16, %s14
      %p158 = scmp.lt.s32.totalorder %s157, 31
      %s159 = scalar_select %p158, %s157, 31
      %s160 = smul.addr %s159, 4
      %s161 = scalar_lea.vmem %s3, %s160
      %s162 = smul.u32 16, %s14
      %p163 = scmp.lt.s32.totalorder %s162, 31
      %s164 = scalar_select %p163, %s162, 31
      %s165 = smul.addr %s164, 4
      %s166 = scalar_lea.vmem %s0, %s165
      %s167 = smul.u32 16, %s14
      %s168 = smul.u32 16, %s14
      %p169 = scmp.lt.s32.totalorder %s168, 31
      %s170 = scalar_select %p169, %s168, 31
      %s171 = smul.addr %s170, 4
      %s172 = scalar_lea.vmem %s3, %s171
      %s173 = smul.u32 16, %s14
      %v174 = vld [vmem:[%s166] sm:$0xf]
      %v175 = vld [vmem:[%s166 + $0x4] sm:$0xf]
      %v176 = vld [vmem:[%s166 + $0x8] sm:$0xf]
      %v177 = vld [vmem:[%s166 + $0xc] sm:$0xf]
      %v178 = vld [vmem:[%s166 + $0x10] sm:$0xf]
      %v179 = vld [vmem:[%s166 + $0x14] sm:$0xf]
      %v180 = vld [vmem:[%s166 + $0x18] sm:$0xf]
      %v181 = vld [vmem:[%s166 + $0x1c] sm:$0xf]
      %v182 = vld [vmem:[%s166 + $0x20] sm:$0xf]
      %v183 = vld [vmem:[%s166 + $0x24] sm:$0xf]
      %v184 = vld [vmem:[%s166 + $0x28] sm:$0xf]
      %v185 = vld [vmem:[%s166 + $0x2c] sm:$0xf]
      %v186 = vld [vmem:[%s166 + $0x30] sm:$0xf]
      %v187 = vld [vmem:[%s166 + $0x34] sm:$0xf]
      %v188 = vld [vmem:[%s166 + $0x38] sm:$0xf]
      %v189 = vld [vmem:[%s166 + $0x3c] sm:$0xf]
      %v190 = vunpack.c.l.bf16 %v174
      %v191 = vunpack.c.l.bf16 %v175
      %v192 = vunpack.c.l.bf16 %v176
      %v193 = vunpack.c.l.bf16 %v177
      %v194 = vunpack.c.l.bf16 %v178
      %v195 = vunpack.c.l.bf16 %v179
      %v196 = vunpack.c.l.bf16 %v180
      %v197 = vunpack.c.l.bf16 %v181
      %v198 = vunpack.c.l.bf16 %v182
      %v199 = vunpack.c.l.bf16 %v183
      %v200 = vunpack.c.l.bf16 %v184
      %v201 = vunpack.c.l.bf16 %v185
      %v202 = vunpack.c.l.bf16 %v186
      %v203 = vunpack.c.l.bf16 %v187
      %v204 = vunpack.c.l.bf16 %v188
      %v205 = vunpack.c.l.bf16 %v189
      %v206 = vld [vmem:[%s1] sm:$0x1]
      %v208 = vperm.slane %v206, 0
      %v210 = vmul.f32 %v190, %v208
      %v211 = vmul.f32 %v191, %v208
      %v212 = vmul.f32 %v192, %v208
      %v213 = vmul.f32 %v193, %v208
      %v214 = vmul.f32 %v194, %v208
      %v215 = vmul.f32 %v195, %v208
      %v216 = vmul.f32 %v196, %v208
      %v217 = vmul.f32 %v197, %v208
      %v218 = vmul.f32 %v198, %v208
      %v219 = vmul.f32 %v199, %v208
      %v220 = vmul.f32 %v200, %v208
      %v221 = vmul.f32 %v201, %v208
      %v222 = vmul.f32 %v202, %v208
      %v223 = vmul.f32 %v203, %v208
      %v224 = vmul.f32 %v204, %v208
      %v225 = vmul.f32 %v205, %v208
      %v226 = vld [vmem:[%s2] sm:$0x1]
      %v228 = vperm.slane %v226, 0
      %v230 = vadd.f32 %v210, %v228
      %v231 = vadd.f32 %v211, %v228
      %v232 = vadd.f32 %v212, %v228
      %v233 = vadd.f32 %v213, %v228
      %v234 = vadd.f32 %v214, %v228
      %v235 = vadd.f32 %v215, %v228
      %v236 = vadd.f32 %v216, %v228
      %v237 = vadd.f32 %v217, %v228
      %v238 = vadd.f32 %v218, %v228
      %v239 = vadd.f32 %v219, %v228
      %v240 = vadd.f32 %v220, %v228
      %v241 = vadd.f32 %v221, %v228
      %v242 = vadd.f32 %v222, %v228
      %v243 = vadd.f32 %v223, %v228
      %v244 = vadd.f32 %v224, %v228
      %v245 = vadd.f32 %v225, %v228
      %v246 = vmax.f32 %v230, 0.0
      %v247 = vmax.f32 %v231, 0.0
      %v248 = vmax.f32 %v232, 0.0
      %v249 = vmax.f32 %v233, 0.0
      %v250 = vmax.f32 %v234, 0.0
      %v251 = vmax.f32 %v235, 0.0
      %v252 = vmax.f32 %v236, 0.0
      %v253 = vmax.f32 %v237, 0.0
      %v254 = vmax.f32 %v238, 0.0
      %v255 = vmax.f32 %v239, 0.0
      %v256 = vmax.f32 %v240, 0.0
      %v257 = vmax.f32 %v241, 0.0
      %v258 = vmax.f32 %v242, 0.0
      %v259 = vmax.f32 %v243, 0.0
      %v260 = vmax.f32 %v244, 0.0
      %v261 = vmax.f32 %v245, 0.0
      %v262 = vpack.c.bf16 %v246, %v246
      %v263 = vpack.c.bf16 %v247, %v247
      %v264 = vpack.c.bf16 %v248, %v248
      %v265 = vpack.c.bf16 %v249, %v249
      %v266 = vpack.c.bf16 %v250, %v250
      %v267 = vpack.c.bf16 %v251, %v251
      %v268 = vpack.c.bf16 %v252, %v252
      %v269 = vpack.c.bf16 %v253, %v253
      %v270 = vpack.c.bf16 %v254, %v254
      %v271 = vpack.c.bf16 %v255, %v255
      %v272 = vpack.c.bf16 %v256, %v256
      %v273 = vpack.c.bf16 %v257, %v257
      %v274 = vpack.c.bf16 %v258, %v258
      %v275 = vpack.c.bf16 %v259, %v259
      %v276 = vpack.c.bf16 %v260, %v260
      %v277 = vpack.c.bf16 %v261, %v261
      %278 = vst [vmem:[%s172] sm:$0xf] %v262
      %279 = vst [vmem:[%s172 + $0x4] sm:$0xf] %v263
      %280 = vst [vmem:[%s172 + $0x8] sm:$0xf] %v264
      %281 = vst [vmem:[%s172 + $0xc] sm:$0xf] %v265
      %282 = vst [vmem:[%s172 + $0x10] sm:$0xf] %v266
      %283 = vst [vmem:[%s172 + $0x14] sm:$0xf] %v267
      %284 = vst [vmem:[%s172 + $0x18] sm:$0xf] %v268
      %285 = vst [vmem:[%s172 + $0x1c] sm:$0xf] %v269
      %286 = vst [vmem:[%s172 + $0x20] sm:$0xf] %v270
      %287 = vst [vmem:[%s172 + $0x24] sm:$0xf] %v271
      %288 = vst [vmem:[%s172 + $0x28] sm:$0xf] %v272
      %289 = vst [vmem:[%s172 + $0x2c] sm:$0xf] %v273
      %290 = vst [vmem:[%s172 + $0x30] sm:$0xf] %v274
      %291 = vst [vmem:[%s172 + $0x34] sm:$0xf] %v275
      %292 = vst [vmem:[%s172 + $0x38] sm:$0xf] %v276
      %293 = vst [vmem:[%s172 + $0x3c] sm:$0xf] %v277
      %s294 = smul.u32 16, %s14
      %p295 = scmp.lt.s32.totalorder %s294, 31
      %s296 = scalar_select %p295, %s294, 31
      %s297 = smul.addr %s296, 4
      %s298 = scalar_lea.vmem %s3, %s297
      // Predicated region
      $region33: #{inconv_forward.5} parent=31 // pred_check
        %p299 = pneg %p100
      $region34: #{inconv_forward.5} parent=31 // pred_check_branch
        %301 = sbr.rel (%p299) target = $region36
      $region35: #{inconv_forward.5} parent=31 // pred_region
        %s302 = smul.u32 16, %s14
      $region36: #{inconv_forward.5} parent=31 // pred_fallthru
        _
    $region32: #{inconv_forward.5} parent=5 // pred_fallthru
      _
    %p303 = scmp.le.s32.totalorder 2, %s9
    // Predicated region
    $region37: #{inconv_forward.5} parent=5 // pred_check
      %p304 = pneg %p303
    $region38: #{inconv_forward.5} parent=5 // pred_check_branch
      %306 = sbr.rel (%p304) target = $region40
    $region39: #{inconv_forward.5} parent=5 // pred_region
      %s307 = ssub.s32 %s9, 2
      // Predicated region
      $region41: #{inconv_forward.5} parent=39 // pred_check
        %p308 = pneg %p106
      $region42: #{inconv_forward.5} parent=39 // pred_check_branch
        %310 = sbr.rel (%p308) target = $region44
      $region43: #{inconv_forward.5} parent=39 // pred_region
        %s311 = smul.u32 16, %s15
        %p312 = scmp.lt.s32.totalorder %s311, 31
        %s313 = scalar_select %p312, %s311, 31
        %s314 = smul.addr %s313, 4
        %s315 = scalar_lea.vmem %s3, %s314
      $region44: #{inconv_forward.5} parent=39 // pred_fallthru
        _
    $region40: #{inconv_forward.5} parent=5 // pred_fallthru
      _
  $region6: #{inconv_forward.5} parent=0 // loop_footer
    %s13 = sadd.s32 1, %s9
  $region7: #{inconv_forward.5} parent=0 // loop_footer_branch
    %8 = sbr.rel target = $region3
  $region8: #{inconv_forward.5} parent=0 // loop_exit
    _

// kernel: inconv_forward.4
$region0: #{inconv_forward.4}
  #allocation0 [shape = 'u32[]', space=smem, size = 0x4, offset = 0x4, fixed_abs, tag = 'smem constant byte address 0x4 - core index']
  #allocation1 [shape = 'u32[72,128]{1,0:T(1,128)}', space=vmem, size = 0x9000, scoped, tag = 'internal scratch']
  %s0 = inlined_call_operand.vmem [shape: bf16[2,18,18,4], index: 0, kind: input, shape index: {}]
  %s1 = inlined_call_operand.vmem [shape: bf16[9,4,64], index: 1, kind: input, shape index: {}]
  %s2 = inlined_call_operand.vmem [shape: f32[1,64], index: 2, kind: input, shape index: {}]
  %s3 = inlined_call_operand.vmem [shape: bf16[2,256,64], index: 3, kind: output, shape index: {0}]
  %s4 = inlined_call_operand.vmem [shape: f32[2,1,64], index: 4, kind: output, shape index: {1}]
  %s5 = inlined_call_operand.vmem [shape: f32[2,1,64], index: 5, kind: output, shape index: {2}]
  %6 = xla_tuple %s3, %s4, %s5
  %s7 = sld [smem:[#allocation0]]
  $region65: #{inconv_forward.4} parent=0
    _
  %s9 = ssub.s32 1, %s7
  %s10 = scalar_select 0, %s9, %s7
  loop: start=0, step=1, limit=6
  $region2: #{inconv_forward.4} parent=0 // loop_pre_header
    _
  $region3: #{inconv_forward.4} parent=0 // loop_header
    %s12 = sphi 0, %s16
    %p13 = scmp.ge.s32.totalorder %s12, 6
    %s19 = sphi 0, %s31
    %s20 = sphi 0, %s27
    %s21 = sphi 0, %s19
    %s22 = sphi 0, %s20
    %s23 = sphi 0, %s21
    %s24 = sphi 0, %s22
    %s34 = sphi 0, %s36
    %s37 = sphi 0, %s34
    %s38 = sphi 0, %s37
    %s54 = sphi 0, %s38
    %s58 = sphi 0, %s58
    %s60 = sphi 0, %s58
    %s61 = sphi 0, %s60
    %s75 = sphi 0, %s61
    %s79 = sphi 0, %s79
    %s81 = sphi 0, %s79
    %s82 = sphi 0, %s81
    %s96 = sphi 0, %s82
    %s104 = sphi 0, %s106
    %s107 = sphi 0, %s104
    %s108 = sphi 0, %s107
    %s124 = sphi 0, %s108
    %s130 = sphi 0, %s132
    %s133 = sphi 0, %s130
    %s134 = sphi 0, %s133
    %s150 = sphi 0, %s134
    %s156 = sphi 0, %s158
    %s159 = sphi 0, %s156
    %s160 = sphi 0, %s159
    %s176 = sphi 0, %s160
  $region4: #{inconv_forward.4} parent=0 // loop_header_branch
    %15 = sbr.rel (%p13) target = $region8
  $region5: #{inconv_forward.4} parent=0 // loop_body
    %s17 = ssub.s32 %s12, 1
    %s18 = ssub.s32 %s12, 2
    %s25 = sadd.s32 1, %s20
    %p26 = scmp.ge.s32.totalorder %s25, 2
    %s27 = scalar_select %p26, 0, %s25
    %s28 = sadd.s32 1, %s19
    %s29 = scalar_select %p26, %s28, %s19
    %p30 = scmp.ge.s32.totalorder %s29, 2
    %s31 = scalar_select %p30, 0, %s29
    %s32 = ssub.s32 %s19, %s31
    %p33 = scmp.eq.s32.totalorder %s32, 0
    %s35 = sadd.s32 %s34, 1
    %s36 = scalar_select %p33, %s34, %s35
    %p39 = pneg %p33
    %p40 = scmp.eq.s32.totalorder %s12, 3
    %p41 = por %p39, %p40
    %p42 = scmp.ne.s32.totalorder %s34, %s37
    %p43 = scmp.eq.s32.totalorder %s12, 0
    %p44 = por %p42, %p43
    %p45 = scmp.ne.s32.totalorder %s34, %s37
    %p46 = scmp.eq.s32.totalorder %s17, 3
    %p47 = por %p45, %p46
    %p48 = scmp.ne.s32.totalorder %s37, %s38
    %p49 = scmp.eq.s32.totalorder %s17, 0
    %p50 = por %p48, %p49
    %p51 = scmp.ne.s32.totalorder %s37, %s38
    %p52 = scmp.eq.s32.totalorder %s18, 3
    %p53 = por %p51, %p52
    %p55 = scmp.ne.s32.totalorder %s38, %s54
    %p56 = scmp.eq.s32.totalorder %s18, 0
    %p57 = por %p55, %p56
    %s59 = sadd.s32 %s58, 1
    %p62 = scmp.eq.s32.totalorder %s12, 3
    %p63 = scmp.ne.s32.totalorder %s58, %s60
    %p64 = scmp.eq.s32.totalorder %s12, 0
    %p65 = por %p63, %p64
    %p66 = scmp.ne.s32.totalorder %s58, %s60
    %p67 = scmp.eq.s32.totalorder %s17, 3
    %p68 = por %p66, %p67
    %p69 = scmp.ne.s32.totalorder %s60, %s61
    %p70 = scmp.eq.s32.totalorder %s17, 0
    %p71 = por %p69, %p70
    %p72 = scmp.ne.s32.totalorder %s60, %s61
    %p73 = scmp.eq.s32.totalorder %s18, 3
    %p74 = por %p72, %p73
    %p76 = scmp.ne.s32.totalorder %s61, %s75
    %p77 = scmp.eq.s32.totalorder %s18, 0
    %p78 = por %p76, %p77
    %s80 = sadd.s32 %s79, 1
    %p83 = scmp.eq.s32.totalorder %s12, 3
    %p84 = scmp.ne.s32.totalorder %s79, %s81
    %p85 = scmp.eq.s32.totalorder %s12, 0
    %p86 = por %p84, %p85
    %p87 = scmp.ne.s32.totalorder %s79, %s81
    %p88 = scmp.eq.s32.totalorder %s17, 3
    %p89 = por %p87, %p88
    %p90 = scmp.ne.s32.totalorder %s81, %s82
    %p91 = scmp.eq.s32.totalorder %s17, 0
    %p92 = por %p90, %p91
    %p93 = scmp.ne.s32.totalorder %s81, %s82
    %p94 = scmp.eq.s32.totalorder %s18, 3
    %p95 = por %p93, %p94
    %p97 = scmp.ne.s32.totalorder %s82, %s96
    %p98 = scmp.eq.s32.totalorder %s18, 0
    %p99 = por %p97, %p98
    %s100 = ssub.s32 %s19, %s31
    %s101 = ssub.s32 %s20, %s27
    %s102 = sor.u32 %s100, %s101
    %p103 = scmp.eq.s32.totalorder %s102, 0
    %s105 = sadd.s32 %s104, 1
    %s106 = scalar_select %p103, %s104, %s105
    %p109 = pneg %p103
    %p110 = scmp.eq.s32.totalorder %s12, 3
    %p111 = por %p109, %p110
    %p112 = scmp.ne.s32.totalorder %s104, %s107
    %p113 = scmp.eq.s32.totalorder %s12, 0
    %p114 = por %p112, %p113
    %p115 = scmp.ne.s32.totalorder %s104, %s107
    %p116 = scmp.eq.s32.totalorder %s17, 3
    %p117 = por %p115, %p116
    %p118 = scmp.ne.s32.totalorder %s107, %s108
    %p119 = scmp.eq.s32.totalorder %s17, 0
    %p120 = por %p118, %p119
    %p121 = scmp.ne.s32.totalorder %s107, %s108
    %p122 = scmp.eq.s32.totalorder %s18, 3
    %p123 = por %p121, %p122
    %p125 = scmp.ne.s32.totalorder %s108, %s124
    %p126 = scmp.eq.s32.totalorder %s18, 0
    %p127 = por %p125, %p126
    %s128 = ssub.s32 %s19, %s31
    %p129 = scmp.eq.s32.totalorder %s128, 0
    %s131 = sadd.s32 %s130, 1
    %s132 = scalar_select %p129, %s130, %s131
    %p135 = pneg %p129
    %p136 = scmp.eq.s32.totalorder %s12, 3
    %p137 = por %p135, %p136
    %p138 = scmp.ne.s32.totalorder %s130, %s133
    %p139 = scmp.eq.s32.totalorder %s12, 0
    %p140 = por %p138, %p139
    %p141 = scmp.ne.s32.totalorder %s130, %s133
    %p142 = scmp.eq.s32.totalorder %s17, 3
    %p143 = por %p141, %p142
    %p144 = scmp.ne.s32.totalorder %s133, %s134
    %p145 = scmp.eq.s32.totalorder %s17, 0
    %p146 = por %p144, %p145
    %p147 = scmp.ne.s32.totalorder %s133, %s134
    %p148 = scmp.eq.s32.totalorder %s18, 3
    %p149 = por %p147, %p148
    %p151 = scmp.ne.s32.totalorder %s134, %s150
    %p152 = scmp.eq.s32.totalorder %s18, 0
    %p153 = por %p151, %p152
    %s154 = ssub.s32 %s19, %s31
    %p155 = scmp.eq.s32.totalorder %s154, 0
    %s157 = sadd.s32 %s156, 1
    %s158 = scalar_select %p155, %s156, %s157
    %p161 = pneg %p155
    %p162 = scmp.eq.s32.totalorder %s12, 3
    %p163 = por %p161, %p162
    %p164 = scmp.ne.s32.totalorder %s156, %s159
    %p165 = scmp.eq.s32.totalorder %s12, 0
    %p166 = por %p164, %p165
    %p167 = scmp.ne.s32.totalorder %s156, %s159
    %p168 = scmp.eq.s32.totalorder %s17, 3
    %p169 = por %p167, %p168
    %p170 = scmp.ne.s32.totalorder %s159, %s160
    %p171 = scmp.eq.s32.totalorder %s17, 0
    %p172 = por %p170, %p171
    %p173 = scmp.ne.s32.totalorder %s159, %s160
    %p174 = scmp.eq.s32.totalorder %s18, 3
    %p175 = por %p173, %p174
    %p177 = scmp.ne.s32.totalorder %s160, %s176
    %p178 = scmp.eq.s32.totalorder %s18, 0
    %p179 = por %p177, %p178
    %p180 = scmp.le.s32.totalorder 1, %s12
    %p181 = scmp.lt.s32.totalorder %s12, 5
    %p182 = pnand %p180, %p181
    %p183 = pneg %p182
    // Predicated region
    $region9: #{inconv_forward.4} parent=5 // pred_check
      _
    $region10: #{inconv_forward.4} parent=5 // pred_check_branch
      %185 = sbr.rel (%p182) target = $region12
    $region11: #{inconv_forward.4} parent=5 // pred_region
      %s186 = ssub.s32 %s12, 1
      // Predicated region
      $region13: #{inconv_forward.4} parent=11 // pred_check
        %p187 = pneg %p71
      $region14: #{inconv_forward.4} parent=11 // pred_check_branch
        %189 = sbr.rel (%p187) target = $region16
      $region15: #{inconv_forward.4} parent=11 // pred_region
        _
      $region16: #{inconv_forward.4} parent=11 // pred_fallthru
        _
      // Predicated region
      $region17: #{inconv_forward.4} parent=11 // pred_check
        %p190 = pneg %p92
      $region18: #{inconv_forward.4} parent=11 // pred_check_branch
        %192 = sbr.rel (%p190) target = $region20
      $region19: #{inconv_forward.4} parent=11 // pred_region
        _
      $region20: #{inconv_forward.4} parent=11 // pred_fallthru
        _
    $region12: #{inconv_forward.4} parent=5 // pred_fallthru
      _
    %p193 = scmp.lt.s32.totalorder %s12, 4
    // Predicated region
    $region21: #{inconv_forward.4} parent=5 // pred_check
      %p194 = pneg %p193
    $region22: #{inconv_forward.4} parent=5 // pred_check_branch
      %196 = sbr.rel (%p194) target = $region24
    $region23: #{inconv_forward.4} parent=5 // pred_region
      // Predicated region
      $region25: #{inconv_forward.4} parent=23 // pred_check
        %p197 = pneg %p44
      $region26: #{inconv_forward.4} parent=23 // pred_check_branch
        %199 = sbr.rel (%p197) target = $region28
      $region27: #{inconv_forward.4} parent=23 // pred_region
        %p200 = scmp.lt.s32.totalorder %s19, 1
        %s201 = scalar_select %p200, %s19, 1
        %s202 = smul.addr %s201, 54
        %s203 = smul.addr %s202, 4
        %s204 = scalar_lea.vmem %s0, %s203
      $region28: #{inconv_forward.4} parent=23 // pred_fallthru
        _
    $region24: #{inconv_forward.4} parent=5 // pred_fallthru
      _
    %p205 = scmp.le.s32.totalorder 1, %s12
    %p206 = scmp.lt.s32.totalorder %s12, 5
    %p207 = pnand %p205, %p206
    %p208 = pneg %p207
    // Predicated region
    $region29: #{inconv_forward.4} parent=5 // pred_check
      _
    $region30: #{inconv_forward.4} parent=5 // pred_check_branch
      %210 = sbr.rel (%p207) target = $region32
    $region31: #{inconv_forward.4} parent=5 // pred_region
      %s211 = ssub.s32 %s12, 1
      %p212 = scmp.lt.s32.totalorder %s21, 1
      %s213 = scalar_select %p212, %s21, 1
      %s214 = smul.addr %s213, 54
      %s215 = smul.addr %s214, 4
      %s216 = scalar_lea.vmem %s0, %s215
      %p217 = pneg %p50
      %p218 = pneg %p47
      %p219 = pneg %p71
      %p220 = pneg %p68
      %p221 = pneg %p92
      %p222 = pneg %p89
      %p223 = pneg %p120
      %p224 = pneg %p117
      %s225 = smul.u32 16, %s22
      %p226 = scmp.lt.s32.totalorder %s21, 1
      %s227 = scalar_select %p226, %s21, 1
      %p228 = scmp.lt.s32.totalorder %s225, 31
      %s229 = scalar_select %p228, %s225, 31
      %s230 = smul.addr %s227, 32
      %s231 = sadd.s32 %s229, %s230
      %s232 = smul.addr %s231, 4
      %s233 = scalar_lea.vmem %s3, %s232
      %p234 = pneg %p146
      %p235 = pneg %p143
      %p236 = scmp.lt.s32.totalorder %s21, 1
      %s237 = scalar_select %p236, %s21, 1
      %s238 = scalar_lea.vmem %s4, %s237
      %p239 = pneg %p172
      %p240 = pneg %p169
      %p241 = scmp.lt.s32.totalorder %s21, 1
      %s242 = scalar_select %p241, %s21, 1
      %s243 = scalar_lea.vmem %s5, %s242
      %p244 = scmp.lt.s32.totalorder %s21, 1
      %s245 = scalar_select %p244, %s21, 1
      %s246 = smul.addr %s245, 54
      %s247 = smul.addr %s246, 4
      %s248 = scalar_lea.vmem %s0, %s247
      %s249 = smul.u32 16, %s22
      %p250 = scmp.lt.s32.totalorder %s21, 1
      %s251 = scalar_select %p250, %s21, 1
      %p252 = scmp.lt.s32.totalorder %s249, 31
      %s253 = scalar_select %p252, %s249, 31
      %s254 = smul.addr %s251, 32
      %s255 = sadd.s32 %s253, %s254
      %s256 = smul.addr %s255, 4
      %s257 = scalar_lea.vmem %s3, %s256
      %s258 = smul.u32 16, %s22
      %p259 = scmp.lt.s32.totalorder %s21, 1
      %s260 = scalar_select %p259, %s21, 1
      %s261 = scalar_lea.vmem %s4, %s260
      %p262 = scmp.lt.s32.totalorder %s21, 1
      %s263 = scalar_select %p262, %s21, 1
      %s264 = scalar_lea.vmem %s5, %s263
      %p266 = scmp.eq.s32.totalorder %s22, 0
      // Predicated region
      $region33: #{inconv_forward.4} parent=31 // pred_check
        %p267 = pneg %p266
      $region34: #{inconv_forward.4} parent=31 // pred_check_branch
        %269 = sbr.rel (%p267) target = $region36
      $region35: #{inconv_forward.4} parent=31 // pred_region
        %vm270 = vcmask 516096
        %271 = vst.msk [vmem:[%s261] sm:$0x1] %vm270, 0.0
        %272 = vst.msk [vmem:[%s264] sm:$0x1] %vm270, 0.0
      $region36: #{inconv_forward.4} parent=31 // pred_fallthru
        _
      %s273 = smul.u32 %s22, 8
      %s274 = smul.u32 %s273, 3
      %s275 = smul.addr %s274, 4
      %s276 = scalar_lea.vmem %s248, %s275
      %v277 = vld [vmem:[%s276] sm:$0xf]
      %v278 = vld [vmem:[%s276 + $0x4] sm:$0xf]
      %v279 = vld [vmem:[%s276 + $0x8] sm:$0x1]
      %v280 = vld [vmem:[%s276 + $0xc] sm:$0xf]
      %v281 = vld [vmem:[%s276 + $0x10] sm:$0xf]
      %v282 = vld [vmem:[%s276 + $0x14] sm:$0x1]
      %v283 = vld [vmem:[%s276 + $0x18] sm:$0xf]
      %v284 = vld [vmem:[%s276 + $0x1c] sm:$0xf]
      %v285 = vld [vmem:[%s276 + $0x20] sm:$0x1]
      %v286 = vld [vmem:[%s276 + $0x24] sm:$0xf]
      %v287 = vld [vmem:[%s276 + $0x28] sm:$0xf]
      %v288 = vld [vmem:[%s276 + $0x2c] sm:$0x1]
      %v289 = vld [vmem:[%s276 + $0x30] sm:$0xf]
      %v290 = vld [vmem:[%s276 + $0x34] sm:$0xf]
      %v291 = vld [vmem:[%s276 + $0x38] sm:$0x1]
      %v292 = vld [vmem:[%s276 + $0x3c] sm:$0xf]
      %v293 = vld [vmem:[%s276 + $0x40] sm:$0xf]
      %v294 = vld [vmem:[%s276 + $0x44] sm:$0x1]
      %v295 = vld [vmem:[%s276 + $0x48] sm:$0xf]
      %v296 = vld [vmem:[%s276 + $0x4c] sm:$0xf]
      %v297 = vld [vmem:[%s276 + $0x50] sm:$0x1]
      %v298 = vld [vmem:[%s276 + $0x54] sm:$0xf]
      %v299 = vld [vmem:[%s276 + $0x58] sm:$0xf]
      %v300 = vld [vmem:[%s276 + $0x5c] sm:$0x1]
      %v301 = vld [vmem:[%s276 + $0x60] sm:$0xf]
      %v302 = vld [vmem:[%s276 + $0x64] sm:$0xf]
      %v303 = vld [vmem:[%s276 + $0x68] sm:$0x1]
      %v304 = vld [vmem:[%s276 + $0x6c] sm:$0xf]
      %v305 = vld [vmem:[%s276 + $0x70] sm:$0xf]
      %v306 = vld [vmem:[%s276 + $0x74] sm:$0x1]
      %v307 = vld [vmem:[%s1] sm:$0x3]
      %vm308 = vsmask.f32 3328
      %vm309 = vsmask.f32 7440
      %vm310 = vmor %vm308, %vm309
      %v312 = vshrl.u32 %v277, 16
      %v314 = vrot.slane %v312, 4
      %v315 = vshll.u32 %v277, 16
      %v317 = vrot.slane %v315, 5
      %v318 = vor.u32 %v314, %v317
      %v319 = vrot.slane %v318, 4
      %v321 = vshll.u32 %v278, 16
      %v323 = vrot.slane %v321, 5
      %v324 = vsel %vm310, %v319, %v323
      %v325 = vshrl.u32 %v278, 16
      %v327 = vrot.slane %v325, 4
      %v328 = vor.u32 %v327, %v323
      %v329 = vrot.slane %v328, 4
      %v331 = vshll.u32 %v279, 16
      %v333 = vrot.slane %v331, 5
      %v334 = vsel %vm310, %v329, %v333
      %v336 = vshrl.u32 %v280, 16
      %v338 = vrot.slane %v336, 4
      %v339 = vshll.u32 %v280, 16
      %v341 = vrot.slane %v339, 5
      %v342 = vor.u32 %v338, %v341
      %v343 = vrot.slane %v342, 4
      %v345 = vshll.u32 %v281, 16
      %v347 = vrot.slane %v345, 5
      %v348 = vsel %vm310, %v343, %v347
      %v349 = vshrl.u32 %v281, 16
      %v351 = vrot.slane %v349, 4
      %v352 = vor.u32 %v351, %v347
      %v353 = vrot.slane %v352, 4
      %v355 = vshll.u32 %v282, 16
      %v357 = vrot.slane %v355, 5
      %v358 = vsel %vm310, %v353, %v357
      %v360 = vshrl.u32 %v283, 16
      %v362 = vrot.slane %v360, 4
      %v363 = vshll.u32 %v283, 16
      %v365 = vrot.slane %v363, 5
      %v366 = vor.u32 %v362, %v365
      %v367 = vrot.slane %v366, 4
      %v369 = vshll.u32 %v284, 16
      %v371 = vrot.slane %v369, 5
      %v372 = vsel %vm310, %v367, %v371
      %v373 = vshrl.u32 %v284, 16
      %v375 = vrot.slane %v373, 4
      %v376 = vor.u32 %v375, %v371
      %v377 = vrot.slane %v376, 4
      %v379 = vshll.u32 %v285, 16
      %v381 = vrot.slane %v379, 5
      %v382 = vsel %vm310, %v377, %v381
      %v384 = vshrl.u32 %v286, 16
      %v386 = vrot.slane %v384, 4
      %v387 = vshll.u32 %v286, 16
      %v389 = vrot.slane %v387, 5
      %v390 = vor.u32 %v386, %v389
      %v391 = vrot.slane %v390, 4
      %v393 = vshll.u32 %v287, 16
      %v395 = vrot.slane %v393, 5
      %v396 = vsel %vm310, %v391, %v395
      %v397 = vshrl.u32 %v287, 16
      %v399 = vrot.slane %v397, 4
      %v400 = vor.u32 %v399, %v395
      %v401 = vrot.slane %v400, 4
      %v403 = vshll.u32 %v288, 16
      %v405 = vrot.slane %v403, 5
      %v406 = vsel %vm310, %v401, %v405
      %v408 = vshrl.u32 %v289, 16
      %v410 = vrot.slane %v408, 4
      %v411 = vshll.u32 %v289, 16
      %v413 = vrot.slane %v411, 5
      %v414 = vor.u32 %v410, %v413
      %v415 = vrot.slane %v414, 4
      %v417 = vshll.u32 %v290, 16
      %v419 = vrot.slane %v417, 5
      %v420 = vsel %vm310, %v415, %v419
      %v421 = vshrl.u32 %v290, 16
      %v423 = vrot.slane %v421, 4
      %v424 = vor.u32 %v423, %v419
      %v425 = vrot.slane %v424, 4
      %v427 = vshll.u32 %v291, 16
      %v429 = vrot.slane %v427, 5
      %v430 = vsel %vm310, %v425, %v429
      %v432 = vshrl.u32 %v292, 16
      %v434 = vrot.slane %v432, 4
      %v435 = vshll.u32 %v292, 16
      %v437 = vrot.slane %v435, 5
      %v438 = vor.u32 %v434, %v437
      %v439 = vrot.slane %v438, 4
      %v441 = vshll.u32 %v293, 16
      %v443 = vrot.slane %v441, 5
      %v444 = vsel %vm310, %v439, %v443
      %v445 = vshrl.u32 %v293, 16
      %v447 = vrot.slane %v445, 4
      %v448 = vor.u32 %v447, %v443
      %v449 = vrot.slane %v448, 4
      %v451 = vshll.u32 %v294, 16
      %v453 = vrot.slane %v451, 5
      %v454 = vsel %vm310, %v449, %v453
      %v456 = vshrl.u32 %v295, 16
      %v458 = vrot.slane %v456, 4
      %v459 = vshll.u32 %v295, 16
      %v461 = vrot.slane %v459, 5
      %v462 = vor.u32 %v458, %v461
      %v463 = vrot.slane %v462, 4
      %v465 = vshll.u32 %v296, 16
      %v467 = vrot.slane %v465, 5
      %v468 = vsel %vm310, %v463, %v467
      %v469 = vshrl.u32 %v296, 16
      %v471 = vrot.slane %v469, 4
      %v472 = vor.u32 %v471, %v467
      %v473 = vrot.slane %v472, 4
      %v475 = vshll.u32 %v297, 16
      %v477 = vrot.slane %v475, 5
      %v478 = vsel %vm310, %v473, %v477
      %v480 = vshrl.u32 %v298, 16
      %v482 = vrot.slane %v480, 4
      %v483 = vshll.u32 %v298, 16
      %v485 = vrot.slane %v483, 5
      %v486 = vor.u32 %v482, %v485
      %v487 = vrot.slane %v486, 4
      %v489 = vshll.u32 %v299, 16
      %v491 = vrot.slane %v489, 5
      %v492 = vsel %vm310, %v487, %v491
      %v493 = vshrl.u32 %v299, 16
      %v495 = vrot.slane %v493, 4
      %v496 = vor.u32 %v495, %v491
      %v497 = vrot.slane %v496, 4
      %v499 = vshll.u32 %v300, 16
      %v501 = vrot.slane %v499, 5
      %v502 = vsel %vm310, %v497, %v501
      %s503 = scalar_lea.vmem %s1, 2
      %v504 = vld [vmem:[%s503] sm:$0x3]
      %v505 = vunpack.c.l.b16 %v324
      %v506 = vunpack.c.l.b16 %v334
      %v507 = vunpack.c.l.b16 %v348
      %v508 = vunpack.c.l.b16 %v358
      %v509 = vunpack.c.l.b16 %v372
      %v510 = vunpack.c.l.b16 %v382
      %v511 = vunpack.c.l.b16 %v396
      %v512 = vunpack.c.l.b16 %v406
      %v513 = vunpack.c.l.b16 %v420
      %v514 = vunpack.c.l.b16 %v430
      %v515 = vunpack.c.l.b16 %v444
      %v516 = vunpack.c.l.b16 %v454
      %v517 = vunpack.c.l.b16 %v468
      %v518 = vunpack.c.l.b16 %v478
      %v519 = vunpack.c.l.b16 %v492
      %v520 = vunpack.c.l.b16 %v502
      %v521 = vpack.c.b16 %v506, %v505
      %v522 = vpack.c.b16 %v508, %v507
      %v523 = vpack.c.b16 %v510, %v509
      %v524 = vpack.c.b16 %v512, %v511
      %v525 = vpack.c.b16 %v514, %v513
      %v526 = vpack.c.b16 %v516, %v515
      %v527 = vpack.c.b16 %v518, %v517
      %v528 = vpack.c.b16 %v520, %v519
      %vm529 = vcmask 31744
      %v531 = vsel %vm529, %v521, 0
      %v534 = vsel %vm529, %v522, 0
      %v537 = vsel %vm529, %v523, 0
      %v540 = vsel %vm529, %v524, 0
      %v543 = vsel %vm529, %v525, 0
      %v546 = vsel %vm529, %v526, 0
      %v549 = vsel %vm529, %v527, 0
      %v552 = vsel %vm529, %v528, 0
      %vm554 = vcmask 1041408
      %v556 = vsel %vm554, %v504, 0
      %558 = vmatpush.bf16.msra.mxu0 0
      %559 = vmatpush.bf16.msra.mxu0 0
      %560 = vmatpush.bf16.msra.mxu0 0
      %561 = vmatpush.bf16.msra.mxu0 0
      %562 = vmatpush.bf16.msra.mxu0 0
      %563 = vmatpush.bf16.msra.mxu0 0
      %564 = vmatpush.bf16.msra.mxu0 0
      %565 = vmatpush.bf16.msra.mxu0 %v556
      %566 = vmatmul.bf16.gmra.mxu0 %v531
      %v567 = vpop.f32.mrf.mxu0
      %v568 = vadd.f32 0.0, %v567
      %v569 = vpop.f32.mrf.mxu0
      %v570 = vadd.f32 0.0, %v569
      %571 = vmatmul.bf16.gmra.mxu0 %v534
      %v572 = vpop.f32.mrf.mxu0
      %v573 = vadd.f32 0.0, %v572
      %v574 = vpop.f32.mrf.mxu0
      %v575 = vadd.f32 0.0, %v574
      %576 = vmatmul.bf16.gmra.mxu0 %v537
      %v577 = vpop.f32.mrf.mxu0
      %v578 = vadd.f32 0.0, %v577
      %v579 = vpop.f32.mrf.mxu0
      %v580 = vadd.f32 0.0, %v579
      %581 = vmatmul.bf16.gmra.mxu0 %v540
      %v582 = vpop.f32.mrf.mxu0
      %v583 = vadd.f32 0.0, %v582
      %v584 = vpop.f32.mrf.mxu0
      %v585 = vadd.f32 0.0, %v584
      %586 = vmatmul.bf16.gmra.mxu0 %v543
      %v587 = vpop.f32.mrf.mxu0
      %v588 = vadd.f32 0.0, %v587
      %v589 = vpop.f32.mrf.mxu0
      %v590 = vadd.f32 0.0, %v589
      %591 = vmatmul.bf16.gmra.mxu0 %v546
      %v592 = vpop.f32.mrf.mxu0
      %v593 = vadd.f32 0.0, %v592
      %v594 = vpop.f32.mrf.mxu0
      %v595 = vadd.f32 0.0, %v594
      %596 = vmatmul.bf16.gmra.mxu0 %v549
      %v597 = vpop.f32.mrf.mxu0
      %v598 = vadd.f32 0.0, %v597
      %v599 = vpop.f32.mrf.mxu0
      %v600 = vadd.f32 0.0, %v599
      %601 = vmatmul.bf16.gmra.mxu0 %v552
      %v602 = vpop.f32.mrf.mxu0
      %v603 = vadd.f32 0.0, %v602
      %v604 = vpop.f32.mrf.mxu0
      %v605 = vadd.f32 0.0, %v604
      %606 = vdwg.mxu0
      %v623 = vunpack.c.l.b16 %v277
      %v624 = vunpack.c.l.b16 %v278
      %v625 = vunpack.c.l.b16 %v280
      %v626 = vunpack.c.l.b16 %v281
      %v627 = vunpack.c.l.b16 %v283
      %v628 = vunpack.c.l.b16 %v284
      %v629 = vunpack.c.l.b16 %v286
      %v630 = vunpack.c.l.b16 %v287
      %v631 = vunpack.c.l.b16 %v289
      %v632 = vunpack.c.l.b16 %v290
      %v633 = vunpack.c.l.b16 %v292
      %v634 = vunpack.c.l.b16 %v293
      %v635 = vunpack.c.l.b16 %v295
      %v636 = vunpack.c.l.b16 %v296
      %v637 = vunpack.c.l.b16 %v298
      %v638 = vunpack.c.l.b16 %v299
      %v639 = vpack.c.b16 %v624, %v623
      %v640 = vpack.c.b16 %v626, %v625
      %v641 = vpack.c.b16 %v628, %v627
      %v642 = vpack.c.b16 %v630, %v629
      %v643 = vpack.c.b16 %v632, %v631
      %v644 = vpack.c.b16 %v634, %v633
      %v645 = vpack.c.b16 %v636, %v635
      %v646 = vpack.c.b16 %v638, %v637
      %v648 = vsel %vm529, %v639, 0
      %v651 = vsel %vm529, %v640, 0
      %v654 = vsel %vm529, %v641, 0
      %v657 = vsel %vm529, %v642, 0
      %v660 = vsel %vm529, %v643, 0
      %v663 = vsel %vm529, %v644, 0
      %v666 = vsel %vm529, %v645, 0
      %v669 = vsel %vm529, %v646, 0
      %v672 = vsel %vm554, %v307, 0
      %674 = vmatpush.bf16.msra.mxu0 0
      %675 = vmatpush.bf16.msra.mxu0 0
      %676 = vmatpush.bf16.msra.mxu0 0
      %677 = vmatpush.bf16.msra.mxu0 0
      %678 = vmatpush.bf16.msra.mxu0 0
      %679 = vmatpush.bf16.msra.mxu0 0
      %680 = vmatpush.bf16.msra.mxu0 0
      %681 = vmatpush.bf16.msra.mxu0 %v672
      %682 = vmatmul.bf16.gmra.mxu0 %v648
      %v683 = vpop.f32.mrf.mxu0
      %v684 = vadd.f32 %v568, %v683
      %v685 = vpop.f32.mrf.mxu0
      %v686 = vadd.f32 %v570, %v685
      %687 = vmatmul.bf16.gmra.mxu0 %v651
      %v688 = vpop.f32.mrf.mxu0
      %v689 = vadd.f32 %v573, %v688
      %v690 = vpop.f32.mrf.mxu0
      %v691 = vadd.f32 %v575, %v690
      %692 = vmatmul.bf16.gmra.mxu0 %v654
      %v693 = vpop.f32.mrf.mxu0
      %v694 = vadd.f32 %v578, %v693
      %v695 = vpop.f32.mrf.mxu0
      %v696 = vadd.f32 %v580, %v695
      %697 = vmatmul.bf16.gmra.mxu0 %v657
      %v698 = vpop.f32.mrf.mxu0
      %v699 = vadd.f32 %v583, %v698
      %v700 = vpop.f32.mrf.mxu0
      %v701 = vadd.f32 %v585, %v700
      %702 = vmatmul.bf16.gmra.mxu0 %v660
      %v703 = vpop.f32.mrf.mxu0
      %v704 = vadd.f32 %v588, %v703
      %v705 = vpop.f32.mrf.mxu0
      %v706 = vadd.f32 %v590, %v705
      %707 = vmatmul.bf16.gmra.mxu0 %v663
      %v708 = vpop.f32.mrf.mxu0
      %v709 = vadd.f32 %v593, %v708
      %v710 = vpop.f32.mrf.mxu0
      %v711 = vadd.f32 %v595, %v710
      %712 = vmatmul.bf16.gmra.mxu0 %v666
      %v713 = vpop.f32.mrf.mxu0
      %v714 = vadd.f32 %v598, %v713
      %v715 = vpop.f32.mrf.mxu0
      %v716 = vadd.f32 %v600, %v715
      %717 = vmatmul.bf16.gmra.mxu0 %v669
      %v718 = vpop.f32.mrf.mxu0
      %v719 = vadd.f32 %v603, %v718
      %v720 = vpop.f32.mrf.mxu0
      %v721 = vadd.f32 %v605, %v720
      %722 = vdwg.mxu0
      %vm731 = vcmask 1042432
      %vm732 = vcmask 1046532
      %vm733 = vmor %vm731, %vm732
      %v734 = vrot.slane %v277, 5
      %v735 = vrot.slane %v734, 4
      %v736 = vrot.slane %v278, 5
      %v737 = vsel %vm733, %v735, %v736
      %v738 = vrot.slane %v736, 4
      %v739 = vrot.slane %v279, 5
      %v740 = vsel %vm733, %v738, %v739
      %v741 = vrot.slane %v280, 5
      %v742 = vrot.slane %v741, 4
      %v743 = vrot.slane %v281, 5
      %v744 = vsel %vm733, %v742, %v743
      %v745 = vrot.slane %v743, 4
      %v746 = vrot.slane %v282, 5
      %v747 = vsel %vm733, %v745, %v746
      %v748 = vrot.slane %v283, 5
      %v749 = vrot.slane %v748, 4
      %v750 = vrot.slane %v284, 5
      %v751 = vsel %vm733, %v749, %v750
      %v752 = vrot.slane %v750, 4
      %v753 = vrot.slane %v285, 5
      %v754 = vsel %vm733, %v752, %v753
      %v755 = vrot.slane %v286, 5
      %v756 = vrot.slane %v755, 4
      %v757 = vrot.slane %v287, 5
      %v758 = vsel %vm733, %v756, %v757
      %v759 = vrot.slane %v757, 4
      %v760 = vrot.slane %v288, 5
      %v761 = vsel %vm733, %v759, %v760
      %v762 = vrot.slane %v289, 5
      %v763 = vrot.slane %v762, 4
      %v764 = vrot.slane %v290, 5
      %v765 = vsel %vm733, %v763, %v764
      %v766 = vrot.slane %v764, 4
      %v767 = vrot.slane %v291, 5
      %v768 = vsel %vm733, %v766, %v767
      %v769 = vrot.slane %v292, 5
      %v770 = vrot.slane %v769, 4
      %v771 = vrot.slane %v293, 5
      %v772 = vsel %vm733, %v770, %v771
      %v773 = vrot.slane %v771, 4
      %v774 = vrot.slane %v294, 5
      %v775 = vsel %vm733, %v773, %v774
      %v776 = vrot.slane %v295, 5
      %v777 = vrot.slane %v776, 4
      %v778 = vrot.slane %v296, 5
      %v779 = vsel %vm733, %v777, %v778
      %v780 = vrot.slane %v778, 4
      %v781 = vrot.slane %v297, 5
      %v782 = vsel %vm733, %v780, %v781
      %v783 = vrot.slane %v298, 5
      %v784 = vrot.slane %v783, 4
      %v785 = vrot.slane %v299, 5
      %v786 = vsel %vm733, %v784, %v785
      %v787 = vrot.slane %v785, 4
      %v788 = vrot.slane %v300, 5
      %v789 = vsel %vm733, %v787, %v788
      %s790 = scalar_lea.vmem %s1, 4
      %v791 = vld [vmem:[%s790] sm:$0x3]
      %v792 = vunpack.c.l.b16 %v737
      %v793 = vunpack.c.l.b16 %v740
      %v794 = vunpack.c.l.b16 %v744
      %v795 = vunpack.c.l.b16 %v747
      %v796 = vunpack.c.l.b16 %v751
      %v797 = vunpack.c.l.b16 %v754
      %v798 = vunpack.c.l.b16 %v758
      %v799 = vunpack.c.l.b16 %v761
      %v800 = vunpack.c.l.b16 %v765
      %v801 = vunpack.c.l.b16 %v768
      %v802 = vunpack.c.l.b16 %v772
      %v803 = vunpack.c.l.b16 %v775
      %v804 = vunpack.c.l.b16 %v779
      %v805 = vunpack.c.l.b16 %v782
      %v806 = vunpack.c.l.b16 %v786
      %v807 = vunpack.c.l.b16 %v789
      %v808 = vpack.c.b16 %v793, %v792
      %v809 = vpack.c.b16 %v795, %v794
      %v810 = vpack.c.b16 %v797, %v796
      %v811 = vpack.c.b16 %v799, %v798
      %v812 = vpack.c.b16 %v801, %v800
      %v813 = vpack.c.b16 %v803, %v802
      %v814 = vpack.c.b16 %v805, %v804
      %v815 = vpack.c.b16 %v807, %v806
      %v817 = vsel %vm529, %v808, 0
      %v820 = vsel %vm529, %v809, 0
      %v823 = vsel %vm529, %v810, 0
      %v826 = vsel %vm529, %v811, 0
      %v829 = vsel %vm529, %v812, 0
      %v832 = vsel %vm529, %v813, 0
      %v835 = vsel %vm529, %v814, 0
      %v838 = vsel %vm529, %v815, 0
      %v841 = vsel %vm554, %v791, 0
      %843 = vmatpush.bf16.msra.mxu0 0
      %844 = vmatpush.bf16.msra.mxu0 0
      %845 = vmatpush.bf16.msra.mxu0 0
      %846 = vmatpush.bf16.msra.mxu0 0
      %847 = vmatpush.bf16.msra.mxu0 0
      %848 = vmatpush.bf16.msra.mxu0 0
      %849 = vmatpush.bf16.msra.mxu0 0
      %850 = vmatpush.bf16.msra.mxu0 %v841
      %851 = vmatmul.bf16.gmra.mxu0 %v817
      %v852 = vpop.f32.mrf.mxu0
      %v853 = vadd.f32 0.0, %v852
      %v854 = vpop.f32.mrf.mxu0
      %v855 = vadd.f32 0.0, %v854
      %856 = vmatmul.bf16.gmra.mxu0 %v820
      %v857 = vpop.f32.mrf.mxu0
      %v858 = vadd.f32 0.0, %v857
      %v859 = vpop.f32.mrf.mxu0
      %v860 = vadd.f32 0.0, %v859
      %861 = vmatmul.bf16.gmra.mxu0 %v823
      %v862 = vpop.f32.mrf.mxu0
      %v863 = vadd.f32 0.0, %v862
      %v864 = vpop.f32.mrf.mxu0
      %v865 = vadd.f32 0.0, %v864
      %866 = vmatmul.bf16.gmra.mxu0 %v826
      %v867 = vpop.f32.mrf.mxu0
      %v868 = vadd.f32 0.0, %v867
      %v869 = vpop.f32.mrf.mxu0
      %v870 = vadd.f32 0.0, %v869
      %871 = vmatmul.bf16.gmra.mxu0 %v829
      %v872 = vpop.f32.mrf.mxu0
      %v873 = vadd.f32 0.0, %v872
      %v874 = vpop.f32.mrf.mxu0
      %v875 = vadd.f32 0.0, %v874
      %876 = vmatmul.bf16.gmra.mxu0 %v832
      %v877 = vpop.f32.mrf.mxu0
      %v878 = vadd.f32 0.0, %v877
      %v879 = vpop.f32.mrf.mxu0
      %v880 = vadd.f32 0.0, %v879
      %881 = vmatmul.bf16.gmra.mxu0 %v835
      %v882 = vpop.f32.mrf.mxu0
      %v883 = vadd.f32 0.0, %v882
      %v884 = vpop.f32.mrf.mxu0
      %v885 = vadd.f32 0.0, %v884
      %886 = vmatmul.bf16.gmra.mxu0 %v838
      %v887 = vpop.f32.mrf.mxu0
      %v888 = vadd.f32 0.0, %v887
      %v889 = vpop.f32.mrf.mxu0
      %v890 = vadd.f32 0.0, %v889
      %891 = vdwg.mxu0
      %v892 = vadd.f32 %v684, %v853
      %v893 = vadd.f32 %v686, %v855
      %v894 = vadd.f32 %v689, %v858
      %v895 = vadd.f32 %v691, %v860
      %v896 = vadd.f32 %v694, %v863
      %v897 = vadd.f32 %v696, %v865
      %v898 = vadd.f32 %v699, %v868
      %v899 = vadd.f32 %v701, %v870
      %v900 = vadd.f32 %v704, %v873
      %v901 = vadd.f32 %v706, %v875
      %v902 = vadd.f32 %v709, %v878
      %v903 = vadd.f32 %v711, %v880
      %v904 = vadd.f32 %v714, %v883
      %v905 = vadd.f32 %v716, %v885
      %v906 = vadd.f32 %v719, %v888
      %v907 = vadd.f32 %v721, %v890
      %s908 = scalar_lea.vmem %s1, 6
      %v909 = vld [vmem:[%s908] sm:$0x3]
      %v912 = vunpack.c.l.b16 %v301
      %v913 = vunpack.c.l.b16 %v302
      %v914 = vpack.c.b16 %v913, %v912
      %v916 = vsel %vm529, %v914, 0
      %v919 = vsel %vm554, %v909, 0
      %921 = vmatpush.bf16.msra.mxu0 0
      %922 = vmatpush.bf16.msra.mxu0 0
      %923 = vmatpush.bf16.msra.mxu0 0
      %924 = vmatpush.bf16.msra.mxu0 0
      %925 = vmatpush.bf16.msra.mxu0 0
      %926 = vmatpush.bf16.msra.mxu0 0
      %927 = vmatpush.bf16.msra.mxu0 0
      %928 = vmatpush.bf16.msra.mxu0 %v919
      %929 = vmatmul.bf16.gmra.mxu0 %v651
      %v930 = vpop.f32.mrf.mxu0
      %v931 = vadd.f32 0.0, %v930
      %v932 = vpop.f32.mrf.mxu0
      %v933 = vadd.f32 0.0, %v932
      %934 = vmatmul.bf16.gmra.mxu0 %v654
      %v935 = vpop.f32.mrf.mxu0
      %v936 = vadd.f32 0.0, %v935
      %v937 = vpop.f32.mrf.mxu0
      %v938 = vadd.f32 0.0, %v937
      %939 = vmatmul.bf16.gmra.mxu0 %v657
      %v940 = vpop.f32.mrf.mxu0
      %v941 = vadd.f32 0.0, %v940
      %v942 = vpop.f32.mrf.mxu0
      %v943 = vadd.f32 0.0, %v942
      %944 = vmatmul.bf16.gmra.mxu0 %v660
      %v945 = vpop.f32.mrf.mxu0
      %v946 = vadd.f32 0.0, %v945
      %v947 = vpop.f32.mrf.mxu0
      %v948 = vadd.f32 0.0, %v947
      %949 = vmatmul.bf16.gmra.mxu0 %v663
      %v950 = vpop.f32.mrf.mxu0
      %v951 = vadd.f32 0.0, %v950
      %v952 = vpop.f32.mrf.mxu0
      %v953 = vadd.f32 0.0, %v952
      %954 = vmatmul.bf16.gmra.mxu0 %v666
      %v955 = vpop.f32.mrf.mxu0
      %v956 = vadd.f32 0.0, %v955
      %v957 = vpop.f32.mrf.mxu0
      %v958 = vadd.f32 0.0, %v957
      %959 = vmatmul.bf16.gmra.mxu0 %v669
      %v960 = vpop.f32.mrf.mxu0
      %v961 = vadd.f32 0.0, %v960
      %v962 = vpop.f32.mrf.mxu0
      %v963 = vadd.f32 0.0, %v962
      %964 = vmatmul.bf16.gmra.mxu0 %v916
      %v965 = vpop.f32.mrf.mxu0
      %v966 = vadd.f32 0.0, %v965
      %v967 = vpop.f32.mrf.mxu0
      %v968 = vadd.f32 0.0, %v967
      %969 = vdwg.mxu0
      %v970 = vadd.f32 %v892, %v931
      %v971 = vadd.f32 %v893, %v933
      %v972 = vadd.f32 %v894, %v936
      %v973 = vadd.f32 %v895, %v938
      %v974 = vadd.f32 %v896, %v941
      %v975 = vadd.f32 %v897, %v943
      %v976 = vadd.f32 %v898, %v946
      %v977 = vadd.f32 %v899, %v948
      %v978 = vadd.f32 %v900, %v951
      %v979 = vadd.f32 %v901, %v953
      %v980 = vadd.f32 %v902, %v956
      %v981 = vadd.f32 %v903, %v958
      %v982 = vadd.f32 %v904, %v961
      %v983 = vadd.f32 %v905, %v963
      %v984 = vadd.f32 %v906, %v966
      %v985 = vadd.f32 %v907, %v968
      %v987 = vshrl.u32 %v301, 16
      %v989 = vrot.slane %v987, 4
      %v990 = vshll.u32 %v301, 16
      %v992 = vrot.slane %v990, 5
      %v993 = vor.u32 %v989, %v992
      %v994 = vrot.slane %v993, 4
      %v996 = vshll.u32 %v302, 16
      %v998 = vrot.slane %v996, 5
      %v999 = vsel %vm310, %v994, %v998
      %v1000 = vshrl.u32 %v302, 16
      %v1002 = vrot.slane %v1000, 4
      %v1003 = vor.u32 %v1002, %v998
      %v1004 = vrot.slane %v1003, 4
      %v1006 = vshll.u32 %v303, 16
      %v1008 = vrot.slane %v1006, 5
      %v1009 = vsel %vm310, %v1004, %v1008
      %s1010 = scalar_lea.vmem %s1, 8
      %v1011 = vld [vmem:[%s1010] sm:$0x3]
      %v1012 = vunpack.c.l.b16 %v999
      %v1013 = vunpack.c.l.b16 %v1009
      %v1014 = vpack.c.b16 %v1013, %v1012
      %v1016 = vsel %vm529, %v1014, 0
      %v1019 = vsel %vm554, %v1011, 0
      %1021 = vmatpush.bf16.msra.mxu0 0
      %1022 = vmatpush.bf16.msra.mxu0 0
      %1023 = vmatpush.bf16.msra.mxu0 0
      %1024 = vmatpush.bf16.msra.mxu0 0
      %1025 = vmatpush.bf16.msra.mxu0 0
      %1026 = vmatpush.bf16.msra.mxu0 0
      %1027 = vmatpush.bf16.msra.mxu0 0
      %1028 = vmatpush.bf16.msra.mxu0 %v1019
      %1029 = vmatmul.bf16.gmra.mxu0 %v534
      %v1030 = vpop.f32.mrf.mxu0
      %v1031 = vadd.f32 0.0, %v1030
      %v1032 = vpop.f32.mrf.mxu0
      %v1033 = vadd.f32 0.0, %v1032
      %1034 = vmatmul.bf16.gmra.mxu0 %v537
      %v1035 = vpop.f32.mrf.mxu0
      %v1036 = vadd.f32 0.0, %v1035
      %v1037 = vpop.f32.mrf.mxu0
      %v1038 = vadd.f32 0.0, %v1037
      %1039 = vmatmul.bf16.gmra.mxu0 %v540
      %v1040 = vpop.f32.mrf.mxu0
      %v1041 = vadd.f32 0.0, %v1040
      %v1042 = vpop.f32.mrf.mxu0
      %v1043 = vadd.f32 0.0, %v1042
      %1044 = vmatmul.bf16.gmra.mxu0 %v543
      %v1045 = vpop.f32.mrf.mxu0
      %v1046 = vadd.f32 0.0, %v1045
      %v1047 = vpop.f32.mrf.mxu0
      %v1048 = vadd.f32 0.0, %v1047
      %1049 = vmatmul.bf16.gmra.mxu0 %v546
      %v1050 = vpop.f32.mrf.mxu0
      %v1051 = vadd.f32 0.0, %v1050
      %v1052 = vpop.f32.mrf.mxu0
      %v1053 = vadd.f32 0.0, %v1052
      %1054 = vmatmul.bf16.gmra.mxu0 %v549
      %v1055 = vpop.f32.mrf.mxu0
      %v1056 = vadd.f32 0.0, %v1055
      %v1057 = vpop.f32.mrf.mxu0
      %v1058 = vadd.f32 0.0, %v1057
      %1059 = vmatmul.bf16.gmra.mxu0 %v552
      %v1060 = vpop.f32.mrf.mxu0
      %v1061 = vadd.f32 0.0, %v1060
      %v1062 = vpop.f32.mrf.mxu0
      %v1063 = vadd.f32 0.0, %v1062
      %1064 = vmatmul.bf16.gmra.mxu0 %v1016
      %v1065 = vpop.f32.mrf.mxu0
      %v1066 = vadd.f32 0.0, %v1065
      %v1067 = vpop.f32.mrf.mxu0
      %v1068 = vadd.f32 0.0, %v1067
      %1069 = vdwg.mxu0
      %v1070 = vadd.f32 %v970, %v1031
      %v1071 = vadd.f32 %v971, %v1033
      %v1072 = vadd.f32 %v972, %v1036
      %v1073 = vadd.f32 %v973, %v1038
      %v1074 = vadd.f32 %v974, %v1041
      %v1075 = vadd.f32 %v975, %v1043
      %v1076 = vadd.f32 %v976, %v1046
      %v1077 = vadd.f32 %v977, %v1048
      %v1078 = vadd.f32 %v978, %v1051
      %v1079 = vadd.f32 %v979, %v1053
      %v1080 = vadd.f32 %v980, %v1056
      %v1081 = vadd.f32 %v981, %v1058
      %v1082 = vadd.f32 %v982, %v1061
      %v1083 = vadd.f32 %v983, %v1063
      %v1084 = vadd.f32 %v984, %v1066
      %v1085 = vadd.f32 %v985, %v1068
      %v1087 = vrot.slane %v301, 5
      %v1088 = vrot.slane %v1087, 4
      %v1089 = vrot.slane %v302, 5
      %v1090 = vsel %vm733, %v1088, %v1089
      %v1091 = vrot.slane %v1089, 4
      %v1092 = vrot.slane %v303, 5
      %v1093 = vsel %vm733, %v1091, %v1092
      %s1094 = scalar_lea.vmem %s1, 10
      %v1095 = vld [vmem:[%s1094] sm:$0x3]
      %v1096 = vunpack.c.l.b16 %v1090
      %v1097 = vunpack.c.l.b16 %v1093
      %v1098 = vpack.c.b16 %v1097, %v1096
      %v1100 = vsel %vm529, %v1098, 0
      %v1103 = vsel %vm554, %v1095, 0
      %1105 = vmatpush.bf16.msra.mxu0 0
      %1106 = vmatpush.bf16.msra.mxu0 0
      %1107 = vmatpush.bf16.msra.mxu0 0
      %1108 = vmatpush.bf16.msra.mxu0 0
      %1109 = vmatpush.bf16.msra.mxu0 0
      %1110 = vmatpush.bf16.msra.mxu0 0
      %1111 = vmatpush.bf16.msra.mxu0 0
      %1112 = vmatpush.bf16.msra.mxu0 %v1103
      %1113 = vmatmul.bf16.gmra.mxu0 %v820
      %v1114 = vpop.f32.mrf.mxu0
      %v1115 = vadd.f32 0.0, %v1114
      %v1116 = vpop.f32.mrf.mxu0
      %v1117 = vadd.f32 0.0, %v1116
      %1118 = vmatmul.bf16.gmra.mxu0 %v823
      %v1119 = vpop.f32.mrf.mxu0
      %v1120 = vadd.f32 0.0, %v1119
      %v1121 = vpop.f32.mrf.mxu0
      %v1122 = vadd.f32 0.0, %v1121
      %1123 = vmatmul.bf16.gmra.mxu0 %v826
      %v1124 = vpop.f32.mrf.mxu0
      %v1125 = vadd.f32 0.0, %v1124
      %v1126 = vpop.f32.mrf.mxu0
      %v1127 = vadd.f32 0.0, %v1126
      %1128 = vmatmul.bf16.gmra.mxu0 %v829
      %v1129 = vpop.f32.mrf.mxu0
      %v1130 = vadd.f32 0.0, %v1129
      %v1131 = vpop.f32.mrf.mxu0
      %v1132 = vadd.f32 0.0, %v1131
      %1133 = vmatmul.bf16.gmra.mxu0 %v832
      %v1134 = vpop.f32.mrf.mxu0
      %v1135 = vadd.f32 0.0, %v1134
      %v1136 = vpop.f32.mrf.mxu0
      %v1137 = vadd.f32 0.0, %v1136
      %1138 = vmatmul.bf16.gmra.mxu0 %v835
      %v1139 = vpop.f32.mrf.mxu0
      %v1140 = vadd.f32 0.0, %v1139
      %v1141 = vpop.f32.mrf.mxu0
      %v1142 = vadd.f32 0.0, %v1141
      %1143 = vmatmul.bf16.gmra.mxu0 %v838
      %v1144 = vpop.f32.mrf.mxu0
      %v1145 = vadd.f32 0.0, %v1144
      %v1146 = vpop.f32.mrf.mxu0
      %v1147 = vadd.f32 0.0, %v1146
      %1148 = vmatmul.bf16.gmra.mxu0 %v1100
      %v1149 = vpop.f32.mrf.mxu0
      %v1150 = vadd.f32 0.0, %v1149
      %v1151 = vpop.f32.mrf.mxu0
      %v1152 = vadd.f32 0.0, %v1151
      %1153 = vdwg.mxu0
      %v1154 = vadd.f32 %v1070, %v1115
      %v1155 = vadd.f32 %v1071, %v1117
      %v1156 = vadd.f32 %v1072, %v1120
      %v1157 = vadd.f32 %v1073, %v1122
      %v1158 = vadd.f32 %v1074, %v1125
      %v1159 = vadd.f32 %v1075, %v1127
      %v1160 = vadd.f32 %v1076, %v1130
      %v1161 = vadd.f32 %v1077, %v1132
      %v1162 = vadd.f32 %v1078, %v1135
      %v1163 = vadd.f32 %v1079, %v1137
      %v1164 = vadd.f32 %v1080, %v1140
      %v1165 = vadd.f32 %v1081, %v1142
      %v1166 = vadd.f32 %v1082, %v1145
      %v1167 = vadd.f32 %v1083, %v1147
      %v1168 = vadd.f32 %v1084, %v1150
      %v1169 = vadd.f32 %v1085, %v1152
      %s1170 = scalar_lea.vmem %s1, 12
      %v1171 = vld [vmem:[%s1170] sm:$0x3]
      %v1174 = vunpack.c.l.b16 %v304
      %v1175 = vunpack.c.l.b16 %v305
      %v1176 = vpack.c.b16 %v1175, %v1174
      %v1178 = vsel %vm529, %v1176, 0
      %v1181 = vsel %vm554, %v1171, 0
      %1183 = vmatpush.bf16.msra.mxu0 0
      %1184 = vmatpush.bf16.msra.mxu0 0
      %1185 = vmatpush.bf16.msra.mxu0 0
      %1186 = vmatpush.bf16.msra.mxu0 0
      %1187 = vmatpush.bf16.msra.mxu0 0
      %1188 = vmatpush.bf16.msra.mxu0 0
      %1189 = vmatpush.bf16.msra.mxu0 0
      %1190 = vmatpush.bf16.msra.mxu0 %v1181
      %1191 = vmatmul.bf16.gmra.mxu0 %v654
      %v1192 = vpop.f32.mrf.mxu0
      %v1193 = vadd.f32 0.0, %v1192
      %v1194 = vpop.f32.mrf.mxu0
      %v1195 = vadd.f32 0.0, %v1194
      %1196 = vmatmul.bf16.gmra.mxu0 %v657
      %v1197 = vpop.f32.mrf.mxu0
      %v1198 = vadd.f32 0.0, %v1197
      %v1199 = vpop.f32.mrf.mxu0
      %v1200 = vadd.f32 0.0, %v1199
      %1201 = vmatmul.bf16.gmra.mxu0 %v660
      %v1202 = vpop.f32.mrf.mxu0
      %v1203 = vadd.f32 0.0, %v1202
      %v1204 = vpop.f32.mrf.mxu0
      %v1205 = vadd.f32 0.0, %v1204
      %1206 = vmatmul.bf16.gmra.mxu0 %v663
      %v1207 = vpop.f32.mrf.mxu0
      %v1208 = vadd.f32 0.0, %v1207
      %v1209 = vpop.f32.mrf.mxu0
      %v1210 = vadd.f32 0.0, %v1209
      %1211 = vmatmul.bf16.gmra.mxu0 %v666
      %v1212 = vpop.f32.mrf.mxu0
      %v1213 = vadd.f32 0.0, %v1212
      %v1214 = vpop.f32.mrf.mxu0
      %v1215 = vadd.f32 0.0, %v1214
      %1216 = vmatmul.bf16.gmra.mxu0 %v669
      %v1217 = vpop.f32.mrf.mxu0
      %v1218 = vadd.f32 0.0, %v1217
      %v1219 = vpop.f32.mrf.mxu0
      %v1220 = vadd.f32 0.0, %v1219
      %1221 = vmatmul.bf16.gmra.mxu0 %v916
      %v1222 = vpop.f32.mrf.mxu0
      %v1223 = vadd.f32 0.0, %v1222
      %v1224 = vpop.f32.mrf.mxu0
      %v1225 = vadd.f32 0.0, %v1224
      %1226 = vmatmul.bf16.gmra.mxu0 %v1178
      %v1227 = vpop.f32.mrf.mxu0
      %v1228 = vadd.f32 0.0, %v1227
      %v1229 = vpop.f32.mrf.mxu0
      %v1230 = vadd.f32 0.0, %v1229
      %1231 = vdwg.mxu0
      %v1232 = vadd.f32 %v1154, %v1193
      %v1233 = vadd.f32 %v1155, %v1195
      %v1234 = vadd.f32 %v1156, %v1198
      %v1235 = vadd.f32 %v1157, %v1200
      %v1236 = vadd.f32 %v1158, %v1203
      %v1237 = vadd.f32 %v1159, %v1205
      %v1238 = vadd.f32 %v1160, %v1208
      %v1239 = vadd.f32 %v1161, %v1210
      %v1240 = vadd.f32 %v1162, %v1213
      %v1241 = vadd.f32 %v1163, %v1215
      %v1242 = vadd.f32 %v1164, %v1218
      %v1243 = vadd.f32 %v1165, %v1220
      %v1244 = vadd.f32 %v1166, %v1223
      %v1245 = vadd.f32 %v1167, %v1225
      %v1246 = vadd.f32 %v1168, %v1228
      %v1247 = vadd.f32 %v1169, %v1230
      %v1249 = vshrl.u32 %v304, 16
      %v1251 = vrot.slane %v1249, 4
      %v1252 = vshll.u32 %v304, 16
      %v1254 = vrot.slane %v1252, 5
      %v1255 = vor.u32 %v1251, %v1254
      %v1256 = vrot.slane %v1255, 4
      %v1258 = vshll.u32 %v305, 16
      %v1260 = vrot.slane %v1258, 5
      %v1261 = vsel %vm310, %v1256, %v1260
      %v1262 = vshrl.u32 %v305, 16
      %v1264 = vrot.slane %v1262, 4
      %v1265 = vor.u32 %v1264, %v1260
      %v1266 = vrot.slane %v1265, 4
      %v1268 = vshll.u32 %v306, 16
      %v1270 = vrot.slane %v1268, 5
      %v1271 = vsel %vm310, %v1266, %v1270
      %s1272 = scalar_lea.vmem %s1, 14
      %v1273 = vld [vmem:[%s1272] sm:$0x3]
      %v1274 = vunpack.c.l.b16 %v1261
      %v1275 = vunpack.c.l.b16 %v1271
      %v1276 = vpack.c.b16 %v1275, %v1274
      %v1278 = vsel %vm529, %v1276, 0
      %v1281 = vsel %vm554, %v1273, 0
      %1283 = vmatpush.bf16.msra.mxu0 0
      %1284 = vmatpush.bf16.msra.mxu0 0
      %1285 = vmatpush.bf16.msra.mxu0 0
      %1286 = vmatpush.bf16.msra.mxu0 0
      %1287 = vmatpush.bf16.msra.mxu0 0
      %1288 = vmatpush.bf16.msra.mxu0 0
      %1289 = vmatpush.bf16.msra.mxu0 0
      %1290 = vmatpush.bf16.msra.mxu0 %v1281
      %1291 = vmatmul.bf16.gmra.mxu0 %v537
      %v1292 = vpop.f32.mrf.mxu0
      %v1293 = vadd.f32 0.0, %v1292
      %v1294 = vpop.f32.mrf.mxu0
      %v1295 = vadd.f32 0.0, %v1294
      %1296 = vmatmul.bf16.gmra.mxu0 %v540
      %v1297 = vpop.f32.mrf.mxu0
      %v1298 = vadd.f32 0.0, %v1297
      %v1299 = vpop.f32.mrf.mxu0
      %v1300 = vadd.f32 0.0, %v1299
      %1301 = vmatmul.bf16.gmra.mxu0 %v543
      %v1302 = vpop.f32.mrf.mxu0
      %v1303 = vadd.f32 0.0, %v1302
      %v1304 = vpop.f32.mrf.mxu0
      %v1305 = vadd.f32 0.0, %v1304
      %1306 = vmatmul.bf16.gmra.mxu0 %v546
      %v1307 = vpop.f32.mrf.mxu0
      %v1308 = vadd.f32 0.0, %v1307
      %v1309 = vpop.f32.mrf.mxu0
      %v1310 = vadd.f32 0.0, %v1309
      %1311 = vmatmul.bf16.gmra.mxu0 %v549
      %v1312 = vpop.f32.mrf.mxu0
      %v1313 = vadd.f32 0.0, %v1312
      %v1314 = vpop.f32.mrf.mxu0
      %v1315 = vadd.f32 0.0, %v1314
      %1316 = vmatmul.bf16.gmra.mxu0 %v552
      %v1317 = vpop.f32.mrf.mxu0
      %v1318 = vadd.f32 0.0, %v1317
      %v1319 = vpop.f32.mrf.mxu0
      %v1320 = vadd.f32 0.0, %v1319
      %1321 = vmatmul.bf16.gmra.mxu0 %v1016
      %v1322 = vpop.f32.mrf.mxu0
      %v1323 = vadd.f32 0.0, %v1322
      %v1324 = vpop.f32.mrf.mxu0
      %v1325 = vadd.f32 0.0, %v1324
      %1326 = vmatmul.bf16.gmra.mxu0 %v1278
      %v1327 = vpop.f32.mrf.mxu0
      %v1328 = vadd.f32 0.0, %v1327
      %v1329 = vpop.f32.mrf.mxu0
      %v1330 = vadd.f32 0.0, %v1329
      %1331 = vdwg.mxu0
      %v1332 = vadd.f32 %v1232, %v1293
      %v1333 = vadd.f32 %v1233, %v1295
      %v1334 = vadd.f32 %v1234, %v1298
      %v1335 = vadd.f32 %v1235, %v1300
      %v1336 = vadd.f32 %v1236, %v1303
      %v1337 = vadd.f32 %v1237, %v1305
      %v1338 = vadd.f32 %v1238, %v1308
      %v1339 = vadd.f32 %v1239, %v1310
      %v1340 = vadd.f32 %v1240, %v1313
      %v1341 = vadd.f32 %v1241, %v1315
      %v1342 = vadd.f32 %v1242, %v1318
      %v1343 = vadd.f32 %v1243, %v1320
      %v1344 = vadd.f32 %v1244, %v1323
      %v1345 = vadd.f32 %v1245, %v1325
      %v1346 = vadd.f32 %v1246, %v1328
      %v1347 = vadd.f32 %v1247, %v1330
      %v1349 = vrot.slane %v304, 5
      %v1350 = vrot.slane %v1349, 4
      %v1351 = vrot.slane %v305, 5
      %v1352 = vsel %vm733, %v1350, %v1351
      %v1353 = vrot.slane %v1351, 4
      %v1354 = vrot.slane %v306, 5
      %v1355 = vsel %vm733, %v1353, %v1354
      %s1356 = scalar_lea.vmem %s1, 16
      %v1357 = vld [vmem:[%s1356] sm:$0x3]
      %v1358 = vunpack.c.l.b16 %v1352
      %v1359 = vunpack.c.l.b16 %v1355
      %v1360 = vpack.c.b16 %v1359, %v1358
      %v1362 = vsel %vm529, %v1360, 0
      %v1365 = vsel %vm554, %v1357, 0
      %1367 = vmatpush.bf16.msra.mxu0 0
      %1368 = vmatpush.bf16.msra.mxu0 0
      %1369 = vmatpush.bf16.msra.mxu0 0
      %1370 = vmatpush.bf16.msra.mxu0 0
      %1371 = vmatpush.bf16.msra.mxu0 0
      %1372 = vmatpush.bf16.msra.mxu0 0
      %1373 = vmatpush.bf16.msra.mxu0 0
      %1374 = vmatpush.bf16.msra.mxu0 %v1365
      %1375 = vmatmul.bf16.gmra.mxu0 %v823
      %v1376 = vpop.f32.mrf.mxu0
      %v1377 = vadd.f32 0.0, %v1376
      %v1378 = vpop.f32.mrf.mxu0
      %v1379 = vadd.f32 0.0, %v1378
      %1380 = vmatmul.bf16.gmra.mxu0 %v826
      %v1381 = vpop.f32.mrf.mxu0
      %v1382 = vadd.f32 0.0, %v1381
      %v1383 = vpop.f32.mrf.mxu0
      %v1384 = vadd.f32 0.0, %v1383
      %1385 = vmatmul.bf16.gmra.mxu0 %v829
      %v1386 = vpop.f32.mrf.mxu0
      %v1387 = vadd.f32 0.0, %v1386
      %v1388 = vpop.f32.mrf.mxu0
      %v1389 = vadd.f32 0.0, %v1388
      %1390 = vmatmul.bf16.gmra.mxu0 %v832
      %v1391 = vpop.f32.mrf.mxu0
      %v1392 = vadd.f32 0.0, %v1391
      %v1393 = vpop.f32.mrf.mxu0
      %v1394 = vadd.f32 0.0, %v1393
      %1395 = vmatmul.bf16.gmra.mxu0 %v835
      %v1396 = vpop.f32.mrf.mxu0
      %v1397 = vadd.f32 0.0, %v1396
      %v1398 = vpop.f32.mrf.mxu0
      %v1399 = vadd.f32 0.0, %v1398
      %1400 = vmatmul.bf16.gmra.mxu0 %v838
      %v1401 = vpop.f32.mrf.mxu0
      %v1402 = vadd.f32 0.0, %v1401
      %v1403 = vpop.f32.mrf.mxu0
      %v1404 = vadd.f32 0.0, %v1403
      %1405 = vmatmul.bf16.gmra.mxu0 %v1100
      %v1406 = vpop.f32.mrf.mxu0
      %v1407 = vadd.f32 0.0, %v1406
      %v1408 = vpop.f32.mrf.mxu0
      %v1409 = vadd.f32 0.0, %v1408
      %1410 = vmatmul.bf16.gmra.mxu0 %v1362
      %v1411 = vpop.f32.mrf.mxu0
      %v1412 = vadd.f32 0.0, %v1411
      %v1413 = vpop.f32.mrf.mxu0
      %v1414 = vadd.f32 0.0, %v1413
      %1415 = vdwg.mxu0
      %v1416 = vadd.f32 %v1332, %v1377
      %v1417 = vadd.f32 %v1333, %v1379
      %v1418 = vadd.f32 %v1334, %v1382
      %v1419 = vadd.f32 %v1335, %v1384
      %v1420 = vadd.f32 %v1336, %v1387
      %v1421 = vadd.f32 %v1337, %v1389
      %v1422 = vadd.f32 %v1338, %v1392
      %v1423 = vadd.f32 %v1339, %v1394
      %v1424 = vadd.f32 %v1340, %v1397
      %v1425 = vadd.f32 %v1341, %v1399
      %v1426 = vadd.f32 %v1342, %v1402
      %v1427 = vadd.f32 %v1343, %v1404
      %v1428 = vadd.f32 %v1344, %v1407
      %v1429 = vadd.f32 %v1345, %v1409
      %v1430 = vadd.f32 %v1346, %v1412
      %v1431 = vadd.f32 %v1347, %v1414
      %v1432 = vld [vmem:[%s2] sm:$0x1]
      %v1434 = vperm.slane %v1432, 0
      %v1436 = vadd.f32 %v1416, %v1434
      %v1437 = vadd.f32 %v1417, %v1434
      %v1438 = vadd.f32 %v1418, %v1434
      %v1439 = vadd.f32 %v1419, %v1434
      %v1440 = vadd.f32 %v1420, %v1434
      %v1441 = vadd.f32 %v1421, %v1434
      %v1442 = vadd.f32 %v1422, %v1434
      %v1443 = vadd.f32 %v1423, %v1434
      %v1444 = vadd.f32 %v1424, %v1434
      %v1445 = vadd.f32 %v1425, %v1434
      %v1446 = vadd.f32 %v1426, %v1434
      %v1447 = vadd.f32 %v1427, %v1434
      %v1448 = vadd.f32 %v1428, %v1434
      %v1449 = vadd.f32 %v1429, %v1434
      %v1450 = vadd.f32 %v1430, %v1434
      %v1451 = vadd.f32 %v1431, %v1434
      %v1452 = vpack.c.bf16 %v1436, %v1436
      %v1453 = vpack.c.bf16 %v1437, %v1437
      %v1454 = vpack.c.bf16 %v1438, %v1438
      %v1455 = vpack.c.bf16 %v1439, %v1439
      %v1456 = vpack.c.bf16 %v1440, %v1440
      %v1457 = vpack.c.bf16 %v1441, %v1441
      %v1458 = vpack.c.bf16 %v1442, %v1442
      %v1459 = vpack.c.bf16 %v1443, %v1443
      %v1460 = vpack.c.bf16 %v1444, %v1444
      %v1461 = vpack.c.bf16 %v1445, %v1445
      %v1462 = vpack.c.bf16 %v1446, %v1446
      %v1463 = vpack.c.bf16 %v1447, %v1447
      %v1464 = vpack.c.bf16 %v1448, %v1448
      %v1465 = vpack.c.bf16 %v1449, %v1449
      %v1466 = vpack.c.bf16 %v1450, %v1450
      %v1467 = vpack.c.bf16 %v1451, %v1451
      %vm1468 = vcmask 519168
      %1469 = vst.msk [vmem:[%s257] sm:$0xf] %vm1468, %v1452
      %1470 = vst.msk [vmem:[%s257 + $0x4] sm:$0xf] %vm1468, %v1453
      %1471 = vst.msk [vmem:[%s257 + $0x8] sm:$0xf] %vm1468, %v1454
      %1472 = vst.msk [vmem:[%s257 + $0xc] sm:$0xf] %vm1468, %v1455
      %1473 = vst.msk [vmem:[%s257 + $0x10] sm:$0xf] %vm1468, %v1456
      %1474 = vst.msk [vmem:[%s257 + $0x14] sm:$0xf] %vm1468, %v1457
      %1475 = vst.msk [vmem:[%s257 + $0x18] sm:$0xf] %vm1468, %v1458
      %1476 = vst.msk [vmem:[%s257 + $0x1c] sm:$0xf] %vm1468, %v1459
      %1477 = vst.msk [vmem:[%s257 + $0x20] sm:$0xf] %vm1468, %v1460
      %1478 = vst.msk [vmem:[%s257 + $0x24] sm:$0xf] %vm1468, %v1461
      %1479 = vst.msk [vmem:[%s257 + $0x28] sm:$0xf] %vm1468, %v1462
      %1480 = vst.msk [vmem:[%s257 + $0x2c] sm:$0xf] %vm1468, %v1463
      %1481 = vst.msk [vmem:[%s257 + $0x30] sm:$0xf] %vm1468, %v1464
      %1482 = vst.msk [vmem:[%s257 + $0x34] sm:$0xf] %vm1468, %v1465
      %1483 = vst.msk [vmem:[%s257 + $0x38] sm:$0xf] %vm1468, %v1466
      %1484 = vst.msk [vmem:[%s257 + $0x3c] sm:$0xf] %vm1468, %v1467
      %v1485 = vld [vmem:[%s261] sm:$0x1]
      %vm1486 = vcmask 523264
      %v1487 = vsel %vm1486, %v1436, 0.0
      %v1488 = vsel %vm1486, %v1437, 0.0
      %v1489 = vadd.f32 %v1487, %v1488
      %v1490 = vsel %vm1486, %v1438, 0.0
      %v1491 = vadd.f32 %v1489, %v1490
      %v1492 = vsel %vm1486, %v1439, 0.0
      %v1493 = vadd.f32 %v1491, %v1492
      %v1494 = vsel %vm1486, %v1440, 0.0
      %v1495 = vadd.f32 %v1493, %v1494
      %v1496 = vsel %vm1486, %v1441, 0.0
      %v1497 = vadd.f32 %v1495, %v1496
      %v1498 = vsel %vm1486, %v1442, 0.0
      %v1499 = vadd.f32 %v1497, %v1498
      %v1500 = vsel %vm1486, %v1443, 0.0
      %v1501 = vadd.f32 %v1499, %v1500
      %v1502 = vsel %vm1486, %v1444, 0.0
      %v1503 = vadd.f32 %v1501, %v1502
      %v1504 = vsel %vm1486, %v1445, 0.0
      %v1505 = vadd.f32 %v1503, %v1504
      %v1506 = vsel %vm1486, %v1446, 0.0
      %v1507 = vadd.f32 %v1505, %v1506
      %v1508 = vsel %vm1486, %v1447, 0.0
      %v1509 = vadd.f32 %v1507, %v1508
      %v1510 = vsel %vm1486, %v1448, 0.0
      %v1511 = vadd.f32 %v1509, %v1510
      %v1512 = vsel %vm1486, %v1449, 0.0
      %v1513 = vadd.f32 %v1511, %v1512
      %v1514 = vsel %vm1486, %v1450, 0.0
      %v1515 = vadd.f32 %v1513, %v1514
      %v1516 = vsel %vm1486, %v1451, 0.0
      %v1517 = vadd.f32 %v1515, %v1516
      %v1518 = vrot.slane %v1517, 4
      %v1519 = vadd.f32 %v1517, %v1518
      %v1520 = vrot.slane %v1519, 2
      %v1521 = vadd.f32 %v1519, %v1520
      %v1522 = vrot.slane %v1521, 1
      %v1523 = vadd.f32 %v1521, %v1522
      %v1524 = vadd.f32 %v1485, %v1523
      %vm1525 = vcmask 516096
      %1526 = vst.msk [vmem:[%s261] sm:$0x1] %vm1525, %v1524
      %v1527 = vld [vmem:[%s264] sm:$0x1]
      %v1528 = vmul.f32 %v1436, %v1436
      %v1529 = vmul.f32 %v1437, %v1437
      %v1530 = vmul.f32 %v1438, %v1438
      %v1531 = vmul.f32 %v1439, %v1439
      %v1532 = vmul.f32 %v1440, %v1440
      %v1533 = vmul.f32 %v1441, %v1441
      %v1534 = vmul.f32 %v1442, %v1442
      %v1535 = vmul.f32 %v1443, %v1443
      %v1536 = vmul.f32 %v1444, %v1444
      %v1537 = vmul.f32 %v1445, %v1445
      %v1538 = vmul.f32 %v1446, %v1446
      %v1539 = vmul.f32 %v1447, %v1447
      %v1540 = vmul.f32 %v1448, %v1448
      %v1541 = vmul.f32 %v1449, %v1449
      %v1542 = vmul.f32 %v1450, %v1450
      %v1543 = vmul.f32 %v1451, %v1451
      %v1544 = vsel %vm1486, %v1528, 0.0
      %v1545 = vsel %vm1486, %v1529, 0.0
      %v1546 = vadd.f32 %v1544, %v1545
      %v1547 = vsel %vm1486, %v1530, 0.0
      %v1548 = vadd.f32 %v1546, %v1547
      %v1549 = vsel %vm1486, %v1531, 0.0
      %v1550 = vadd.f32 %v1548, %v1549
      %v1551 = vsel %vm1486, %v1532, 0.0
      %v1552 = vadd.f32 %v1550, %v1551
      %v1553 = vsel %vm1486, %v1533, 0.0
      %v1554 = vadd.f32 %v1552, %v1553
      %v1555 = vsel %vm1486, %v1534, 0.0
      %v1556 = vadd.f32 %v1554, %v1555
      %v1557 = vsel %vm1486, %v1535, 0.0
      %v1558 = vadd.f32 %v1556, %v1557
      %v1559 = vsel %vm1486, %v1536, 0.0
      %v1560 = vadd.f32 %v1558, %v1559
      %v1561 = vsel %vm1486, %v1537, 0.0
      %v1562 = vadd.f32 %v1560, %v1561
      %v1563 = vsel %vm1486, %v1538, 0.0
      %v1564 = vadd.f32 %v1562, %v1563
      %v1565 = vsel %vm1486, %v1539, 0.0
      %v1566 = vadd.f32 %v1564, %v1565
      %v1567 = vsel %vm1486, %v1540, 0.0
      %v1568 = vadd.f32 %v1566, %v1567
      %v1569 = vsel %vm1486, %v1541, 0.0
      %v1570 = vadd.f32 %v1568, %v1569
      %v1571 = vsel %vm1486, %v1542, 0.0
      %v1572 = vadd.f32 %v1570, %v1571
      %v1573 = vsel %vm1486, %v1543, 0.0
      %v1574 = vadd.f32 %v1572, %v1573
      %v1575 = vrot.slane %v1574, 4
      %v1576 = vadd.f32 %v1574, %v1575
      %v1577 = vrot.slane %v1576, 2
      %v1578 = vadd.f32 %v1576, %v1577
      %v1579 = vrot.slane %v1578, 1
      %v1580 = vadd.f32 %v1578, %v1579
      %v1581 = vadd.f32 %v1527, %v1580
      %1582 = vst.msk [vmem:[%s264] sm:$0x1] %vm1525, %v1581
      %s1583 = smul.u32 16, %s22
      %p1584 = scmp.lt.s32.totalorder %s21, 1
      %s1585 = scalar_select %p1584, %s21, 1
      %p1586 = scmp.lt.s32.totalorder %s1583, 31
      %s1587 = scalar_select %p1586, %s1583, 31
      %s1588 = smul.addr %s1585, 32
      %s1589 = sadd.s32 %s1587, %s1588
      %s1590 = smul.addr %s1589, 4
      %s1591 = scalar_lea.vmem %s3, %s1590
      %p1592 = scmp.lt.s32.totalorder %s21, 1
      %s1593 = scalar_select %p1592, %s21, 1
      %s1594 = scalar_lea.vmem %s4, %s1593
      %p1595 = scmp.lt.s32.totalorder %s21, 1
      %s1596 = scalar_select %p1595, %s21, 1
      %s1597 = scalar_lea.vmem %s5, %s1596
      // Predicated region
      $region37: #{inconv_forward.4} parent=31 // pred_check
        %p1598 = pneg %p117
      $region38: #{inconv_forward.4} parent=31 // pred_check_branch
        %1600 = sbr.rel (%p1598) target = $region40
      $region39: #{inconv_forward.4} parent=31 // pred_region
        %s1601 = smul.u32 16, %s22
      $region40: #{inconv_forward.4} parent=31 // pred_fallthru
        _
      // Predicated region
      $region41: #{inconv_forward.4} parent=31 // pred_check
        %p1602 = pneg %p143
      $region42: #{inconv_forward.4} parent=31 // pred_check_branch
        %1604 = sbr.rel (%p1602) target = $region44
      $region43: #{inconv_forward.4} parent=31 // pred_region
        _
      $region44: #{inconv_forward.4} parent=31 // pred_fallthru
        _
      // Predicated region
      $region45: #{inconv_forward.4} parent=31 // pred_check
        %p1605 = pneg %p169
      $region46: #{inconv_forward.4} parent=31 // pred_check_branch
        %1607 = sbr.rel (%p1605) target = $region48
      $region47: #{inconv_forward.4} parent=31 // pred_region
        _
      $region48: #{inconv_forward.4} parent=31 // pred_fallthru
        _
    $region32: #{inconv_forward.4} parent=5 // pred_fallthru
      _
    %p1608 = scmp.le.s32.totalorder 2, %s12
    // Predicated region
    $region49: #{inconv_forward.4} parent=5 // pred_check
      %p1609 = pneg %p1608
    $region50: #{inconv_forward.4} parent=5 // pred_check_branch
      %1611 = sbr.rel (%p1609) target = $region52
    $region51: #{inconv_forward.4} parent=5 // pred_region
      %s1612 = ssub.s32 %s12, 2
      // Predicated region
      $region53: #{inconv_forward.4} parent=51 // pred_check
        %p1613 = pneg %p123
      $region54: #{inconv_forward.4} parent=51 // pred_check_branch
        %1615 = sbr.rel (%p1613) target = $region56
      $region55: #{inconv_forward.4} parent=51 // pred_region
        %s1616 = smul.u32 16, %s24
        %p1617 = scmp.lt.s32.totalorder %s23, 1
        %s1618 = scalar_select %p1617, %s23, 1
        %p1619 = scmp.lt.s32.totalorder %s1616, 31
        %s1620 = scalar_select %p1619, %s1616, 31
        %s1621 = smul.addr %s1618, 32
        %s1622 = sadd.s32 %s1620, %s1621
        %s1623 = smul.addr %s1622, 4
        %s1624 = scalar_lea.vmem %s3, %s1623
      $region56: #{inconv_forward.4} parent=51 // pred_fallthru
        _
      // Predicated region
      $region57: #{inconv_forward.4} parent=51 // pred_check
        %p1625 = pneg %p149
      $region58: #{inconv_forward.4} parent=51 // pred_check_branch
        %1627 = sbr.rel (%p1625) target = $region60
      $region59: #{inconv_forward.4} parent=51 // pred_region
        %p1628 = scmp.lt.s32.totalorder %s23, 1
        %s1629 = scalar_select %p1628, %s23, 1
        %s1630 = scalar_lea.vmem %s4, %s1629
      $region60: #{inconv_forward.4} parent=51 // pred_fallthru
        _
      // Predicated region
      $region61: #{inconv_forward.4} parent=51 // pred_check
        %p1631 = pneg %p175
      $region62: #{inconv_forward.4} parent=51 // pred_check_branch
        %1633 = sbr.rel (%p1631) target = $region64
      $region63: #{inconv_forward.4} parent=51 // pred_region
        %p1634 = scmp.lt.s32.totalorder %s23, 1
        %s1635 = scalar_select %p1634, %s23, 1
        %s1636 = scalar_lea.vmem %s5, %s1635
      $region64: #{inconv_forward.4} parent=51 // pred_fallthru
        _
    $region52: #{inconv_forward.4} parent=5 // pred_fallthru
      _
  $region6: #{inconv_forward.4} parent=0 // loop_footer
    %s16 = sadd.s32 1, %s12
  $region7: #{inconv_forward.4} parent=0 // loop_footer_branch
    %11 = sbr.rel target = $region3
  $region8: #{inconv_forward.4} parent=0 // loop_exit
    _

// kernel: inconv_forward.6
$region0: #{inconv_forward.6}
  #allocation0 [shape = 'u32[]', space=smem, size = 0x4, offset = 0x4, fixed_abs, tag = 'smem constant byte address 0x4 - core index']
  #allocation1 [shape = 'u32[72,128]{1,0:T(1,128)}', space=vmem, size = 0x9000, scoped, tag = 'internal scratch']
  %s0 = inlined_call_operand.vmem [shape: bf16[2,18,18,64], index: 0, kind: input, shape index: {}]
  %s1 = inlined_call_operand.vmem [shape: bf16[9,64,64], index: 1, kind: input, shape index: {}]
  %s2 = inlined_call_operand.vmem [shape: f32[1,64], index: 2, kind: input, shape index: {}]
  %s3 = inlined_call_operand.vmem [shape: bf16[2,256,64], index: 3, kind: output, shape index: {0}]
  %s4 = inlined_call_operand.vmem [shape: f32[2,1,64], index: 4, kind: output, shape index: {1}]
  %s5 = inlined_call_operand.vmem [shape: f32[2,1,64], index: 5, kind: output, shape index: {2}]
  %6 = xla_tuple %s3, %s4, %s5
  %s7 = sld [smem:[#allocation0]]
  $region65: #{inconv_forward.6} parent=0
    _
  %s9 = ssub.s32 1, %s7
  %s10 = scalar_select 0, %s9, %s7
  loop: start=0, step=1, limit=6
  $region2: #{inconv_forward.6} parent=0 // loop_pre_header
    _
  $region3: #{inconv_forward.6} parent=0 // loop_header
    %s12 = sphi 0, %s16
    %p13 = scmp.ge.s32.totalorder %s12, 6
    %s19 = sphi 0, %s31
    %s20 = sphi 0, %s27
    %s21 = sphi 0, %s19
    %s22 = sphi 0, %s20
    %s23 = sphi 0, %s21
    %s24 = sphi 0, %s22
    %s34 = sphi 0, %s36
    %s37 = sphi 0, %s34
    %s38 = sphi 0, %s37
    %s54 = sphi 0, %s38
    %s58 = sphi 0, %s58
    %s60 = sphi 0, %s58
    %s61 = sphi 0, %s60
    %s75 = sphi 0, %s61
    %s79 = sphi 0, %s79
    %s81 = sphi 0, %s79
    %s82 = sphi 0, %s81
    %s96 = sphi 0, %s82
    %s104 = sphi 0, %s106
    %s107 = sphi 0, %s104
    %s108 = sphi 0, %s107
    %s124 = sphi 0, %s108
    %s130 = sphi 0, %s132
    %s133 = sphi 0, %s130
    %s134 = sphi 0, %s133
    %s150 = sphi 0, %s134
    %s156 = sphi 0, %s158
    %s159 = sphi 0, %s156
    %s160 = sphi 0, %s159
    %s176 = sphi 0, %s160
  $region4: #{inconv_forward.6} parent=0 // loop_header_branch
    %15 = sbr.rel (%p13) target = $region8
  $region5: #{inconv_forward.6} parent=0 // loop_body
    %s17 = ssub.s32 %s12, 1
    %s18 = ssub.s32 %s12, 2
    %s25 = sadd.s32 1, %s20
    %p26 = scmp.ge.s32.totalorder %s25, 2
    %s27 = scalar_select %p26, 0, %s25
    %s28 = sadd.s32 1, %s19
    %s29 = scalar_select %p26, %s28, %s19
    %p30 = scmp.ge.s32.totalorder %s29, 2
    %s31 = scalar_select %p30, 0, %s29
    %s32 = ssub.s32 %s19, %s31
    %p33 = scmp.eq.s32.totalorder %s32, 0
    %s35 = sadd.s32 %s34, 1
    %s36 = scalar_select %p33, %s34, %s35
    %p39 = pneg %p33
    %p40 = scmp.eq.s32.totalorder %s12, 3
    %p41 = por %p39, %p40
    %p42 = scmp.ne.s32.totalorder %s34, %s37
    %p43 = scmp.eq.s32.totalorder %s12, 0
    %p44 = por %p42, %p43
    %p45 = scmp.ne.s32.totalorder %s34, %s37
    %p46 = scmp.eq.s32.totalorder %s17, 3
    %p47 = por %p45, %p46
    %p48 = scmp.ne.s32.totalorder %s37, %s38
    %p49 = scmp.eq.s32.totalorder %s17, 0
    %p50 = por %p48, %p49
    %p51 = scmp.ne.s32.totalorder %s37, %s38
    %p52 = scmp.eq.s32.totalorder %s18, 3
    %p53 = por %p51, %p52
    %p55 = scmp.ne.s32.totalorder %s38, %s54
    %p56 = scmp.eq.s32.totalorder %s18, 0
    %p57 = por %p55, %p56
    %s59 = sadd.s32 %s58, 1
    %p62 = scmp.eq.s32.totalorder %s12, 3
    %p63 = scmp.ne.s32.totalorder %s58, %s60
    %p64 = scmp.eq.s32.totalorder %s12, 0
    %p65 = por %p63, %p64
    %p66 = scmp.ne.s32.totalorder %s58, %s60
    %p67 = scmp.eq.s32.totalorder %s17, 3
    %p68 = por %p66, %p67
    %p69 = scmp.ne.s32.totalorder %s60, %s61
    %p70 = scmp.eq.s32.totalorder %s17, 0
    %p71 = por %p69, %p70
    %p72 = scmp.ne.s32.totalorder %s60, %s61
    %p73 = scmp.eq.s32.totalorder %s18, 3
    %p74 = por %p72, %p73
    %p76 = scmp.ne.s32.totalorder %s61, %s75
    %p77 = scmp.eq.s32.totalorder %s18, 0
    %p78 = por %p76, %p77
    %s80 = sadd.s32 %s79, 1
    %p83 = scmp.eq.s32.totalorder %s12, 3
    %p84 = scmp.ne.s32.totalorder %s79, %s81
    %p85 = scmp.eq.s32.totalorder %s12, 0
    %p86 = por %p84, %p85
    %p87 = scmp.ne.s32.totalorder %s79, %s81
    %p88 = scmp.eq.s32.totalorder %s17, 3
    %p89 = por %p87, %p88
    %p90 = scmp.ne.s32.totalorder %s81, %s82
    %p91 = scmp.eq.s32.totalorder %s17, 0
    %p92 = por %p90, %p91
    %p93 = scmp.ne.s32.totalorder %s81, %s82
    %p94 = scmp.eq.s32.totalorder %s18, 3
    %p95 = por %p93, %p94
    %p97 = scmp.ne.s32.totalorder %s82, %s96
    %p98 = scmp.eq.s32.totalorder %s18, 0
    %p99 = por %p97, %p98
    %s100 = ssub.s32 %s19, %s31
    %s101 = ssub.s32 %s20, %s27
    %s102 = sor.u32 %s100, %s101
    %p103 = scmp.eq.s32.totalorder %s102, 0
    %s105 = sadd.s32 %s104, 1
    %s106 = scalar_select %p103, %s104, %s105
    %p109 = pneg %p103
    %p110 = scmp.eq.s32.totalorder %s12, 3
    %p111 = por %p109, %p110
    %p112 = scmp.ne.s32.totalorder %s104, %s107
    %p113 = scmp.eq.s32.totalorder %s12, 0
    %p114 = por %p112, %p113
    %p115 = scmp.ne.s32.totalorder %s104, %s107
    %p116 = scmp.eq.s32.totalorder %s17, 3
    %p117 = por %p115, %p116
    %p118 = scmp.ne.s32.totalorder %s107, %s108
    %p119 = scmp.eq.s32.totalorder %s17, 0
    %p120 = por %p118, %p119
    %p121 = scmp.ne.s32.totalorder %s107, %s108
    %p122 = scmp.eq.s32.totalorder %s18, 3
    %p123 = por %p121, %p122
    %p125 = scmp.ne.s32.totalorder %s108, %s124
    %p126 = scmp.eq.s32.totalorder %s18, 0
    %p127 = por %p125, %p126
    %s128 = ssub.s32 %s19, %s31
    %p129 = scmp.eq.s32.totalorder %s128, 0
    %s131 = sadd.s32 %s130, 1
    %s132 = scalar_select %p129, %s130, %s131
    %p135 = pneg %p129
    %p136 = scmp.eq.s32.totalorder %s12, 3
    %p137 = por %p135, %p136
    %p138 = scmp.ne.s32.totalorder %s130, %s133
    %p139 = scmp.eq.s32.totalorder %s12, 0
    %p140 = por %p138, %p139
    %p141 = scmp.ne.s32.totalorder %s130, %s133
    %p142 = scmp.eq.s32.totalorder %s17, 3
    %p143 = por %p141, %p142
    %p144 = scmp.ne.s32.totalorder %s133, %s134
    %p145 = scmp.eq.s32.totalorder %s17, 0
    %p146 = por %p144, %p145
    %p147 = scmp.ne.s32.totalorder %s133, %s134
    %p148 = scmp.eq.s32.totalorder %s18, 3
    %p149 = por %p147, %p148
    %p151 = scmp.ne.s32.totalorder %s134, %s150
    %p152 = scmp.eq.s32.totalorder %s18, 0
    %p153 = por %p151, %p152
    %s154 = ssub.s32 %s19, %s31
    %p155 = scmp.eq.s32.totalorder %s154, 0
    %s157 = sadd.s32 %s156, 1
    %s158 = scalar_select %p155, %s156, %s157
    %p161 = pneg %p155
    %p162 = scmp.eq.s32.totalorder %s12, 3
    %p163 = por %p161, %p162
    %p164 = scmp.ne.s32.totalorder %s156, %s159
    %p165 = scmp.eq.s32.totalorder %s12, 0
    %p166 = por %p164, %p165
    %p167 = scmp.ne.s32.totalorder %s156, %s159
    %p168 = scmp.eq.s32.totalorder %s17, 3
    %p169 = por %p167, %p168
    %p170 = scmp.ne.s32.totalorder %s159, %s160
    %p171 = scmp.eq.s32.totalorder %s17, 0
    %p172 = por %p170, %p171
    %p173 = scmp.ne.s32.totalorder %s159, %s160
    %p174 = scmp.eq.s32.totalorder %s18, 3
    %p175 = por %p173, %p174
    %p177 = scmp.ne.s32.totalorder %s160, %s176
    %p178 = scmp.eq.s32.totalorder %s18, 0
    %p179 = por %p177, %p178
    %p180 = scmp.le.s32.totalorder 1, %s12
    %p181 = scmp.lt.s32.totalorder %s12, 5
    %p182 = pnand %p180, %p181
    %p183 = pneg %p182
    // Predicated region
    $region9: #{inconv_forward.6} parent=5 // pred_check
      _
    $region10: #{inconv_forward.6} parent=5 // pred_check_branch
      %185 = sbr.rel (%p182) target = $region12
    $region11: #{inconv_forward.6} parent=5 // pred_region
      %s186 = ssub.s32 %s12, 1
      // Predicated region
      $region13: #{inconv_forward.6} parent=11 // pred_check
        %p187 = pneg %p71
      $region14: #{inconv_forward.6} parent=11 // pred_check_branch
        %189 = sbr.rel (%p187) target = $region16
      $region15: #{inconv_forward.6} parent=11 // pred_region
        _
      $region16: #{inconv_forward.6} parent=11 // pred_fallthru
        _
      // Predicated region
      $region17: #{inconv_forward.6} parent=11 // pred_check
        %p190 = pneg %p92
      $region18: #{inconv_forward.6} parent=11 // pred_check_branch
        %192 = sbr.rel (%p190) target = $region20
      $region19: #{inconv_forward.6} parent=11 // pred_region
        _
      $region20: #{inconv_forward.6} parent=11 // pred_fallthru
        _
    $region12: #{inconv_forward.6} parent=5 // pred_fallthru
      _
    %p193 = scmp.lt.s32.totalorder %s12, 4
    // Predicated region
    $region21: #{inconv_forward.6} parent=5 // pred_check
      %p194 = pneg %p193
    $region22: #{inconv_forward.6} parent=5 // pred_check_branch
      %196 = sbr.rel (%p194) target = $region24
    $region23: #{inconv_forward.6} parent=5 // pred_region
      // Predicated region
      $region25: #{inconv_forward.6} parent=23 // pred_check
        %p197 = pneg %p44
      $region26: #{inconv_forward.6} parent=23 // pred_check_branch
        %199 = sbr.rel (%p197) target = $region28
      $region27: #{inconv_forward.6} parent=23 // pred_region
        %p200 = scmp.lt.s32.totalorder %s19, 1
        %s201 = scalar_select %p200, %s19, 1
        %s202 = smul.addr %s201, 54
        %s203 = smul.addr %s202, 4
        %s204 = scalar_lea.vmem %s0, %s203
      $region28: #{inconv_forward.6} parent=23 // pred_fallthru
        _
    $region24: #{inconv_forward.6} parent=5 // pred_fallthru
      _
    %p205 = scmp.le.s32.totalorder 1, %s12
    %p206 = scmp.lt.s32.totalorder %s12, 5
    %p207 = pnand %p205, %p206
    %p208 = pneg %p207
    // Predicated region
    $region29: #{inconv_forward.6} parent=5 // pred_check
      _
    $region30: #{inconv_forward.6} parent=5 // pred_check_branch
      %210 = sbr.rel (%p207) target = $region32
    $region31: #{inconv_forward.6} parent=5 // pred_region
      %s211 = ssub.s32 %s12, 1
      %p212 = scmp.lt.s32.totalorder %s21, 1
      %s213 = scalar_select %p212, %s21, 1
      %s214 = smul.addr %s213, 54
      %s215 = smul.addr %s214, 4
      %s216 = scalar_lea.vmem %s0, %s215
      %p217 = pneg %p50
      %p218 = pneg %p47
      %p219 = pneg %p71
      %p220 = pneg %p68
      %p221 = pneg %p92
      %p222 = pneg %p89
      %p223 = pneg %p120
      %p224 = pneg %p117
      %s225 = smul.u32 16, %s22
      %p226 = scmp.lt.s32.totalorder %s21, 1
      %s227 = scalar_select %p226, %s21, 1
      %p228 = scmp.lt.s32.totalorder %s225, 31
      %s229 = scalar_select %p228, %s225, 31
      %s230 = smul.addr %s227, 32
      %s231 = sadd.s32 %s229, %s230
      %s232 = smul.addr %s231, 4
      %s233 = scalar_lea.vmem %s3, %s232
      %p234 = pneg %p146
      %p235 = pneg %p143
      %p236 = scmp.lt.s32.totalorder %s21, 1
      %s237 = scalar_select %p236, %s21, 1
      %s238 = scalar_lea.vmem %s4, %s237
      %p239 = pneg %p172
      %p240 = pneg %p169
      %p241 = scmp.lt.s32.totalorder %s21, 1
      %s242 = scalar_select %p241, %s21, 1
      %s243 = scalar_lea.vmem %s5, %s242
      %p244 = scmp.lt.s32.totalorder %s21, 1
      %s245 = scalar_select %p244, %s21, 1
      %s246 = smul.addr %s245, 54
      %s247 = smul.addr %s246, 4
      %s248 = scalar_lea.vmem %s0, %s247
      %s249 = smul.u32 16, %s22
      %p250 = scmp.lt.s32.totalorder %s21, 1
      %s251 = scalar_select %p250, %s21, 1
      %p252 = scmp.lt.s32.totalorder %s249, 31
      %s253 = scalar_select %p252, %s249, 31
      %s254 = smul.addr %s251, 32
      %s255 = sadd.s32 %s253, %s254
      %s256 = smul.addr %s255, 4
      %s257 = scalar_lea.vmem %s3, %s256
      %s258 = smul.u32 16, %s22
      %p259 = scmp.lt.s32.totalorder %s21, 1
      %s260 = scalar_select %p259, %s21, 1
      %s261 = scalar_lea.vmem %s4, %s260
      %p262 = scmp.lt.s32.totalorder %s21, 1
      %s263 = scalar_select %p262, %s21, 1
      %s264 = scalar_lea.vmem %s5, %s263
      %p266 = scmp.eq.s32.totalorder %s22, 0
      // Predicated region
      $region33: #{inconv_forward.6} parent=31 // pred_check
        %p267 = pneg %p266
      $region34: #{inconv_forward.6} parent=31 // pred_check_branch
        %269 = sbr.rel (%p267) target = $region36
      $region35: #{inconv_forward.6} parent=31 // pred_region
        %vm270 = vcmask 516096
        %271 = vst.msk [vmem:[%s261] sm:$0x1] %vm270, 0.0
        %272 = vst.msk [vmem:[%s264] sm:$0x1] %vm270, 0.0
      $region36: #{inconv_forward.6} parent=31 // pred_fallthru
        _
      %s273 = smul.u32 %s22, 8
      %s274 = smul.u32 %s273, 3
      %s275 = smul.addr %s274, 4
      %s276 = scalar_lea.vmem %s248, %s275
      %v277 = vld [vmem:[%s276] sm:$0xf]
      %v278 = vld [vmem:[%s276 + $0x4] sm:$0xf]
      %v279 = vld [vmem:[%s276 + $0x8] sm:$0x1]
      %v280 = vld [vmem:[%s276 + $0xc] sm:$0xf]
      %v281 = vld [vmem:[%s276 + $0x10] sm:$0xf]
      %v282 = vld [vmem:[%s276 + $0x14] sm:$0x1]
      %v283 = vld [vmem:[%s276 + $0x18] sm:$0xf]
      %v284 = vld [vmem:[%s276 + $0x1c] sm:$0xf]
      %v285 = vld [vmem:[%s276 + $0x20] sm:$0x1]
      %v286 = vld [vmem:[%s276 + $0x24] sm:$0xf]
      %v287 = vld [vmem:[%s276 + $0x28] sm:$0xf]
      %v288 = vld [vmem:[%s276 + $0x2c] sm:$0x1]
      %v289 = vld [vmem:[%s276 + $0x30] sm:$0xf]
      %v290 = vld [vmem:[%s276 + $0x34] sm:$0xf]
      %v291 = vld [vmem:[%s276 + $0x38] sm:$0x1]
      %v292 = vld [vmem:[%s276 + $0x3c] sm:$0xf]
      %v293 = vld [vmem:[%s276 + $0x40] sm:$0xf]
      %v294 = vld [vmem:[%s276 + $0x44] sm:$0x1]
      %v295 = vld [vmem:[%s276 + $0x48] sm:$0xf]
      %v296 = vld [vmem:[%s276 + $0x4c] sm:$0xf]
      %v297 = vld [vmem:[%s276 + $0x50] sm:$0x1]
      %v298 = vld [vmem:[%s276 + $0x54] sm:$0xf]
      %v299 = vld [vmem:[%s276 + $0x58] sm:$0xf]
      %v300 = vld [vmem:[%s276 + $0x5c] sm:$0x1]
      %v301 = vld [vmem:[%s276 + $0x60] sm:$0xf]
      %v302 = vld [vmem:[%s276 + $0x64] sm:$0xf]
      %v303 = vld [vmem:[%s276 + $0x68] sm:$0x1]
      %v304 = vld [vmem:[%s276 + $0x6c] sm:$0xf]
      %v305 = vld [vmem:[%s276 + $0x70] sm:$0xf]
      %v306 = vld [vmem:[%s276 + $0x74] sm:$0x1]
      %v307 = vld [vmem:[%s1] sm:$0xf]
      %v308 = vld [vmem:[%s1 + $0x4] sm:$0xf]
      %v309 = vld [vmem:[%s1 + $0x8] sm:$0xf]
      %v310 = vld [vmem:[%s1 + $0xc] sm:$0xf]
      %v311 = vld [vmem:[%s1 + $0x10] sm:$0xf]
      %v312 = vld [vmem:[%s1 + $0x14] sm:$0xf]
      %v313 = vld [vmem:[%s1 + $0x18] sm:$0xf]
      %v314 = vld [vmem:[%s1 + $0x1c] sm:$0xf]
      %vm315 = vsmask.f32 3328
      %vm316 = vsmask.f32 7440
      %vm317 = vmor %vm315, %vm316
      %v319 = vshrl.u32 %v277, 16
      %v321 = vrot.slane %v319, 4
      %v322 = vshll.u32 %v277, 16
      %v324 = vrot.slane %v322, 5
      %v325 = vor.u32 %v321, %v324
      %v326 = vrot.slane %v325, 4
      %v328 = vshll.u32 %v278, 16
      %v330 = vrot.slane %v328, 5
      %v331 = vsel %vm317, %v326, %v330
      %v332 = vshrl.u32 %v278, 16
      %v334 = vrot.slane %v332, 4
      %v335 = vor.u32 %v334, %v330
      %v336 = vrot.slane %v335, 4
      %v338 = vshll.u32 %v279, 16
      %v340 = vrot.slane %v338, 5
      %v341 = vsel %vm317, %v336, %v340
      %v343 = vshrl.u32 %v280, 16
      %v345 = vrot.slane %v343, 4
      %v346 = vshll.u32 %v280, 16
      %v348 = vrot.slane %v346, 5
      %v349 = vor.u32 %v345, %v348
      %v350 = vrot.slane %v349, 4
      %v352 = vshll.u32 %v281, 16
      %v354 = vrot.slane %v352, 5
      %v355 = vsel %vm317, %v350, %v354
      %v356 = vshrl.u32 %v281, 16
      %v358 = vrot.slane %v356, 4
      %v359 = vor.u32 %v358, %v354
      %v360 = vrot.slane %v359, 4
      %v362 = vshll.u32 %v282, 16
      %v364 = vrot.slane %v362, 5
      %v365 = vsel %vm317, %v360, %v364
      %v367 = vshrl.u32 %v283, 16
      %v369 = vrot.slane %v367, 4
      %v370 = vshll.u32 %v283, 16
      %v372 = vrot.slane %v370, 5
      %v373 = vor.u32 %v369, %v372
      %v374 = vrot.slane %v373, 4
      %v376 = vshll.u32 %v284, 16
      %v378 = vrot.slane %v376, 5
      %v379 = vsel %vm317, %v374, %v378
      %v380 = vshrl.u32 %v284, 16
      %v382 = vrot.slane %v380, 4
      %v383 = vor.u32 %v382, %v378
      %v384 = vrot.slane %v383, 4
      %v386 = vshll.u32 %v285, 16
      %v388 = vrot.slane %v386, 5
      %v389 = vsel %vm317, %v384, %v388
      %v391 = vshrl.u32 %v286, 16
      %v393 = vrot.slane %v391, 4
      %v394 = vshll.u32 %v286, 16
      %v396 = vrot.slane %v394, 5
      %v397 = vor.u32 %v393, %v396
      %v398 = vrot.slane %v397, 4
      %v400 = vshll.u32 %v287, 16
      %v402 = vrot.slane %v400, 5
      %v403 = vsel %vm317, %v398, %v402
      %v404 = vshrl.u32 %v287, 16
      %v406 = vrot.slane %v404, 4
      %v407 = vor.u32 %v406, %v402
      %v408 = vrot.slane %v407, 4
      %v410 = vshll.u32 %v288, 16
      %v412 = vrot.slane %v410, 5
      %v413 = vsel %vm317, %v408, %v412
      %v415 = vshrl.u32 %v289, 16
      %v417 = vrot.slane %v415, 4
      %v418 = vshll.u32 %v289, 16
      %v420 = vrot.slane %v418, 5
      %v421 = vor.u32 %v417, %v420
      %v422 = vrot.slane %v421, 4
      %v424 = vshll.u32 %v290, 16
      %v426 = vrot.slane %v424, 5
      %v427 = vsel %vm317, %v422, %v426
      %v428 = vshrl.u32 %v290, 16
      %v430 = vrot.slane %v428, 4
      %v431 = vor.u32 %v430, %v426
      %v432 = vrot.slane %v431, 4
      %v434 = vshll.u32 %v291, 16
      %v436 = vrot.slane %v434, 5
      %v437 = vsel %vm317, %v432, %v436
      %v439 = vshrl.u32 %v292, 16
      %v441 = vrot.slane %v439, 4
      %v442 = vshll.u32 %v292, 16
      %v444 = vrot.slane %v442, 5
      %v445 = vor.u32 %v441, %v444
      %v446 = vrot.slane %v445, 4
      %v448 = vshll.u32 %v293, 16
      %v450 = vrot.slane %v448, 5
      %v451 = vsel %vm317, %v446, %v450
      %v452 = vshrl.u32 %v293, 16
      %v454 = vrot.slane %v452, 4
      %v455 = vor.u32 %v454, %v450
      %v456 = vrot.slane %v455, 4
      %v458 = vshll.u32 %v294, 16
      %v460 = vrot.slane %v458, 5
      %v461 = vsel %vm317, %v456, %v460
      %v463 = vshrl.u32 %v295, 16
      %v465 = vrot.slane %v463, 4
      %v466 = vshll.u32 %v295, 16
      %v468 = vrot.slane %v466, 5
      %v469 = vor.u32 %v465, %v468
      %v470 = vrot.slane %v469, 4
      %v472 = vshll.u32 %v296, 16
      %v474 = vrot.slane %v472, 5
      %v475 = vsel %vm317, %v470, %v474
      %v476 = vshrl.u32 %v296, 16
      %v478 = vrot.slane %v476, 4
      %v479 = vor.u32 %v478, %v474
      %v480 = vrot.slane %v479, 4
      %v482 = vshll.u32 %v297, 16
      %v484 = vrot.slane %v482, 5
      %v485 = vsel %vm317, %v480, %v484
      %v487 = vshrl.u32 %v298, 16
      %v489 = vrot.slane %v487, 4
      %v490 = vshll.u32 %v298, 16
      %v492 = vrot.slane %v490, 5
      %v493 = vor.u32 %v489, %v492
      %v494 = vrot.slane %v493, 4
      %v496 = vshll.u32 %v299, 16
      %v498 = vrot.slane %v496, 5
      %v499 = vsel %vm317, %v494, %v498
      %v500 = vshrl.u32 %v299, 16
      %v502 = vrot.slane %v500, 4
      %v503 = vor.u32 %v502, %v498
      %v504 = vrot.slane %v503, 4
      %v506 = vshll.u32 %v300, 16
      %v508 = vrot.slane %v506, 5
      %v509 = vsel %vm317, %v504, %v508
      %s510 = scalar_lea.vmem %s1, 32
      %v511 = vld [vmem:[%s510] sm:$0xf]
      %v512 = vld [vmem:[%s510 + $0x4] sm:$0xf]
      %v513 = vld [vmem:[%s510 + $0x8] sm:$0xf]
      %v514 = vld [vmem:[%s510 + $0xc] sm:$0xf]
      %v515 = vld [vmem:[%s510 + $0x10] sm:$0xf]
      %v516 = vld [vmem:[%s510 + $0x14] sm:$0xf]
      %v517 = vld [vmem:[%s510 + $0x18] sm:$0xf]
      %v518 = vld [vmem:[%s510 + $0x1c] sm:$0xf]
      %v519 = vunpack.c.l.b16 %v331
      %v520 = vunpack.c.l.b16 %v341
      %v521 = vunpack.c.l.b16 %v355
      %v522 = vunpack.c.l.b16 %v365
      %v523 = vunpack.c.l.b16 %v379
      %v524 = vunpack.c.l.b16 %v389
      %v525 = vunpack.c.l.b16 %v403
      %v526 = vunpack.c.l.b16 %v413
      %v527 = vunpack.c.l.b16 %v427
      %v528 = vunpack.c.l.b16 %v437
      %v529 = vunpack.c.l.b16 %v451
      %v530 = vunpack.c.l.b16 %v461
      %v531 = vunpack.c.l.b16 %v475
      %v532 = vunpack.c.l.b16 %v485
      %v533 = vunpack.c.l.b16 %v499
      %v534 = vunpack.c.l.b16 %v509
      %v535 = vpack.c.b16 %v520, %v519
      %v536 = vpack.c.b16 %v522, %v521
      %v537 = vpack.c.b16 %v524, %v523
      %v538 = vpack.c.b16 %v526, %v525
      %v539 = vpack.c.b16 %v528, %v527
      %v540 = vpack.c.b16 %v530, %v529
      %v541 = vpack.c.b16 %v532, %v531
      %v542 = vpack.c.b16 %v534, %v533
      %v551 = vunpack.c.l.b16 %v511
      %v552 = vunpack.c.l.b16 %v512
      %v553 = vunpack.c.l.b16 %v513
      %v554 = vunpack.c.l.b16 %v514
      %v555 = vunpack.c.l.b16 %v515
      %v556 = vunpack.c.l.b16 %v516
      %v557 = vunpack.c.l.b16 %v517
      %v558 = vunpack.c.l.b16 %v518
      %v559 = vpack.c.b16 %v552, %v551
      %v560 = vpack.c.b16 %v554, %v553
      %v561 = vpack.c.b16 %v556, %v555
      %v562 = vpack.c.b16 %v558, %v557
      %vm567 = vcmask 523264
      %v569 = vsel %vm567, %v535, 0
      %v572 = vsel %vm567, %v536, 0
      %v575 = vsel %vm567, %v537, 0
      %v578 = vsel %vm567, %v538, 0
      %v581 = vsel %vm567, %v539, 0
      %v584 = vsel %vm567, %v540, 0
      %v587 = vsel %vm567, %v541, 0
      %v590 = vsel %vm567, %v542, 0
      %592 = vmatpush.bf16.msra.mxu0 0
      %593 = vmatpush.bf16.msra.mxu0 0
      %594 = vmatpush.bf16.msra.mxu0 0
      %595 = vmatpush.bf16.msra.mxu0 0
      %596 = vmatpush.bf16.msra.mxu0 %v562
      %597 = vmatpush.bf16.msra.mxu0 %v561
      %598 = vmatpush.bf16.msra.mxu0 %v560
      %599 = vmatpush.bf16.msra.mxu0 %v559
      %600 = vmatmul.bf16.gmra.mxu0 %v569
      %v601 = vpop.f32.mrf.mxu0
      %v602 = vadd.f32 0.0, %v601
      %v603 = vpop.f32.mrf.mxu0
      %v604 = vadd.f32 0.0, %v603
      %605 = vmatmul.bf16.gmra.mxu0 %v572
      %v606 = vpop.f32.mrf.mxu0
      %v607 = vadd.f32 0.0, %v606
      %v608 = vpop.f32.mrf.mxu0
      %v609 = vadd.f32 0.0, %v608
      %610 = vmatmul.bf16.gmra.mxu0 %v575
      %v611 = vpop.f32.mrf.mxu0
      %v612 = vadd.f32 0.0, %v611
      %v613 = vpop.f32.mrf.mxu0
      %v614 = vadd.f32 0.0, %v613
      %615 = vmatmul.bf16.gmra.mxu0 %v578
      %v616 = vpop.f32.mrf.mxu0
      %v617 = vadd.f32 0.0, %v616
      %v618 = vpop.f32.mrf.mxu0
      %v619 = vadd.f32 0.0, %v618
      %620 = vmatmul.bf16.gmra.mxu0 %v581
      %v621 = vpop.f32.mrf.mxu0
      %v622 = vadd.f32 0.0, %v621
      %v623 = vpop.f32.mrf.mxu0
      %v624 = vadd.f32 0.0, %v623
      %625 = vmatmul.bf16.gmra.mxu0 %v584
      %v626 = vpop.f32.mrf.mxu0
      %v627 = vadd.f32 0.0, %v626
      %v628 = vpop.f32.mrf.mxu0
      %v629 = vadd.f32 0.0, %v628
      %630 = vmatmul.bf16.gmra.mxu0 %v587
      %v631 = vpop.f32.mrf.mxu0
      %v632 = vadd.f32 0.0, %v631
      %v633 = vpop.f32.mrf.mxu0
      %v634 = vadd.f32 0.0, %v633
      %635 = vmatmul.bf16.gmra.mxu0 %v590
      %v636 = vpop.f32.mrf.mxu0
      %v637 = vadd.f32 0.0, %v636
      %v638 = vpop.f32.mrf.mxu0
      %v639 = vadd.f32 0.0, %v638
      %640 = vdwg.mxu0
      %v657 = vunpack.c.l.b16 %v277
      %v658 = vunpack.c.l.b16 %v278
      %v659 = vunpack.c.l.b16 %v280
      %v660 = vunpack.c.l.b16 %v281
      %v661 = vunpack.c.l.b16 %v283
      %v662 = vunpack.c.l.b16 %v284
      %v663 = vunpack.c.l.b16 %v286
      %v664 = vunpack.c.l.b16 %v287
      %v665 = vunpack.c.l.b16 %v289
      %v666 = vunpack.c.l.b16 %v290
      %v667 = vunpack.c.l.b16 %v292
      %v668 = vunpack.c.l.b16 %v293
      %v669 = vunpack.c.l.b16 %v295
      %v670 = vunpack.c.l.b16 %v296
      %v671 = vunpack.c.l.b16 %v298
      %v672 = vunpack.c.l.b16 %v299
      %v673 = vpack.c.b16 %v658, %v657
      %v674 = vpack.c.b16 %v660, %v659
      %v675 = vpack.c.b16 %v662, %v661
      %v676 = vpack.c.b16 %v664, %v663
      %v677 = vpack.c.b16 %v666, %v665
      %v678 = vpack.c.b16 %v668, %v667
      %v679 = vpack.c.b16 %v670, %v669
      %v680 = vpack.c.b16 %v672, %v671
      %v689 = vunpack.c.l.b16 %v307
      %v690 = vunpack.c.l.b16 %v308
      %v691 = vunpack.c.l.b16 %v309
      %v692 = vunpack.c.l.b16 %v310
      %v693 = vunpack.c.l.b16 %v311
      %v694 = vunpack.c.l.b16 %v312
      %v695 = vunpack.c.l.b16 %v313
      %v696 = vunpack.c.l.b16 %v314
      %v697 = vpack.c.b16 %v690, %v689
      %v698 = vpack.c.b16 %v692, %v691
      %v699 = vpack.c.b16 %v694, %v693
      %v700 = vpack.c.b16 %v696, %v695
      %v706 = vsel %vm567, %v673, 0
      %v709 = vsel %vm567, %v674, 0
      %v712 = vsel %vm567, %v675, 0
      %v715 = vsel %vm567, %v676, 0
      %v718 = vsel %vm567, %v677, 0
      %v721 = vsel %vm567, %v678, 0
      %v724 = vsel %vm567, %v679, 0
      %v727 = vsel %vm567, %v680, 0
      %729 = vmatpush.bf16.msra.mxu0 0
      %730 = vmatpush.bf16.msra.mxu0 0
      %731 = vmatpush.bf16.msra.mxu0 0
      %732 = vmatpush.bf16.msra.mxu0 0
      %733 = vmatpush.bf16.msra.mxu0 %v700
      %734 = vmatpush.bf16.msra.mxu0 %v699
      %735 = vmatpush.bf16.msra.mxu0 %v698
      %736 = vmatpush.bf16.msra.mxu0 %v697
      %737 = vmatmul.bf16.gmra.mxu0 %v706
      %v738 = vpop.f32.mrf.mxu0
      %v739 = vadd.f32 %v602, %v738
      %v740 = vpop.f32.mrf.mxu0
      %v741 = vadd.f32 %v604, %v740
      %742 = vmatmul.bf16.gmra.mxu0 %v709
      %v743 = vpop.f32.mrf.mxu0
      %v744 = vadd.f32 %v607, %v743
      %v745 = vpop.f32.mrf.mxu0
      %v746 = vadd.f32 %v609, %v745
      %747 = vmatmul.bf16.gmra.mxu0 %v712
      %v748 = vpop.f32.mrf.mxu0
      %v749 = vadd.f32 %v612, %v748
      %v750 = vpop.f32.mrf.mxu0
      %v751 = vadd.f32 %v614, %v750
      %752 = vmatmul.bf16.gmra.mxu0 %v715
      %v753 = vpop.f32.mrf.mxu0
      %v754 = vadd.f32 %v617, %v753
      %v755 = vpop.f32.mrf.mxu0
      %v756 = vadd.f32 %v619, %v755
      %757 = vmatmul.bf16.gmra.mxu0 %v718
      %v758 = vpop.f32.mrf.mxu0
      %v759 = vadd.f32 %v622, %v758
      %v760 = vpop.f32.mrf.mxu0
      %v761 = vadd.f32 %v624, %v760
      %762 = vmatmul.bf16.gmra.mxu0 %v721
      %v763 = vpop.f32.mrf.mxu0
      %v764 = vadd.f32 %v627, %v763
      %v765 = vpop.f32.mrf.mxu0
      %v766 = vadd.f32 %v629, %v765
      %767 = vmatmul.bf16.gmra.mxu0 %v724
      %v768 = vpop.f32.mrf.mxu0
      %v769 = vadd.f32 %v632, %v768
      %v770 = vpop.f32.mrf.mxu0
      %v771 = vadd.f32 %v634, %v770
      %772 = vmatmul.bf16.gmra.mxu0 %v727
      %v773 = vpop.f32.mrf.mxu0
      %v774 = vadd.f32 %v637, %v773
      %v775 = vpop.f32.mrf.mxu0
      %v776 = vadd.f32 %v639, %v775
      %777 = vdwg.mxu0
      %vm786 = vcmask 1042432
      %vm787 = vcmask 1046532
      %vm788 = vmor %vm786, %vm787
      %v789 = vrot.slane %v277, 5
      %v790 = vrot.slane %v789, 4
      %v791 = vrot.slane %v278, 5
      %v792 = vsel %vm788, %v790, %v791
      %v793 = vrot.slane %v791, 4
      %v794 = vrot.slane %v279, 5
      %v795 = vsel %vm788, %v793, %v794
      %v796 = vrot.slane %v280, 5
      %v797 = vrot.slane %v796, 4
      %v798 = vrot.slane %v281, 5
      %v799 = vsel %vm788, %v797, %v798
      %v800 = vrot.slane %v798, 4
      %v801 = vrot.slane %v282, 5
      %v802 = vsel %vm788, %v800, %v801
      %v803 = vrot.slane %v283, 5
      %v804 = vrot.slane %v803, 4
      %v805 = vrot.slane %v284, 5
      %v806 = vsel %vm788, %v804, %v805
      %v807 = vrot.slane %v805, 4
      %v808 = vrot.slane %v285, 5
      %v809 = vsel %vm788, %v807, %v808
      %v810 = vrot.slane %v286, 5
      %v811 = vrot.slane %v810, 4
      %v812 = vrot.slane %v287, 5
      %v813 = vsel %vm788, %v811, %v812
      %v814 = vrot.slane %v812, 4
      %v815 = vrot.slane %v288, 5
      %v816 = vsel %vm788, %v814, %v815
      %v817 = vrot.slane %v289, 5
      %v818 = vrot.slane %v817, 4
      %v819 = vrot.slane %v290, 5
      %v820 = vsel %vm788, %v818, %v819
      %v821 = vrot.slane %v819, 4
      %v822 = vrot.slane %v291, 5
      %v823 = vsel %vm788, %v821, %v822
      %v824 = vrot.slane %v292, 5
      %v825 = vrot.slane %v824, 4
      %v826 = vrot.slane %v293, 5
      %v827 = vsel %vm788, %v825, %v826
      %v828 = vrot.slane %v826, 4
      %v829 = vrot.slane %v294, 5
      %v830 = vsel %vm788, %v828, %v829
      %v831 = vrot.slane %v295, 5
      %v832 = vrot.slane %v831, 4
      %v833 = vrot.slane %v296, 5
      %v834 = vsel %vm788, %v832, %v833
      %v835 = vrot.slane %v833, 4
      %v836 = vrot.slane %v297, 5
      %v837 = vsel %vm788, %v835, %v836
      %v838 = vrot.slane %v298, 5
      %v839 = vrot.slane %v838, 4
      %v840 = vrot.slane %v299, 5
      %v841 = vsel %vm788, %v839, %v840
      %v842 = vrot.slane %v840, 4
      %v843 = vrot.slane %v300, 5
      %v844 = vsel %vm788, %v842, %v843
      %s845 = scalar_lea.vmem %s1, 64
      %v846 = vld [vmem:[%s845] sm:$0xf]
      %v847 = vld [vmem:[%s845 + $0x4] sm:$0xf]
      %v848 = vld [vmem:[%s845 + $0x8] sm:$0xf]
      %v849 = vld [vmem:[%s845 + $0xc] sm:$0xf]
      %v850 = vld [vmem:[%s845 + $0x10] sm:$0xf]
      %v851 = vld [vmem:[%s845 + $0x14] sm:$0xf]
      %v852 = vld [vmem:[%s845 + $0x18] sm:$0xf]
      %v853 = vld [vmem:[%s845 + $0x1c] sm:$0xf]
      %v854 = vunpack.c.l.b16 %v792
      %v855 = vunpack.c.l.b16 %v795
      %v856 = vunpack.c.l.b16 %v799
      %v857 = vunpack.c.l.b16 %v802
      %v858 = vunpack.c.l.b16 %v806
      %v859 = vunpack.c.l.b16 %v809
      %v860 = vunpack.c.l.b16 %v813
      %v861 = vunpack.c.l.b16 %v816
      %v862 = vunpack.c.l.b16 %v820
      %v863 = vunpack.c.l.b16 %v823
      %v864 = vunpack.c.l.b16 %v827
      %v865 = vunpack.c.l.b16 %v830
      %v866 = vunpack.c.l.b16 %v834
      %v867 = vunpack.c.l.b16 %v837
      %v868 = vunpack.c.l.b16 %v841
      %v869 = vunpack.c.l.b16 %v844
      %v870 = vpack.c.b16 %v855, %v854
      %v871 = vpack.c.b16 %v857, %v856
      %v872 = vpack.c.b16 %v859, %v858
      %v873 = vpack.c.b16 %v861, %v860
      %v874 = vpack.c.b16 %v863, %v862
      %v875 = vpack.c.b16 %v865, %v864
      %v876 = vpack.c.b16 %v867, %v866
      %v877 = vpack.c.b16 %v869, %v868
      %v886 = vunpack.c.l.b16 %v846
      %v887 = vunpack.c.l.b16 %v847
      %v888 = vunpack.c.l.b16 %v848
      %v889 = vunpack.c.l.b16 %v849
      %v890 = vunpack.c.l.b16 %v850
      %v891 = vunpack.c.l.b16 %v851
      %v892 = vunpack.c.l.b16 %v852
      %v893 = vunpack.c.l.b16 %v853
      %v894 = vpack.c.b16 %v887, %v886
      %v895 = vpack.c.b16 %v889, %v888
      %v896 = vpack.c.b16 %v891, %v890
      %v897 = vpack.c.b16 %v893, %v892
      %v903 = vsel %vm567, %v870, 0
      %v906 = vsel %vm567, %v871, 0
      %v909 = vsel %vm567, %v872, 0
      %v912 = vsel %vm567, %v873, 0
      %v915 = vsel %vm567, %v874, 0
      %v918 = vsel %vm567, %v875, 0
      %v921 = vsel %vm567, %v876, 0
      %v924 = vsel %vm567, %v877, 0
      %926 = vmatpush.bf16.msra.mxu0 0
      %927 = vmatpush.bf16.msra.mxu0 0
      %928 = vmatpush.bf16.msra.mxu0 0
      %929 = vmatpush.bf16.msra.mxu0 0
      %930 = vmatpush.bf16.msra.mxu0 %v897
      %931 = vmatpush.bf16.msra.mxu0 %v896
      %932 = vmatpush.bf16.msra.mxu0 %v895
      %933 = vmatpush.bf16.msra.mxu0 %v894
      %934 = vmatmul.bf16.gmra.mxu0 %v903
      %v935 = vpop.f32.mrf.mxu0
      %v936 = vadd.f32 0.0, %v935
      %v937 = vpop.f32.mrf.mxu0
      %v938 = vadd.f32 0.0, %v937
      %939 = vmatmul.bf16.gmra.mxu0 %v906
      %v940 = vpop.f32.mrf.mxu0
      %v941 = vadd.f32 0.0, %v940
      %v942 = vpop.f32.mrf.mxu0
      %v943 = vadd.f32 0.0, %v942
      %944 = vmatmul.bf16.gmra.mxu0 %v909
      %v945 = vpop.f32.mrf.mxu0
      %v946 = vadd.f32 0.0, %v945
      %v947 = vpop.f32.mrf.mxu0
      %v948 = vadd.f32 0.0, %v947
      %949 = vmatmul.bf16.gmra.mxu0 %v912
      %v950 = vpop.f32.mrf.mxu0
      %v951 = vadd.f32 0.0, %v950
      %v952 = vpop.f32.mrf.mxu0
      %v953 = vadd.f32 0.0, %v952
      %954 = vmatmul.bf16.gmra.mxu0 %v915
      %v955 = vpop.f32.mrf.mxu0
      %v956 = vadd.f32 0.0, %v955
      %v957 = vpop.f32.mrf.mxu0
      %v958 = vadd.f32 0.0, %v957
      %959 = vmatmul.bf16.gmra.mxu0 %v918
      %v960 = vpop.f32.mrf.mxu0
      %v961 = vadd.f32 0.0, %v960
      %v962 = vpop.f32.mrf.mxu0
      %v963 = vadd.f32 0.0, %v962
      %964 = vmatmul.bf16.gmra.mxu0 %v921
      %v965 = vpop.f32.mrf.mxu0
      %v966 = vadd.f32 0.0, %v965
      %v967 = vpop.f32.mrf.mxu0
      %v968 = vadd.f32 0.0, %v967
      %969 = vmatmul.bf16.gmra.mxu0 %v924
      %v970 = vpop.f32.mrf.mxu0
      %v971 = vadd.f32 0.0, %v970
      %v972 = vpop.f32.mrf.mxu0
      %v973 = vadd.f32 0.0, %v972
      %974 = vdwg.mxu0
      %v975 = vadd.f32 %v739, %v936
      %v976 = vadd.f32 %v741, %v938
      %v977 = vadd.f32 %v744, %v941
      %v978 = vadd.f32 %v746, %v943
      %v979 = vadd.f32 %v749, %v946
      %v980 = vadd.f32 %v751, %v948
      %v981 = vadd.f32 %v754, %v951
      %v982 = vadd.f32 %v756, %v953
      %v983 = vadd.f32 %v759, %v956
      %v984 = vadd.f32 %v761, %v958
      %v985 = vadd.f32 %v764, %v961
      %v986 = vadd.f32 %v766, %v963
      %v987 = vadd.f32 %v769, %v966
      %v988 = vadd.f32 %v771, %v968
      %v989 = vadd.f32 %v774, %v971
      %v990 = vadd.f32 %v776, %v973
      %s991 = scalar_lea.vmem %s1, 96
      %v992 = vld [vmem:[%s991] sm:$0xf]
      %v993 = vld [vmem:[%s991 + $0x4] sm:$0xf]
      %v994 = vld [vmem:[%s991 + $0x8] sm:$0xf]
      %v995 = vld [vmem:[%s991 + $0xc] sm:$0xf]
      %v996 = vld [vmem:[%s991 + $0x10] sm:$0xf]
      %v997 = vld [vmem:[%s991 + $0x14] sm:$0xf]
      %v998 = vld [vmem:[%s991 + $0x18] sm:$0xf]
      %v999 = vld [vmem:[%s991 + $0x1c] sm:$0xf]
      %v1002 = vunpack.c.l.b16 %v301
      %v1003 = vunpack.c.l.b16 %v302
      %v1004 = vpack.c.b16 %v1003, %v1002
      %v1013 = vunpack.c.l.b16 %v992
      %v1014 = vunpack.c.l.b16 %v993
      %v1015 = vunpack.c.l.b16 %v994
      %v1016 = vunpack.c.l.b16 %v995
      %v1017 = vunpack.c.l.b16 %v996
      %v1018 = vunpack.c.l.b16 %v997
      %v1019 = vunpack.c.l.b16 %v998
      %v1020 = vunpack.c.l.b16 %v999
      %v1021 = vpack.c.b16 %v1014, %v1013
      %v1022 = vpack.c.b16 %v1016, %v1015
      %v1023 = vpack.c.b16 %v1018, %v1017
      %v1024 = vpack.c.b16 %v1020, %v1019
      %v1030 = vsel %vm567, %v1004, 0
      %1032 = vmatpush.bf16.msra.mxu0 0
      %1033 = vmatpush.bf16.msra.mxu0 0
      %1034 = vmatpush.bf16.msra.mxu0 0
      %1035 = vmatpush.bf16.msra.mxu0 0
      %1036 = vmatpush.bf16.msra.mxu0 %v1024
      %1037 = vmatpush.bf16.msra.mxu0 %v1023
      %1038 = vmatpush.bf16.msra.mxu0 %v1022
      %1039 = vmatpush.bf16.msra.mxu0 %v1021
      %1040 = vmatmul.bf16.gmra.mxu0 %v709
      %v1041 = vpop.f32.mrf.mxu0
      %v1042 = vadd.f32 0.0, %v1041
      %v1043 = vpop.f32.mrf.mxu0
      %v1044 = vadd.f32 0.0, %v1043
      %1045 = vmatmul.bf16.gmra.mxu0 %v712
      %v1046 = vpop.f32.mrf.mxu0
      %v1047 = vadd.f32 0.0, %v1046
      %v1048 = vpop.f32.mrf.mxu0
      %v1049 = vadd.f32 0.0, %v1048
      %1050 = vmatmul.bf16.gmra.mxu0 %v715
      %v1051 = vpop.f32.mrf.mxu0
      %v1052 = vadd.f32 0.0, %v1051
      %v1053 = vpop.f32.mrf.mxu0
      %v1054 = vadd.f32 0.0, %v1053
      %1055 = vmatmul.bf16.gmra.mxu0 %v718
      %v1056 = vpop.f32.mrf.mxu0
      %v1057 = vadd.f32 0.0, %v1056
      %v1058 = vpop.f32.mrf.mxu0
      %v1059 = vadd.f32 0.0, %v1058
      %1060 = vmatmul.bf16.gmra.mxu0 %v721
      %v1061 = vpop.f32.mrf.mxu0
      %v1062 = vadd.f32 0.0, %v1061
      %v1063 = vpop.f32.mrf.mxu0
      %v1064 = vadd.f32 0.0, %v1063
      %1065 = vmatmul.bf16.gmra.mxu0 %v724
      %v1066 = vpop.f32.mrf.mxu0
      %v1067 = vadd.f32 0.0, %v1066
      %v1068 = vpop.f32.mrf.mxu0
      %v1069 = vadd.f32 0.0, %v1068
      %1070 = vmatmul.bf16.gmra.mxu0 %v727
      %v1071 = vpop.f32.mrf.mxu0
      %v1072 = vadd.f32 0.0, %v1071
      %v1073 = vpop.f32.mrf.mxu0
      %v1074 = vadd.f32 0.0, %v1073
      %1075 = vmatmul.bf16.gmra.mxu0 %v1030
      %v1076 = vpop.f32.mrf.mxu0
      %v1077 = vadd.f32 0.0, %v1076
      %v1078 = vpop.f32.mrf.mxu0
      %v1079 = vadd.f32 0.0, %v1078
      %1080 = vdwg.mxu0
      %v1081 = vadd.f32 %v975, %v1042
      %v1082 = vadd.f32 %v976, %v1044
      %v1083 = vadd.f32 %v977, %v1047
      %v1084 = vadd.f32 %v978, %v1049
      %v1085 = vadd.f32 %v979, %v1052
      %v1086 = vadd.f32 %v980, %v1054
      %v1087 = vadd.f32 %v981, %v1057
      %v1088 = vadd.f32 %v982, %v1059
      %v1089 = vadd.f32 %v983, %v1062
      %v1090 = vadd.f32 %v984, %v1064
      %v1091 = vadd.f32 %v985, %v1067
      %v1092 = vadd.f32 %v986, %v1069
      %v1093 = vadd.f32 %v987, %v1072
      %v1094 = vadd.f32 %v988, %v1074
      %v1095 = vadd.f32 %v989, %v1077
      %v1096 = vadd.f32 %v990, %v1079
      %v1098 = vshrl.u32 %v301, 16
      %v1100 = vrot.slane %v1098, 4
      %v1101 = vshll.u32 %v301, 16
      %v1103 = vrot.slane %v1101, 5
      %v1104 = vor.u32 %v1100, %v1103
      %v1105 = vrot.slane %v1104, 4
      %v1107 = vshll.u32 %v302, 16
      %v1109 = vrot.slane %v1107, 5
      %v1110 = vsel %vm317, %v1105, %v1109
      %v1111 = vshrl.u32 %v302, 16
      %v1113 = vrot.slane %v1111, 4
      %v1114 = vor.u32 %v1113, %v1109
      %v1115 = vrot.slane %v1114, 4
      %v1117 = vshll.u32 %v303, 16
      %v1119 = vrot.slane %v1117, 5
      %v1120 = vsel %vm317, %v1115, %v1119
      %s1121 = scalar_lea.vmem %s1, 128
      %v1122 = vld [vmem:[%s1121] sm:$0xf]
      %v1123 = vld [vmem:[%s1121 + $0x4] sm:$0xf]
      %v1124 = vld [vmem:[%s1121 + $0x8] sm:$0xf]
      %v1125 = vld [vmem:[%s1121 + $0xc] sm:$0xf]
      %v1126 = vld [vmem:[%s1121 + $0x10] sm:$0xf]
      %v1127 = vld [vmem:[%s1121 + $0x14] sm:$0xf]
      %v1128 = vld [vmem:[%s1121 + $0x18] sm:$0xf]
      %v1129 = vld [vmem:[%s1121 + $0x1c] sm:$0xf]
      %v1130 = vunpack.c.l.b16 %v1110
      %v1131 = vunpack.c.l.b16 %v1120
      %v1132 = vpack.c.b16 %v1131, %v1130
      %v1141 = vunpack.c.l.b16 %v1122
      %v1142 = vunpack.c.l.b16 %v1123
      %v1143 = vunpack.c.l.b16 %v1124
      %v1144 = vunpack.c.l.b16 %v1125
      %v1145 = vunpack.c.l.b16 %v1126
      %v1146 = vunpack.c.l.b16 %v1127
      %v1147 = vunpack.c.l.b16 %v1128
      %v1148 = vunpack.c.l.b16 %v1129
      %v1149 = vpack.c.b16 %v1142, %v1141
      %v1150 = vpack.c.b16 %v1144, %v1143
      %v1151 = vpack.c.b16 %v1146, %v1145
      %v1152 = vpack.c.b16 %v1148, %v1147
      %v1158 = vsel %vm567, %v1132, 0
      %1160 = vmatpush.bf16.msra.mxu0 0
      %1161 = vmatpush.bf16.msra.mxu0 0
      %1162 = vmatpush.bf16.msra.mxu0 0
      %1163 = vmatpush.bf16.msra.mxu0 0
      %1164 = vmatpush.bf16.msra.mxu0 %v1152
      %1165 = vmatpush.bf16.msra.mxu0 %v1151
      %1166 = vmatpush.bf16.msra.mxu0 %v1150
      %1167 = vmatpush.bf16.msra.mxu0 %v1149
      %1168 = vmatmul.bf16.gmra.mxu0 %v572
      %v1169 = vpop.f32.mrf.mxu0
      %v1170 = vadd.f32 0.0, %v1169
      %v1171 = vpop.f32.mrf.mxu0
      %v1172 = vadd.f32 0.0, %v1171
      %1173 = vmatmul.bf16.gmra.mxu0 %v575
      %v1174 = vpop.f32.mrf.mxu0
      %v1175 = vadd.f32 0.0, %v1174
      %v1176 = vpop.f32.mrf.mxu0
      %v1177 = vadd.f32 0.0, %v1176
      %1178 = vmatmul.bf16.gmra.mxu0 %v578
      %v1179 = vpop.f32.mrf.mxu0
      %v1180 = vadd.f32 0.0, %v1179
      %v1181 = vpop.f32.mrf.mxu0
      %v1182 = vadd.f32 0.0, %v1181
      %1183 = vmatmul.bf16.gmra.mxu0 %v581
      %v1184 = vpop.f32.mrf.mxu0
      %v1185 = vadd.f32 0.0, %v1184
      %v1186 = vpop.f32.mrf.mxu0
      %v1187 = vadd.f32 0.0, %v1186
      %1188 = vmatmul.bf16.gmra.mxu0 %v584
      %v1189 = vpop.f32.mrf.mxu0
      %v1190 = vadd.f32 0.0, %v1189
      %v1191 = vpop.f32.mrf.mxu0
      %v1192 = vadd.f32 0.0, %v1191
      %1193 = vmatmul.bf16.gmra.mxu0 %v587
      %v1194 = vpop.f32.mrf.mxu0
      %v1195 = vadd.f32 0.0, %v1194
      %v1196 = vpop.f32.mrf.mxu0
      %v1197 = vadd.f32 0.0, %v1196
      %1198 = vmatmul.bf16.gmra.mxu0 %v590
      %v1199 = vpop.f32.mrf.mxu0
      %v1200 = vadd.f32 0.0, %v1199
      %v1201 = vpop.f32.mrf.mxu0
      %v1202 = vadd.f32 0.0, %v1201
      %1203 = vmatmul.bf16.gmra.mxu0 %v1158
      %v1204 = vpop.f32.mrf.mxu0
      %v1205 = vadd.f32 0.0, %v1204
      %v1206 = vpop.f32.mrf.mxu0
      %v1207 = vadd.f32 0.0, %v1206
      %1208 = vdwg.mxu0
      %v1209 = vadd.f32 %v1081, %v1170
      %v1210 = vadd.f32 %v1082, %v1172
      %v1211 = vadd.f32 %v1083, %v1175
      %v1212 = vadd.f32 %v1084, %v1177
      %v1213 = vadd.f32 %v1085, %v1180
      %v1214 = vadd.f32 %v1086, %v1182
      %v1215 = vadd.f32 %v1087, %v1185
      %v1216 = vadd.f32 %v1088, %v1187
      %v1217 = vadd.f32 %v1089, %v1190
      %v1218 = vadd.f32 %v1090, %v1192
      %v1219 = vadd.f32 %v1091, %v1195
      %v1220 = vadd.f32 %v1092, %v1197
      %v1221 = vadd.f32 %v1093, %v1200
      %v1222 = vadd.f32 %v1094, %v1202
      %v1223 = vadd.f32 %v1095, %v1205
      %v1224 = vadd.f32 %v1096, %v1207
      %v1226 = vrot.slane %v301, 5
      %v1227 = vrot.slane %v1226, 4
      %v1228 = vrot.slane %v302, 5
      %v1229 = vsel %vm788, %v1227, %v1228
      %v1230 = vrot.slane %v1228, 4
      %v1231 = vrot.slane %v303, 5
      %v1232 = vsel %vm788, %v1230, %v1231
      %s1233 = scalar_lea.vmem %s1, 160
      %v1234 = vld [vmem:[%s1233] sm:$0xf]
      %v1235 = vld [vmem:[%s1233 + $0x4] sm:$0xf]
      %v1236 = vld [vmem:[%s1233 + $0x8] sm:$0xf]
      %v1237 = vld [vmem:[%s1233 + $0xc] sm:$0xf]
      %v1238 = vld [vmem:[%s1233 + $0x10] sm:$0xf]
      %v1239 = vld [vmem:[%s1233 + $0x14] sm:$0xf]
      %v1240 = vld [vmem:[%s1233 + $0x18] sm:$0xf]
      %v1241 = vld [vmem:[%s1233 + $0x1c] sm:$0xf]
      %v1242 = vunpack.c.l.b16 %v1229
      %v1243 = vunpack.c.l.b16 %v1232
      %v1244 = vpack.c.b16 %v1243, %v1242
      %v1253 = vunpack.c.l.b16 %v1234
      %v1254 = vunpack.c.l.b16 %v1235
      %v1255 = vunpack.c.l.b16 %v1236
      %v1256 = vunpack.c.l.b16 %v1237
      %v1257 = vunpack.c.l.b16 %v1238
      %v1258 = vunpack.c.l.b16 %v1239
      %v1259 = vunpack.c.l.b16 %v1240
      %v1260 = vunpack.c.l.b16 %v1241
      %v1261 = vpack.c.b16 %v1254, %v1253
      %v1262 = vpack.c.b16 %v1256, %v1255
      %v1263 = vpack.c.b16 %v1258, %v1257
      %v1264 = vpack.c.b16 %v1260, %v1259
      %v1270 = vsel %vm567, %v1244, 0
      %1272 = vmatpush.bf16.msra.mxu0 0
      %1273 = vmatpush.bf16.msra.mxu0 0
      %1274 = vmatpush.bf16.msra.mxu0 0
      %1275 = vmatpush.bf16.msra.mxu0 0
      %1276 = vmatpush.bf16.msra.mxu0 %v1264
      %1277 = vmatpush.bf16.msra.mxu0 %v1263
      %1278 = vmatpush.bf16.msra.mxu0 %v1262
      %1279 = vmatpush.bf16.msra.mxu0 %v1261
      %1280 = vmatmul.bf16.gmra.mxu0 %v906
      %v1281 = vpop.f32.mrf.mxu0
      %v1282 = vadd.f32 0.0, %v1281
      %v1283 = vpop.f32.mrf.mxu0
      %v1284 = vadd.f32 0.0, %v1283
      %1285 = vmatmul.bf16.gmra.mxu0 %v909
      %v1286 = vpop.f32.mrf.mxu0
      %v1287 = vadd.f32 0.0, %v1286
      %v1288 = vpop.f32.mrf.mxu0
      %v1289 = vadd.f32 0.0, %v1288
      %1290 = vmatmul.bf16.gmra.mxu0 %v912
      %v1291 = vpop.f32.mrf.mxu0
      %v1292 = vadd.f32 0.0, %v1291
      %v1293 = vpop.f32.mrf.mxu0
      %v1294 = vadd.f32 0.0, %v1293
      %1295 = vmatmul.bf16.gmra.mxu0 %v915
      %v1296 = vpop.f32.mrf.mxu0
      %v1297 = vadd.f32 0.0, %v1296
      %v1298 = vpop.f32.mrf.mxu0
      %v1299 = vadd.f32 0.0, %v1298
      %1300 = vmatmul.bf16.gmra.mxu0 %v918
      %v1301 = vpop.f32.mrf.mxu0
      %v1302 = vadd.f32 0.0, %v1301
      %v1303 = vpop.f32.mrf.mxu0
      %v1304 = vadd.f32 0.0, %v1303
      %1305 = vmatmul.bf16.gmra.mxu0 %v921
      %v1306 = vpop.f32.mrf.mxu0
      %v1307 = vadd.f32 0.0, %v1306
      %v1308 = vpop.f32.mrf.mxu0
      %v1309 = vadd.f32 0.0, %v1308
      %1310 = vmatmul.bf16.gmra.mxu0 %v924
      %v1311 = vpop.f32.mrf.mxu0
      %v1312 = vadd.f32 0.0, %v1311
      %v1313 = vpop.f32.mrf.mxu0
      %v1314 = vadd.f32 0.0, %v1313
      %1315 = vmatmul.bf16.gmra.mxu0 %v1270
      %v1316 = vpop.f32.mrf.mxu0
      %v1317 = vadd.f32 0.0, %v1316
      %v1318 = vpop.f32.mrf.mxu0
      %v1319 = vadd.f32 0.0, %v1318
      %1320 = vdwg.mxu0
      %v1321 = vadd.f32 %v1209, %v1282
      %v1322 = vadd.f32 %v1210, %v1284
      %v1323 = vadd.f32 %v1211, %v1287
      %v1324 = vadd.f32 %v1212, %v1289
      %v1325 = vadd.f32 %v1213, %v1292
      %v1326 = vadd.f32 %v1214, %v1294
      %v1327 = vadd.f32 %v1215, %v1297
      %v1328 = vadd.f32 %v1216, %v1299
      %v1329 = vadd.f32 %v1217, %v1302
      %v1330 = vadd.f32 %v1218, %v1304
      %v1331 = vadd.f32 %v1219, %v1307
      %v1332 = vadd.f32 %v1220, %v1309
      %v1333 = vadd.f32 %v1221, %v1312
      %v1334 = vadd.f32 %v1222, %v1314
      %v1335 = vadd.f32 %v1223, %v1317
      %v1336 = vadd.f32 %v1224, %v1319
      %s1337 = scalar_lea.vmem %s1, 192
      %v1338 = vld [vmem:[%s1337] sm:$0xf]
      %v1339 = vld [vmem:[%s1337 + $0x4] sm:$0xf]
      %v1340 = vld [vmem:[%s1337 + $0x8] sm:$0xf]
      %v1341 = vld [vmem:[%s1337 + $0xc] sm:$0xf]
      %v1342 = vld [vmem:[%s1337 + $0x10] sm:$0xf]
      %v1343 = vld [vmem:[%s1337 + $0x14] sm:$0xf]
      %v1344 = vld [vmem:[%s1337 + $0x18] sm:$0xf]
      %v1345 = vld [vmem:[%s1337 + $0x1c] sm:$0xf]
      %v1348 = vunpack.c.l.b16 %v304
      %v1349 = vunpack.c.l.b16 %v305
      %v1350 = vpack.c.b16 %v1349, %v1348
      %v1359 = vunpack.c.l.b16 %v1338
      %v1360 = vunpack.c.l.b16 %v1339
      %v1361 = vunpack.c.l.b16 %v1340
      %v1362 = vunpack.c.l.b16 %v1341
      %v1363 = vunpack.c.l.b16 %v1342
      %v1364 = vunpack.c.l.b16 %v1343
      %v1365 = vunpack.c.l.b16 %v1344
      %v1366 = vunpack.c.l.b16 %v1345
      %v1367 = vpack.c.b16 %v1360, %v1359
      %v1368 = vpack.c.b16 %v1362, %v1361
      %v1369 = vpack.c.b16 %v1364, %v1363
      %v1370 = vpack.c.b16 %v1366, %v1365
      %v1376 = vsel %vm567, %v1350, 0
      %1378 = vmatpush.bf16.msra.mxu0 0
      %1379 = vmatpush.bf16.msra.mxu0 0
      %1380 = vmatpush.bf16.msra.mxu0 0
      %1381 = vmatpush.bf16.msra.mxu0 0
      %1382 = vmatpush.bf16.msra.mxu0 %v1370
      %1383 = vmatpush.bf16.msra.mxu0 %v1369
      %1384 = vmatpush.bf16.msra.mxu0 %v1368
      %1385 = vmatpush.bf16.msra.mxu0 %v1367
      %1386 = vmatmul.bf16.gmra.mxu0 %v712
      %v1387 = vpop.f32.mrf.mxu0
      %v1388 = vadd.f32 0.0, %v1387
      %v1389 = vpop.f32.mrf.mxu0
      %v1390 = vadd.f32 0.0, %v1389
      %1391 = vmatmul.bf16.gmra.mxu0 %v715
      %v1392 = vpop.f32.mrf.mxu0
      %v1393 = vadd.f32 0.0, %v1392
      %v1394 = vpop.f32.mrf.mxu0
      %v1395 = vadd.f32 0.0, %v1394
      %1396 = vmatmul.bf16.gmra.mxu0 %v718
      %v1397 = vpop.f32.mrf.mxu0
      %v1398 = vadd.f32 0.0, %v1397
      %v1399 = vpop.f32.mrf.mxu0
      %v1400 = vadd.f32 0.0, %v1399
      %1401 = vmatmul.bf16.gmra.mxu0 %v721
      %v1402 = vpop.f32.mrf.mxu0
      %v1403 = vadd.f32 0.0, %v1402
      %v1404 = vpop.f32.mrf.mxu0
      %v1405 = vadd.f32 0.0, %v1404
      %1406 = vmatmul.bf16.gmra.mxu0 %v724
      %v1407 = vpop.f32.mrf.mxu0
      %v1408 = vadd.f32 0.0, %v1407
      %v1409 = vpop.f32.mrf.mxu0
      %v1410 = vadd.f32 0.0, %v1409
      %1411 = vmatmul.bf16.gmra.mxu0 %v727
      %v1412 = vpop.f32.mrf.mxu0
      %v1413 = vadd.f32 0.0, %v1412
      %v1414 = vpop.f32.mrf.mxu0
      %v1415 = vadd.f32 0.0, %v1414
      %1416 = vmatmul.bf16.gmra.mxu0 %v1030
      %v1417 = vpop.f32.mrf.mxu0
      %v1418 = vadd.f32 0.0, %v1417
      %v1419 = vpop.f32.mrf.mxu0
      %v1420 = vadd.f32 0.0, %v1419
      %1421 = vmatmul.bf16.gmra.mxu0 %v1376
      %v1422 = vpop.f32.mrf.mxu0
      %v1423 = vadd.f32 0.0, %v1422
      %v1424 = vpop.f32.mrf.mxu0
      %v1425 = vadd.f32 0.0, %v1424
      %1426 = vdwg.mxu0
      %v1427 = vadd.f32 %v1321, %v1388
      %v1428 = vadd.f32 %v1322, %v1390
      %v1429 = vadd.f32 %v1323, %v1393
      %v1430 = vadd.f32 %v1324, %v1395
      %v1431 = vadd.f32 %v1325, %v1398
      %v1432 = vadd.f32 %v1326, %v1400
      %v1433 = vadd.f32 %v1327, %v1403
      %v1434 = vadd.f32 %v1328, %v1405
      %v1435 = vadd.f32 %v1329, %v1408
      %v1436 = vadd.f32 %v1330, %v1410
      %v1437 = vadd.f32 %v1331, %v1413
      %v1438 = vadd.f32 %v1332, %v1415
      %v1439 = vadd.f32 %v1333, %v1418
      %v1440 = vadd.f32 %v1334, %v1420
      %v1441 = vadd.f32 %v1335, %v1423
      %v1442 = vadd.f32 %v1336, %v1425
      %v1444 = vshrl.u32 %v304, 16
      %v1446 = vrot.slane %v1444, 4
      %v1447 = vshll.u32 %v304, 16
      %v1449 = vrot.slane %v1447, 5
      %v1450 = vor.u32 %v1446, %v1449
      %v1451 = vrot.slane %v1450, 4
      %v1453 = vshll.u32 %v305, 16
      %v1455 = vrot.slane %v1453, 5
      %v1456 = vsel %vm317, %v1451, %v1455
      %v1457 = vshrl.u32 %v305, 16
      %v1459 = vrot.slane %v1457, 4
      %v1460 = vor.u32 %v1459, %v1455
      %v1461 = vrot.slane %v1460, 4
      %v1463 = vshll.u32 %v306, 16
      %v1465 = vrot.slane %v1463, 5
      %v1466 = vsel %vm317, %v1461, %v1465
      %s1467 = scalar_lea.vmem %s1, 224
      %v1468 = vld [vmem:[%s1467] sm:$0xf]
      %v1469 = vld [vmem:[%s1467 + $0x4] sm:$0xf]
      %v1470 = vld [vmem:[%s1467 + $0x8] sm:$0xf]
      %v1471 = vld [vmem:[%s1467 + $0xc] sm:$0xf]
      %v1472 = vld [vmem:[%s1467 + $0x10] sm:$0xf]
      %v1473 = vld [vmem:[%s1467 + $0x14] sm:$0xf]
      %v1474 = vld [vmem:[%s1467 + $0x18] sm:$0xf]
      %v1475 = vld [vmem:[%s1467 + $0x1c] sm:$0xf]
      %v1476 = vunpack.c.l.b16 %v1456
      %v1477 = vunpack.c.l.b16 %v1466
      %v1478 = vpack.c.b16 %v1477, %v1476
      %v1487 = vunpack.c.l.b16 %v1468
      %v1488 = vunpack.c.l.b16 %v1469
      %v1489 = vunpack.c.l.b16 %v1470
      %v1490 = vunpack.c.l.b16 %v1471
      %v1491 = vunpack.c.l.b16 %v1472
      %v1492 = vunpack.c.l.b16 %v1473
      %v1493 = vunpack.c.l.b16 %v1474
      %v1494 = vunpack.c.l.b16 %v1475
      %v1495 = vpack.c.b16 %v1488, %v1487
      %v1496 = vpack.c.b16 %v1490, %v1489
      %v1497 = vpack.c.b16 %v1492, %v1491
      %v1498 = vpack.c.b16 %v1494, %v1493
      %v1504 = vsel %vm567, %v1478, 0
      %1506 = vmatpush.bf16.msra.mxu0 0
      %1507 = vmatpush.bf16.msra.mxu0 0
      %1508 = vmatpush.bf16.msra.mxu0 0
      %1509 = vmatpush.bf16.msra.mxu0 0
      %1510 = vmatpush.bf16.msra.mxu0 %v1498
      %1511 = vmatpush.bf16.msra.mxu0 %v1497
      %1512 = vmatpush.bf16.msra.mxu0 %v1496
      %1513 = vmatpush.bf16.msra.mxu0 %v1495
      %1514 = vmatmul.bf16.gmra.mxu0 %v575
      %v1515 = vpop.f32.mrf.mxu0
      %v1516 = vadd.f32 0.0, %v1515
      %v1517 = vpop.f32.mrf.mxu0
      %v1518 = vadd.f32 0.0, %v1517
      %1519 = vmatmul.bf16.gmra.mxu0 %v578
      %v1520 = vpop.f32.mrf.mxu0
      %v1521 = vadd.f32 0.0, %v1520
      %v1522 = vpop.f32.mrf.mxu0
      %v1523 = vadd.f32 0.0, %v1522
      %1524 = vmatmul.bf16.gmra.mxu0 %v581
      %v1525 = vpop.f32.mrf.mxu0
      %v1526 = vadd.f32 0.0, %v1525
      %v1527 = vpop.f32.mrf.mxu0
      %v1528 = vadd.f32 0.0, %v1527
      %1529 = vmatmul.bf16.gmra.mxu0 %v584
      %v1530 = vpop.f32.mrf.mxu0
      %v1531 = vadd.f32 0.0, %v1530
      %v1532 = vpop.f32.mrf.mxu0
      %v1533 = vadd.f32 0.0, %v1532
      %1534 = vmatmul.bf16.gmra.mxu0 %v587
      %v1535 = vpop.f32.mrf.mxu0
      %v1536 = vadd.f32 0.0, %v1535
      %v1537 = vpop.f32.mrf.mxu0
      %v1538 = vadd.f32 0.0, %v1537
      %1539 = vmatmul.bf16.gmra.mxu0 %v590
      %v1540 = vpop.f32.mrf.mxu0
      %v1541 = vadd.f32 0.0, %v1540
      %v1542 = vpop.f32.mrf.mxu0
      %v1543 = vadd.f32 0.0, %v1542
      %1544 = vmatmul.bf16.gmra.mxu0 %v1158
      %v1545 = vpop.f32.mrf.mxu0
      %v1546 = vadd.f32 0.0, %v1545
      %v1547 = vpop.f32.mrf.mxu0
      %v1548 = vadd.f32 0.0, %v1547
      %1549 = vmatmul.bf16.gmra.mxu0 %v1504
      %v1550 = vpop.f32.mrf.mxu0
      %v1551 = vadd.f32 0.0, %v1550
      %v1552 = vpop.f32.mrf.mxu0
      %v1553 = vadd.f32 0.0, %v1552
      %1554 = vdwg.mxu0
      %v1555 = vadd.f32 %v1427, %v1516
      %v1556 = vadd.f32 %v1428, %v1518
      %v1557 = vadd.f32 %v1429, %v1521
      %v1558 = vadd.f32 %v1430, %v1523
      %v1559 = vadd.f32 %v1431, %v1526
      %v1560 = vadd.f32 %v1432, %v1528
      %v1561 = vadd.f32 %v1433, %v1531
      %v1562 = vadd.f32 %v1434, %v1533
      %v1563 = vadd.f32 %v1435, %v1536
      %v1564 = vadd.f32 %v1436, %v1538
      %v1565 = vadd.f32 %v1437, %v1541
      %v1566 = vadd.f32 %v1438, %v1543
      %v1567 = vadd.f32 %v1439, %v1546
      %v1568 = vadd.f32 %v1440, %v1548
      %v1569 = vadd.f32 %v1441, %v1551
      %v1570 = vadd.f32 %v1442, %v1553
      %v1572 = vrot.slane %v304, 5
      %v1573 = vrot.slane %v1572, 4
      %v1574 = vrot.slane %v305, 5
      %v1575 = vsel %vm788, %v1573, %v1574
      %v1576 = vrot.slane %v1574, 4
      %v1577 = vrot.slane %v306, 5
      %v1578 = vsel %vm788, %v1576, %v1577
      %s1579 = scalar_lea.vmem %s1, 256
      %v1580 = vld [vmem:[%s1579] sm:$0xf]
      %v1581 = vld [vmem:[%s1579 + $0x4] sm:$0xf]
      %v1582 = vld [vmem:[%s1579 + $0x8] sm:$0xf]
      %v1583 = vld [vmem:[%s1579 + $0xc] sm:$0xf]
      %v1584 = vld [vmem:[%s1579 + $0x10] sm:$0xf]
      %v1585 = vld [vmem:[%s1579 + $0x14] sm:$0xf]
      %v1586 = vld [vmem:[%s1579 + $0x18] sm:$0xf]
      %v1587 = vld [vmem:[%s1579 + $0x1c] sm:$0xf]
      %v1588 = vunpack.c.l.b16 %v1575
      %v1589 = vunpack.c.l.b16 %v1578
      %v1590 = vpack.c.b16 %v1589, %v1588
      %v1599 = vunpack.c.l.b16 %v1580
      %v1600 = vunpack.c.l.b16 %v1581
      %v1601 = vunpack.c.l.b16 %v1582
      %v1602 = vunpack.c.l.b16 %v1583
      %v1603 = vunpack.c.l.b16 %v1584
      %v1604 = vunpack.c.l.b16 %v1585
      %v1605 = vunpack.c.l.b16 %v1586
      %v1606 = vunpack.c.l.b16 %v1587
      %v1607 = vpack.c.b16 %v1600, %v1599
      %v1608 = vpack.c.b16 %v1602, %v1601
      %v1609 = vpack.c.b16 %v1604, %v1603
      %v1610 = vpack.c.b16 %v1606, %v1605
      %v1616 = vsel %vm567, %v1590, 0
      %1618 = vmatpush.bf16.msra.mxu0 0
      %1619 = vmatpush.bf16.msra.mxu0 0
      %1620 = vmatpush.bf16.msra.mxu0 0
      %1621 = vmatpush.bf16.msra.mxu0 0
      %1622 = vmatpush.bf16.msra.mxu0 %v1610
      %1623 = vmatpush.bf16.msra.mxu0 %v1609
      %1624 = vmatpush.bf16.msra.mxu0 %v1608
      %1625 = vmatpush.bf16.msra.mxu0 %v1607
      %1626 = vmatmul.bf16.gmra.mxu0 %v909
      %v1627 = vpop.f32.mrf.mxu0
      %v1628 = vadd.f32 0.0, %v1627
      %v1629 = vpop.f32.mrf.mxu0
      %v1630 = vadd.f32 0.0, %v1629
      %1631 = vmatmul.bf16.gmra.mxu0 %v912
      %v1632 = vpop.f32.mrf.mxu0
      %v1633 = vadd.f32 0.0, %v1632
      %v1634 = vpop.f32.mrf.mxu0
      %v1635 = vadd.f32 0.0, %v1634
      %1636 = vmatmul.bf16.gmra.mxu0 %v915
      %v1637 = vpop.f32.mrf.mxu0
      %v1638 = vadd.f32 0.0, %v1637
      %v1639 = vpop.f32.mrf.mxu0
      %v1640 = vadd.f32 0.0, %v1639
      %1641 = vmatmul.bf16.gmra.mxu0 %v918
      %v1642 = vpop.f32.mrf.mxu0
      %v1643 = vadd.f32 0.0, %v1642
      %v1644 = vpop.f32.mrf.mxu0
      %v1645 = vadd.f32 0.0, %v1644
      %1646 = vmatmul.bf16.gmra.mxu0 %v921
      %v1647 = vpop.f32.mrf.mxu0
      %v1648 = vadd.f32 0.0, %v1647
      %v1649 = vpop.f32.mrf.mxu0
      %v1650 = vadd.f32 0.0, %v1649
      %1651 = vmatmul.bf16.gmra.mxu0 %v924
      %v1652 = vpop.f32.mrf.mxu0
      %v1653 = vadd.f32 0.0, %v1652
      %v1654 = vpop.f32.mrf.mxu0
      %v1655 = vadd.f32 0.0, %v1654
      %1656 = vmatmul.bf16.gmra.mxu0 %v1270
      %v1657 = vpop.f32.mrf.mxu0
      %v1658 = vadd.f32 0.0, %v1657
      %v1659 = vpop.f32.mrf.mxu0
      %v1660 = vadd.f32 0.0, %v1659
      %1661 = vmatmul.bf16.gmra.mxu0 %v1616
      %v1662 = vpop.f32.mrf.mxu0
      %v1663 = vadd.f32 0.0, %v1662
      %v1664 = vpop.f32.mrf.mxu0
      %v1665 = vadd.f32 0.0, %v1664
      %1666 = vdwg.mxu0
      %v1667 = vadd.f32 %v1555, %v1628
      %v1668 = vadd.f32 %v1556, %v1630
      %v1669 = vadd.f32 %v1557, %v1633
      %v1670 = vadd.f32 %v1558, %v1635
      %v1671 = vadd.f32 %v1559, %v1638
      %v1672 = vadd.f32 %v1560, %v1640
      %v1673 = vadd.f32 %v1561, %v1643
      %v1674 = vadd.f32 %v1562, %v1645
      %v1675 = vadd.f32 %v1563, %v1648
      %v1676 = vadd.f32 %v1564, %v1650
      %v1677 = vadd.f32 %v1565, %v1653
      %v1678 = vadd.f32 %v1566, %v1655
      %v1679 = vadd.f32 %v1567, %v1658
      %v1680 = vadd.f32 %v1568, %v1660
      %v1681 = vadd.f32 %v1569, %v1663
      %v1682 = vadd.f32 %v1570, %v1665
      %v1683 = vld [vmem:[%s2] sm:$0x1]
      %v1685 = vperm.slane %v1683, 0
      %v1687 = vadd.f32 %v1667, %v1685
      %v1688 = vadd.f32 %v1668, %v1685
      %v1689 = vadd.f32 %v1669, %v1685
      %v1690 = vadd.f32 %v1670, %v1685
      %v1691 = vadd.f32 %v1671, %v1685
      %v1692 = vadd.f32 %v1672, %v1685
      %v1693 = vadd.f32 %v1673, %v1685
      %v1694 = vadd.f32 %v1674, %v1685
      %v1695 = vadd.f32 %v1675, %v1685
      %v1696 = vadd.f32 %v1676, %v1685
      %v1697 = vadd.f32 %v1677, %v1685
      %v1698 = vadd.f32 %v1678, %v1685
      %v1699 = vadd.f32 %v1679, %v1685
      %v1700 = vadd.f32 %v1680, %v1685
      %v1701 = vadd.f32 %v1681, %v1685
      %v1702 = vadd.f32 %v1682, %v1685
      %v1703 = vpack.c.bf16 %v1687, %v1687
      %v1704 = vpack.c.bf16 %v1688, %v1688
      %v1705 = vpack.c.bf16 %v1689, %v1689
      %v1706 = vpack.c.bf16 %v1690, %v1690
      %v1707 = vpack.c.bf16 %v1691, %v1691
      %v1708 = vpack.c.bf16 %v1692, %v1692
      %v1709 = vpack.c.bf16 %v1693, %v1693
      %v1710 = vpack.c.bf16 %v1694, %v1694
      %v1711 = vpack.c.bf16 %v1695, %v1695
      %v1712 = vpack.c.bf16 %v1696, %v1696
      %v1713 = vpack.c.bf16 %v1697, %v1697
      %v1714 = vpack.c.bf16 %v1698, %v1698
      %v1715 = vpack.c.bf16 %v1699, %v1699
      %v1716 = vpack.c.bf16 %v1700, %v1700
      %v1717 = vpack.c.bf16 %v1701, %v1701
      %v1718 = vpack.c.bf16 %v1702, %v1702
      %vm1719 = vcmask 519168
      %1720 = vst.msk [vmem:[%s257] sm:$0xf] %vm1719, %v1703
      %1721 = vst.msk [vmem:[%s257 + $0x4] sm:$0xf] %vm1719, %v1704
      %1722 = vst.msk [vmem:[%s257 + $0x8] sm:$0xf] %vm1719, %v1705
      %1723 = vst.msk [vmem:[%s257 + $0xc] sm:$0xf] %vm1719, %v1706
      %1724 = vst.msk [vmem:[%s257 + $0x10] sm:$0xf] %vm1719, %v1707
      %1725 = vst.msk [vmem:[%s257 + $0x14] sm:$0xf] %vm1719, %v1708
      %1726 = vst.msk [vmem:[%s257 + $0x18] sm:$0xf] %vm1719, %v1709
      %1727 = vst.msk [vmem:[%s257 + $0x1c] sm:$0xf] %vm1719, %v1710
      %1728 = vst.msk [vmem:[%s257 + $0x20] sm:$0xf] %vm1719, %v1711
      %1729 = vst.msk [vmem:[%s257 + $0x24] sm:$0xf] %vm1719, %v1712
      %1730 = vst.msk [vmem:[%s257 + $0x28] sm:$0xf] %vm1719, %v1713
      %1731 = vst.msk [vmem:[%s257 + $0x2c] sm:$0xf] %vm1719, %v1714
      %1732 = vst.msk [vmem:[%s257 + $0x30] sm:$0xf] %vm1719, %v1715
      %1733 = vst.msk [vmem:[%s257 + $0x34] sm:$0xf] %vm1719, %v1716
      %1734 = vst.msk [vmem:[%s257 + $0x38] sm:$0xf] %vm1719, %v1717
      %1735 = vst.msk [vmem:[%s257 + $0x3c] sm:$0xf] %vm1719, %v1718
      %v1736 = vld [vmem:[%s261] sm:$0x1]
      %v1737 = vsel %vm567, %v1687, 0.0
      %v1738 = vsel %vm567, %v1688, 0.0
      %v1739 = vadd.f32 %v1737, %v1738
      %v1740 = vsel %vm567, %v1689, 0.0
      %v1741 = vadd.f32 %v1739, %v1740
      %v1742 = vsel %vm567, %v1690, 0.0
      %v1743 = vadd.f32 %v1741, %v1742
      %v1744 = vsel %vm567, %v1691, 0.0
      %v1745 = vadd.f32 %v1743, %v1744
      %v1746 = vsel %vm567, %v1692, 0.0
      %v1747 = vadd.f32 %v1745, %v1746
      %v1748 = vsel %vm567, %v1693, 0.0
      %v1749 = vadd.f32 %v1747, %v1748
      %v1750 = vsel %vm567, %v1694, 0.0
      %v1751 = vadd.f32 %v1749, %v1750
      %v1752 = vsel %vm567, %v1695, 0.0
      %v1753 = vadd.f32 %v1751, %v1752
      %v1754 = vsel %vm567, %v1696, 0.0
      %v1755 = vadd.f32 %v1753, %v1754
      %v1756 = vsel %vm567, %v1697, 0.0
      %v1757 = vadd.f32 %v1755, %v1756
      %v1758 = vsel %vm567, %v1698, 0.0
      %v1759 = vadd.f32 %v1757, %v1758
      %v1760 = vsel %vm567, %v1699, 0.0
      %v1761 = vadd.f32 %v1759, %v1760
      %v1762 = vsel %vm567, %v1700, 0.0
      %v1763 = vadd.f32 %v1761, %v1762
      %v1764 = vsel %vm567, %v1701, 0.0
      %v1765 = vadd.f32 %v1763, %v1764
      %v1766 = vsel %vm567, %v1702, 0.0
      %v1767 = vadd.f32 %v1765, %v1766
      %v1768 = vrot.slane %v1767, 4
      %v1769 = vadd.f32 %v1767, %v1768
      %v1770 = vrot.slane %v1769, 2
      %v1771 = vadd.f32 %v1769, %v1770
      %v1772 = vrot.slane %v1771, 1
      %v1773 = vadd.f32 %v1771, %v1772
      %v1774 = vadd.f32 %v1736, %v1773
      %vm1775 = vcmask 516096
      %1776 = vst.msk [vmem:[%s261] sm:$0x1] %vm1775, %v1774
      %v1777 = vld [vmem:[%s264] sm:$0x1]
      %v1778 = vmul.f32 %v1687, %v1687
      %v1779 = vmul.f32 %v1688, %v1688
      %v1780 = vmul.f32 %v1689, %v1689
      %v1781 = vmul.f32 %v1690, %v1690
      %v1782 = vmul.f32 %v1691, %v1691
      %v1783 = vmul.f32 %v1692, %v1692
      %v1784 = vmul.f32 %v1693, %v1693
      %v1785 = vmul.f32 %v1694, %v1694
      %v1786 = vmul.f32 %v1695, %v1695
      %v1787 = vmul.f32 %v1696, %v1696
      %v1788 = vmul.f32 %v1697, %v1697
      %v1789 = vmul.f32 %v1698, %v1698
      %v1790 = vmul.f32 %v1699, %v1699
      %v1791 = vmul.f32 %v1700, %v1700
      %v1792 = vmul.f32 %v1701, %v1701
      %v1793 = vmul.f32 %v1702, %v1702
      %v1794 = vsel %vm567, %v1778, 0.0
      %v1795 = vsel %vm567, %v1779, 0.0
      %v1796 = vadd.f32 %v1794, %v1795
      %v1797 = vsel %vm567, %v1780, 0.0
      %v1798 = vadd.f32 %v1796, %v1797
      %v1799 = vsel %vm567, %v1781, 0.0
      %v1800 = vadd.f32 %v1798, %v1799
      %v1801 = vsel %vm567, %v1782, 0.0
      %v1802 = vadd.f32 %v1800, %v1801
      %v1803 = vsel %vm567, %v1783, 0.0
      %v1804 = vadd.f32 %v1802, %v1803
      %v1805 = vsel %vm567, %v1784, 0.0
      %v1806 = vadd.f32 %v1804, %v1805
      %v1807 = vsel %vm567, %v1785, 0.0
      %v1808 = vadd.f32 %v1806, %v1807
      %v1809 = vsel %vm567, %v1786, 0.0
      %v1810 = vadd.f32 %v1808, %v1809
      %v1811 = vsel %vm567, %v1787, 0.0
      %v1812 = vadd.f32 %v1810, %v1811
      %v1813 = vsel %vm567, %v1788, 0.0
      %v1814 = vadd.f32 %v1812, %v1813
      %v1815 = vsel %vm567, %v1789, 0.0
      %v1816 = vadd.f32 %v1814, %v1815
      %v1817 = vsel %vm567, %v1790, 0.0
      %v1818 = vadd.f32 %v1816, %v1817
      %v1819 = vsel %vm567, %v1791, 0.0
      %v1820 = vadd.f32 %v1818, %v1819
      %v1821 = vsel %vm567, %v1792, 0.0
      %v1822 = vadd.f32 %v1820, %v1821
      %v1823 = vsel %vm567, %v1793, 0.0
      %v1824 = vadd.f32 %v1822, %v1823
      %v1825 = vrot.slane %v1824, 4
      %v1826 = vadd.f32 %v1824, %v1825
      %v1827 = vrot.slane %v1826, 2
      %v1828 = vadd.f32 %v1826, %v1827
      %v1829 = vrot.slane %v1828, 1
      %v1830 = vadd.f32 %v1828, %v1829
      %v1831 = vadd.f32 %v1777, %v1830
      %1832 = vst.msk [vmem:[%s264] sm:$0x1] %vm1775, %v1831
      %s1833 = smul.u32 16, %s22
      %p1834 = scmp.lt.s32.totalorder %s21, 1
      %s1835 = scalar_select %p1834, %s21, 1
      %p1836 = scmp.lt.s32.totalorder %s1833, 31
      %s1837 = scalar_select %p1836, %s1833, 31
      %s1838 = smul.addr %s1835, 32
      %s1839 = sadd.s32 %s1837, %s1838
      %s1840 = smul.addr %s1839, 4
      %s1841 = scalar_lea.vmem %s3, %s1840
      %p1842 = scmp.lt.s32.totalorder %s21, 1
      %s1843 = scalar_select %p1842, %s21, 1
      %s1844 = scalar_lea.vmem %s4, %s1843
      %p1845 = scmp.lt.s32.totalorder %s21, 1
      %s1846 = scalar_select %p1845, %s21, 1
      %s1847 = scalar_lea.vmem %s5, %s1846
      // Predicated region
      $region37: #{inconv_forward.6} parent=31 // pred_check
        %p1848 = pneg %p117
      $region38: #{inconv_forward.6} parent=31 // pred_check_branch
        %1850 = sbr.rel (%p1848) target = $region40
      $region39: #{inconv_forward.6} parent=31 // pred_region
        %s1851 = smul.u32 16, %s22
      $region40: #{inconv_forward.6} parent=31 // pred_fallthru
        _
      // Predicated region
      $region41: #{inconv_forward.6} parent=31 // pred_check
        %p1852 = pneg %p143
      $region42: #{inconv_forward.6} parent=31 // pred_check_branch
        %1854 = sbr.rel (%p1852) target = $region44
      $region43: #{inconv_forward.6} parent=31 // pred_region
        _
      $region44: #{inconv_forward.6} parent=31 // pred_fallthru
        _
      // Predicated region
      $region45: #{inconv_forward.6} parent=31 // pred_check
        %p1855 = pneg %p169
      $region46: #{inconv_forward.6} parent=31 // pred_check_branch
        %1857 = sbr.rel (%p1855) target = $region48
      $region47: #{inconv_forward.6} parent=31 // pred_region
        _
      $region48: #{inconv_forward.6} parent=31 // pred_fallthru
        _
    $region32: #{inconv_forward.6} parent=5 // pred_fallthru
      _
    %p1858 = scmp.le.s32.totalorder 2, %s12
    // Predicated region
    $region49: #{inconv_forward.6} parent=5 // pred_check
      %p1859 = pneg %p1858
    $region50: #{inconv_forward.6} parent=5 // pred_check_branch
      %1861 = sbr.rel (%p1859) target = $region52
    $region51: #{inconv_forward.6} parent=5 // pred_region
      %s1862 = ssub.s32 %s12, 2
      // Predicated region
      $region53: #{inconv_forward.6} parent=51 // pred_check
        %p1863 = pneg %p123
      $region54: #{inconv_forward.6} parent=51 // pred_check_branch
        %1865 = sbr.rel (%p1863) target = $region56
      $region55: #{inconv_forward.6} parent=51 // pred_region
        %s1866 = smul.u32 16, %s24
        %p1867 = scmp.lt.s32.totalorder %s23, 1
        %s1868 = scalar_select %p1867, %s23, 1
        %p1869 = scmp.lt.s32.totalorder %s1866, 31
        %s1870 = scalar_select %p1869, %s1866, 31
        %s1871 = smul.addr %s1868, 32
        %s1872 = sadd.s32 %s1870, %s1871
        %s1873 = smul.addr %s1872, 4
        %s1874 = scalar_lea.vmem %s3, %s1873
      $region56: #{inconv_forward.6} parent=51 // pred_fallthru
        _
      // Predicated region
      $region57: #{inconv_forward.6} parent=51 // pred_check
        %p1875 = pneg %p149
      $region58: #{inconv_forward.6} parent=51 // pred_check_branch
        %1877 = sbr.rel (%p1875) target = $region60
      $region59: #{inconv_forward.6} parent=51 // pred_region
        %p1878 = scmp.lt.s32.totalorder %s23, 1
        %s1879 = scalar_select %p1878, %s23, 1
        %s1880 = scalar_lea.vmem %s4, %s1879
      $region60: #{inconv_forward.6} parent=51 // pred_fallthru
        _
      // Predicated region
      $region61: #{inconv_forward.6} parent=51 // pred_check
        %p1881 = pneg %p175
      $region62: #{inconv_forward.6} parent=51 // pred_check_branch
        %1883 = sbr.rel (%p1881) target = $region64
      $region63: #{inconv_forward.6} parent=51 // pred_region
        %p1884 = scmp.lt.s32.totalorder %s23, 1
        %s1885 = scalar_select %p1884, %s23, 1
        %s1886 = scalar_lea.vmem %s5, %s1885
      $region64: #{inconv_forward.6} parent=51 // pred_fallthru
        _
    $region52: #{inconv_forward.6} parent=5 // pred_fallthru
      _
  $region6: #{inconv_forward.6} parent=0 // loop_footer
    %s16 = sadd.s32 1, %s12
  $region7: #{inconv_forward.6} parent=0 // loop_footer_branch
    %11 = sbr.rel target = $region3
  $region8: #{inconv_forward.6} parent=0 // loop_exit
    _

</llo_original>
